<compile_context>
chip_gen: v6e
topology: v6e:2x2x1
jax: 0.10.0
libtpu: 0.0.40
codegen_flags: <defaults>
</compile_context>

<pallas_src>
import functools
import math

import numpy as np
import jax
import jax.numpy as jnp
from jax.experimental import pallas as pl
from jax.experimental.pallas import tpu as pltpu


def _round_up(x, m):
    return ((x + m - 1) // m) * m


# Large finite "-inf": finite so that zero-weight MXU taps give 0, never NaN.
_NEG_BIG = -3.0e38


@functools.lru_cache(maxsize=None)
def _roll_direction():
    """Probe pltpu.roll's rotation convention once (cached).

    Returns True  if pltpu.roll(x, +1, axis=-1) moves data toward higher lane
                  indices (jnp.roll convention),
            False if it rotates the other way,
            None  if roll is unusable -> use the matmul pooling path everywhere.
    """
    try:
        def k(x_ref, o_ref):
            o_ref[...] = pltpu.roll(x_ref[...], shift=1, axis=-1)

        x = jnp.broadcast_to(jnp.arange(128, dtype=jnp.float32), (8, 128))
        y = jax.device_get(pl.pallas_call(
            k, out_shape=jax.ShapeDtypeStruct((8, 128), jnp.float32))(x))
        if float(y[0, 0]) == 127.0 and float(y[0, 1]) == 0.0:
            return True
        if float(y[0, 0]) == 1.0:
            return False
        return None
    except Exception:
        return None


def _nhits_stack_kernel(plan, roll_like_jnp, seq_len, pred_len, l_pad, p_pad, *refs):
    """Fused NHiTS first-stage forward for one batch tile.

    plan: static tuple of (pool_k, n_layers, use_roll) per block.
    refs = res0_ref,
           per block: [sel_ref if pool_k>1], (W_ref, b_ref)*n_layers, Wcomb_ref, bcomb_ref,
           out_ref  (lane-dense (TB, p_pad) forecast, already incl. last observation).
    """
    out_ref = refs[-1]
    res = refs[0][...].astype(jnp.float32)            # (TB, l_pad), flipped residuals
    tb = res.shape[0]

    # Residual mask (static function of seq_len / pred_len), zero on padding lanes.
    col = jax.lax.broadcasted_iota(jnp.int32, (1, l_pad), 1)
    lo = 0 if pred_len > seq_len else seq_len - pred_len
    mask = jnp.where((col >= lo) & (col < seq_len), 1.0, 0.0).astype(jnp.float32)
    valid = col < seq_len

    # forecast accumulator initialised in-kernel from the last observation
    # (residuals are the flipped input, so lane 0 holds x[:, -1]).
    fore = jnp.broadcast_to(res[:, 0:1], (tb, p_pad))

    idx = 1
    for (pool_k, n_layers, use_roll) in plan:
        # --- MaxPool1d(k, stride=k, ceil_mode=True) ---
        if pool_k > 1:
            s_ref = refs[idx]; idx += 1
            if use_roll:
                # Window max via (k-1) lane rolls (XLU) + VPU maxima, then ONE
                # one-hot selection matmul picking column p*k.
                res_m = jnp.where(valid, res, _NEG_BIG)
                wmax = res_m
                for j in range(1, pool_k):
                    shift = (l_pad - j) if roll_like_jnp else j
                    wmax = jnp.maximum(wmax,
                                       pltpu.roll(res_m, shift=shift, axis=-1))
                h = jnp.dot(wmax, s_ref[...], preferred_element_type=jnp.float32)
            else:
                # Fallback: ONE concatenated selection matmul, maxima over the
                # k lane-aligned slabs (exact, ceil_mode via duplicated tap).
                hin_pad = s_ref.shape[1] // pool_k
                hc = jnp.dot(res, s_ref[...], preferred_element_type=jnp.float32)
                h = hc[:, :hin_pad]
                for j in range(1, pool_k):
                    h = jnp.maximum(h, hc[:, j * hin_pad:(j + 1) * hin_pad])
        else:
            h = res                                    # k == 1: pooling is identity

        # --- hidden MLP: h = relu(h @ W + b) ---
        for _ in range(n_layers):
            w_ref, b_ref = refs[idx], refs[idx + 1]; idx += 2
            hw = jnp.dot(h.astype(w_ref.dtype), w_ref[...],
                         preferred_element_type=jnp.float32)
            h = jnp.maximum(hw + b_ref[...].astype(jnp.float32), 0.0)

        # --- basis Linear fused with IdentityBasis (backcast | interp-forecast) ---
        wc_ref, bc_ref = refs[idx], refs[idx + 1]; idx += 2
        theta = jnp.dot(h.astype(wc_ref.dtype), wc_ref[...],
                        preferred_element_type=jnp.float32)
        theta = theta + bc_ref[...].astype(jnp.float32)   # (TB, l_pad + p_pad)
        backcast = theta[:, :l_pad]                       # lane-aligned slices
        block_fore = theta[:, l_pad:l_pad + p_pad]

        res = (res - backcast) * mask                     # residual update
        fore = fore + block_fore                          # forecast accumulation

    out_ref[...] = fore.astype(out_ref.dtype)


def prepare_nhits_params(blocks_params, *, seq_len, pred_len,
                         param_dtype=jnp.bfloat16):
    """Pad / fuse per-block torch-layout params into kernel-ready lane-dense tensors.

    Call once per parameter set and reuse the result across forward calls (the
    host-side selector / interpolation construction is not cheap)."""
    l_pad = _round_up(seq_len, 128)
    p_pad = _round_up(pred_len, 128)
    roll_dir = _roll_direction()

    plan, flat = [], []
    flops_per_row = 0
    for bp in blocks_params:
        k = int(bp["pool_k"])
        n_pooled = math.ceil(seq_len / k)
        hidden = bp["hidden"]
        # roll path is safe iff the last window never wraps past the padded lanes.
        use_roll = (k > 1) and (roll_dir is not None) and (n_pooled * k <= l_pad)
        plan.append((k, len(hidden), use_roll))

        if k > 1:
            hin_pad = _round_up(n_pooled, 128)
            if use_roll:
                sel = np.zeros((l_pad, hin_pad), np.float32)
                for p in range(n_pooled):
                    sel[p * k, p] = 1.0                 # pick window-max at lane p*k
            else:
                sel = np.zeros((l_pad, k * hin_pad), np.float32)
                for p in range(n_pooled):
                    for j in range(k):
                        c = p * k + j
                        if c >= seq_len:                # ceil_mode tail: duplicate
                            c = p * k
                        sel[c, j * hin_pad + p] = 1.0
            flat.append(jnp.asarray(sel))               # selectors stay f32 (exact)
            flops_per_row += 2 * l_pad * sel.shape[1]
            in_dim, in_pad = n_pooled, hin_pad
        else:
            in_dim, in_pad = seq_len, l_pad

        # Hidden Linear layers (torch layout W:(out,in), b:(out,)), zero-padded.
        for (w, b) in hidden:
            w = np.asarray(w, np.float32)
            b = np.asarray(b, np.float32)
            out_dim = int(w.shape[0])
            out_pad = _round_up(out_dim, 128)
            wp = np.zeros((in_pad, out_pad), np.float32)
            wp[:in_dim, :out_dim] = w.T
            bv = np.zeros((1, out_pad), np.float32)
            bv[0, :out_dim] = b
            flat += [jnp.asarray(wp, param_dtype), jnp.asarray(bv, param_dtype)]
            flops_per_row += 2 * in_pad * out_pad
            in_dim, in_pad = out_dim, out_pad

        # Basis Linear fused with IdentityBasis: cols [0:seq_len) -> backcast,
        # cols [l_pad : l_pad+pred_len) -> nearest-interpolated forecast.
        w_t = np.asarray(bp["basis_w"], np.float32)      # (theta_size, in_dim)
        b_t = np.asarray(bp["basis_b"], np.float32)      # (theta_size,)
        theta_size = int(w_t.shape[0])
        n_knots = theta_size - seq_len
        assert n_knots >= 1
        interp = np.zeros((n_knots, pred_len), np.float32)
        for t in range(pred_len):
            interp[(t * n_knots) // pred_len, t] = 1.0   # torch nearest upsample
        w_back = w_t[:seq_len, :].T                      # (in_dim, seq_len)
        w_fore = w_t[seq_len:, :].T @ interp             # (in_dim, pred_len)
        b_back = b_t[:seq_len]
        b_fore = b_t[seq_len:] @ interp
        wcomb = np.zeros((in_pad, l_pad + p_pad), np.float32)
        wcomb[:in_dim, :seq_len] = w_back
        wcomb[:in_dim, l_pad:l_pad + pred_len] = w_fore
        bcomb = np.zeros((1, l_pad + p_pad), np.float32)
        bcomb[0, :seq_len] = b_back
        bcomb[0, l_pad:l_pad + pred_len] = b_fore
        flat += [jnp.asarray(wcomb, param_dtype), jnp.asarray(bcomb, param_dtype)]
        flops_per_row += 2 * in_pad * (l_pad + p_pad)

    return dict(plan=tuple(plan), flat=flat, l_pad=l_pad, p_pad=p_pad,
                seq_len=seq_len, pred_len=pred_len,
                roll_like_jnp=bool(roll_dir), flops_per_row=flops_per_row)


def nhits_first_stage_forward(x, blocks_params=None, *, seq_len=None, pred_len=None,
                              prepared=None, batch_tile=None,
                              param_dtype=jnp.bfloat16, interpret=False):
    """x: (B, seq_len) f32 -> first_stage_out (B, pred_len, 1)."""
    if prepared is None:
        prepared = prepare_nhits_params(blocks_params, seq_len=seq_len,
                                        pred_len=pred_len, param_dtype=param_dtype)
    plan = prepared["plan"]
    flat = prepared["flat"]
    seq_len = prepared["seq_len"]
    pred_len = prepared["pred_len"]
    l_pad = prepared["l_pad"]
    p_pad = prepared["p_pad"]

    B, S = x.shape
    assert S == seq_len

    # Batch tile: large M keeps the 256-wide MXU fed (K=N are only ~128 here);
    # keep >= 2 grid steps so the "parallel" batch axis is sharded across both
    # v7x TensorCores.
    if batch_tile is None:
        tb = min(512, _round_up(B, 8))
        if B > 8:
            tb = min(tb, _round_up((B + 1) // 2, 8))
    else:
        tb = _round_up(min(int(batch_tile), _round_up(B, 8)), 8)
    b_pad = _round_up(B, tb)

    # residuals_0 = flip(x); zero-pad batch rows + lanes (lane padding is masked
    # in-kernel, padded batch rows are sliced away afterwards).
    res0 = jnp.zeros((b_pad, l_pad), jnp.float32)
    res0 = res0.at[:B, :seq_len].set(x[:, ::-1].astype(jnp.float32))

    grid = (b_pad // tb,)
    out_specs = pl.BlockSpec((tb, p_pad), lambda i: (i, 0))
    kernel = functools.partial(_nhits_stack_kernel, plan,
                               prepared["roll_like_jnp"],
                               seq_len, pred_len, l_pad, p_pad)

    # ---- VMEM budget, clamped to this chip's per-core capacity ----
    weight_bytes = sum(int(np.prod(w.shape)) * w.dtype.itemsize for w in flat)
    max_feat = max([l_pad + p_pad] + [int(w.shape[-1]) for w in flat])
    io_bytes = 2 * tb * (l_pad + p_pad) * 4            # double-buffered in/out tiles
    act_bytes = tb * (2 * l_pad + 2 * (l_pad + p_pad) + 2 * max_feat) * 4
    try:
        vmem_cap = int(pltpu.get_tpu_info().vmem_capacity_bytes)
    except Exception:
        vmem_cap = 64 * 1024 * 1024                    # v7x per-core lower bound
    cap = max(vmem_cap - (8 << 20), 16 << 20)

    cost = pl.CostEstimate(
        flops=int(prepared["flops_per_row"]) * b_pad,
        transcendentals=0,
        bytes_accessed=int(res0.size * 4 + weight_bytes + b_pad * p_pad * 4))

    def _run(single_buffer_weights):
        in_specs = [pl.BlockSpec((tb, l_pad), lambda i: (i, 0))]
        for w in flat:
            spec = None
            if single_buffer_weights:
                try:   # grid-invariant weights: one VMEM buffer is enough
                    spec = pl.BlockSpec(w.shape, lambda i: (0, 0),
                                        pipeline_mode=pl.Buffered(1))
                except Exception:
                    spec = None
            if spec is None:
                spec = pl.BlockSpec(w.shape, lambda i: (0, 0))
            in_specs.append(spec)
        wfac = 1 if single_buffer_weights else 2
        vmem_limit = int(min(max(wfac * weight_bytes + io_bytes + act_bytes
                                 + (4 << 20), 32 << 20), cap))
        out = pl.pallas_call(
            kernel,
            out_shape=jax.ShapeDtypeStruct((b_pad, p_pad), jnp.float32),
            grid=grid,
            in_specs=in_specs,
            out_specs=out_specs,
            compiler_params=pltpu.CompilerParams(
                dimension_semantics=("parallel",),
                vmem_limit_bytes=vmem_limit),
            cost_estimate=cost,
            interpret=interpret,
        )(res0, *flat)
        return jax.block_until_ready(out)

    try:
        fore_sum = _run(True)
    except Exception:
        # pipeline_mode=pl.Buffered(1) not supported by this jax/libtpu combo;
        # fall back to default (double-buffered) weight pipelining.
        fore_sum = _run(False)

    # TODO(synk): for NHiTS configs whose all-block weights + activations exceed one
    # core's VMEM, restructure to grid=(B_tiles, n_blocks) with per-block weight
    # index_maps and residual/forecast carried in VMEM scratch across the block axis.
    return fore_sum[:B, :pred_len][:, :, None]


# ----------------------------- pure-JAX reference -----------------------------

def _reference_forward(x, blocks_params, *, seq_len, pred_len):
    B = x.shape[0]
    hp = jax.lax.Precision.HIGHEST
    if pred_len > seq_len:
        x_mask = jnp.ones((B, seq_len), jnp.float32)
    else:
        x_mask = jnp.zeros((B, seq_len), jnp.float32).at[:, seq_len - pred_len:].set(1.0)
    residuals = x[:, ::-1].astype(jnp.float32)
    forecast = x[:, seq_len - 1:seq_len].astype(jnp.float32)
    for bp in blocks_params:
        k = int(bp["pool_k"])
        n_pooled = math.ceil(seq_len / k)
        pad = n_pooled * k - seq_len
        xp = jnp.pad(residuals, ((0, 0), (0, pad)), constant_values=-jnp.inf)
        h = jnp.max(xp.reshape(B, n_pooled, k), axis=-1)
        for (w, b) in bp["hidden"]:
            h = jax.nn.relu(jnp.dot(h, w.T, precision=hp) + b)
        theta = jnp.dot(h, bp["basis_w"].T, precision=hp) + bp["basis_b"]
        backcast = theta[:, :seq_len]
        knots = theta[:, seq_len:]
        nk = knots.shape[1]
        idx = jnp.asarray([(t * nk) // pred_len for t in range(pred_len)], jnp.int32)
        block_fore = knots[:, idx]                     # F.interpolate(mode='nearest')
        residuals = (residuals - backcast) * x_mask
        forecast = forecast + block_fore
    return forecast[:, :, None]


def _init_nhits_params(key, *, seq_len, pred_len, stack_num, n_layers, n_hidden,
                       n_pool_kernel_size, n_freq_downsample):
    """Deterministic synthetic init matching the PyTorch module's shapes."""
    blocks = []
    for i in range(stack_num):
        k = n_pool_kernel_size[i]
        n_pooled = math.ceil(seq_len / k)
        dims = [n_pooled, n_hidden, n_hidden]
        theta_size = seq_len + max(pred_len // n_freq_downsample[i], 1)
        hidden = []
        in_dim = dims[0]
        for l in range(n_layers[i]):
            out_dim = dims[l + 1]
            key, kw, kb = jax.random.split(key, 3)
            bound = 1.0 / math.sqrt(in_dim)
            w = jax.random.uniform(kw, (out_dim, in_dim), jnp.float32, -bound, bound)
            b = jax.random.uniform(kb, (out_dim,), jnp.float32, -bound, bound)
            hidden.append((w, b))
            in_dim = out_dim
        key, kw, kb = jax.random.split(key, 3)
        bound = 1.0 / math.sqrt(in_dim)
        basis_w = jax.random.uniform(kw, (theta_size, in_dim), jnp.float32, -bound, bound)
        basis_b = jax.random.uniform(kb, (theta_size,), jnp.float32, -bound, bound)
        blocks.append({"pool_k": k, "hidden": hidden,
                       "basis_w": basis_w, "basis_b": basis_b})
    return blocks


if __name__ == "__main__":
    # Small NHiTS configuration (3 blocks: ceil_mode pooling k=3, k=2, identity k=1,
    # nearest interpolation with 2/4/8 knots -> pred_len=8).
    seq_len, pred_len = 16, 8
    stack_num = 3
    n_layers = [2, 2, 2]
    n_hidden = 32
    n_pool_kernel_size = [3, 2, 1]
    n_freq_downsample = [4, 2, 1]
    batch = 12

    key = jax.random.PRNGKey(0)
    key, kx = jax.random.split(key)
    x = jax.random.normal(kx, (batch, seq_len), jnp.float32)

    blocks = _init_nhits_params(
        key, seq_len=seq_len, pred_len=pred_len, stack_num=stack_num,
        n_layers=n_layers, n_hidden=n_hidden,
        n_pool_kernel_size=n_pool_kernel_size,
        n_freq_downsample=n_freq_downsample)
    ref = _reference_forward(x, blocks, seq_len=seq_len, pred_len=pred_len)

    # 1) f32 weights, tiny explicit batch tile (exercises multi-step grid + padded tail).
    prep_f32 = prepare_nhits_params(blocks, seq_len=seq_len, pred_len=pred_len,
                                    param_dtype=jnp.float32)
    out = nhits_first_stage_forward(x, prepared=prep_f32, batch_tile=8)
    jax.block_until_ready(out)
    assert out.shape == (batch, pred_len, 1)
    assert jnp.allclose(out, ref, rtol=2e-2, atol=2e-2), \
        float(jnp.max(jnp.abs(out - ref)))

    # 2) default path: bf16 weights (MXU-native on v5e/v6e/v7x), auto batch tile
    #    (>= 2 grid steps so both v7x TensorCores get work).
    prep_bf16 = prepare_nhits_params(blocks, seq_len=seq_len, pred_len=pred_len)
    out_bf16 = nhits_first_stage_forward(x, prepared=prep_bf16)
    jax.block_until_ready(out_bf16)
    assert jnp.allclose(out_bf16, ref, rtol=1e-1, atol=2.5e-1), \
        float(jnp.max(jnp.abs(out_bf16 - ref)))

    # 3) config where ceil(seq/k)*k > padded lane count -> exercises the
    #    concatenated single-matmul pooling fallback path.
    seq2, pred2, batch2 = 128, 8, 4
    key2, kx2 = jax.random.split(jax.random.PRNGKey(1))
    x2 = jax.random.normal(kx2, (batch2, seq2), jnp.float32)
    blocks2 = _init_nhits_params(
        key2, seq_len=seq2, pred_len=pred2, stack_num=1, n_layers=[1],
        n_hidden=32, n_pool_kernel_size=[3], n_freq_downsample=[1])
    prep2 = prepare_nhits_params(blocks2, seq_len=seq2, pred_len=pred2,
                                 param_dtype=jnp.float32)
    out2 = nhits_first_stage_forward(x2, prepared=prep2)
    jax.block_until_ready(out2)
    ref2 = _reference_forward(x2, blocks2, seq_len=seq2, pred_len=pred2)
    assert jnp.allclose(out2, ref2, rtol=2e-2, atol=2e-2), \
        float(jnp.max(jnp.abs(out2 - ref2)))

    print("KERNEL_OK")
</pallas_src>

<mosaic_0001>
module attributes {stable_mosaic.version = 11 : i64} {
  func.func @_nhits_stack_kernel(%arg0: i32, %arg1: memref<8x128xf32, #tpu.memory_space<vmem>>, %arg2: memref<128x384xf32, #tpu.memory_space<vmem>>, %arg3: memref<128x128xf32, #tpu.memory_space<vmem>>, %arg4: memref<1x128xf32, #tpu.memory_space<vmem>>, %arg5: memref<128x128xf32, #tpu.memory_space<vmem>>, %arg6: memref<1x128xf32, #tpu.memory_space<vmem>>, %arg7: memref<128x256xf32, #tpu.memory_space<vmem>>, %arg8: memref<1x256xf32, #tpu.memory_space<vmem>>, %arg9: memref<128x256xf32, #tpu.memory_space<vmem>>, %arg10: memref<128x128xf32, #tpu.memory_space<vmem>>, %arg11: memref<1x128xf32, #tpu.memory_space<vmem>>, %arg12: memref<128x128xf32, #tpu.memory_space<vmem>>, %arg13: memref<1x128xf32, #tpu.memory_space<vmem>>, %arg14: memref<128x256xf32, #tpu.memory_space<vmem>>, %arg15: memref<1x256xf32, #tpu.memory_space<vmem>>, %arg16: memref<128x128xf32, #tpu.memory_space<vmem>>, %arg17: memref<1x128xf32, #tpu.memory_space<vmem>>, %arg18: memref<128x128xf32, #tpu.memory_space<vmem>>, %arg19: memref<1x128xf32, #tpu.memory_space<vmem>>, %arg20: memref<128x256xf32, #tpu.memory_space<vmem>>, %arg21: memref<1x256xf32, #tpu.memory_space<vmem>>, %arg22: memref<8x128xf32, #tpu.memory_space<vmem>>) attributes {dimension_semantics = [#tpu.dimension_semantics<parallel>], iteration_bounds = array<i64: 2>, scalar_prefetch = 0 : i64, scratch_operands = 0 : i64, tpu.core_type = #tpu.core_type<tc>, window_params = [{transform_indices = @transform_0, window_bounds = array<i64: 8, 128>}, {pipeline_mode = #tpu.pipeline_mode<synchronous>, transform_indices = @transform_1, window_bounds = array<i64: 128, 384>}, {pipeline_mode = #tpu.pipeline_mode<synchronous>, transform_indices = @transform_2, window_bounds = array<i64: 128, 128>}, {pipeline_mode = #tpu.pipeline_mode<synchronous>, transform_indices = @transform_3, window_bounds = array<i64: 1, 128>}, {pipeline_mode = #tpu.pipeline_mode<synchronous>, transform_indices = @transform_4, window_bounds = array<i64: 128, 128>}, {pipeline_mode = #tpu.pipeline_mode<synchronous>, transform_indices = @transform_5, window_bounds = array<i64: 1, 128>}, {pipeline_mode = #tpu.pipeline_mode<synchronous>, transform_indices = @transform_6, window_bounds = array<i64: 128, 256>}, {pipeline_mode = #tpu.pipeline_mode<synchronous>, transform_indices = @transform_7, window_bounds = array<i64: 1, 256>}, {pipeline_mode = #tpu.pipeline_mode<synchronous>, transform_indices = @transform_8, window_bounds = array<i64: 128, 256>}, {pipeline_mode = #tpu.pipeline_mode<synchronous>, transform_indices = @transform_9, window_bounds = array<i64: 128, 128>}, {pipeline_mode = #tpu.pipeline_mode<synchronous>, transform_indices = @transform_10, window_bounds = array<i64: 1, 128>}, {pipeline_mode = #tpu.pipeline_mode<synchronous>, transform_indices = @transform_11, window_bounds = array<i64: 128, 128>}, {pipeline_mode = #tpu.pipeline_mode<synchronous>, transform_indices = @transform_12, window_bounds = array<i64: 1, 128>}, {pipeline_mode = #tpu.pipeline_mode<synchronous>, transform_indices = @transform_13, window_bounds = array<i64: 128, 256>}, {pipeline_mode = #tpu.pipeline_mode<synchronous>, transform_indices = @transform_14, window_bounds = array<i64: 1, 256>}, {pipeline_mode = #tpu.pipeline_mode<synchronous>, transform_indices = @transform_15, window_bounds = array<i64: 128, 128>}, {pipeline_mode = #tpu.pipeline_mode<synchronous>, transform_indices = @transform_16, window_bounds = array<i64: 1, 128>}, {pipeline_mode = #tpu.pipeline_mode<synchronous>, transform_indices = @transform_17, window_bounds = array<i64: 128, 128>}, {pipeline_mode = #tpu.pipeline_mode<synchronous>, transform_indices = @transform_18, window_bounds = array<i64: 1, 128>}, {pipeline_mode = #tpu.pipeline_mode<synchronous>, transform_indices = @transform_19, window_bounds = array<i64: 128, 256>}, {pipeline_mode = #tpu.pipeline_mode<synchronous>, transform_indices = @transform_20, window_bounds = array<i64: 1, 256>}, {transform_indices = @transform_21, window_bounds = array<i64: 8, 128>}]} {
    %c0 = arith.constant 0 : index
    %c0_0 = arith.constant 0 : index
    %0 = vector.load %arg1[%c0, %c0_0] : memref<8x128xf32, #tpu.memory_space<vmem>>, vector<8x128xf32>
    %1 = tpu.iota {dimensions = array<i32: 1>} : vector<1x128xi32>
    %c8_i32 = arith.constant 8 : i32
    %2 = vector.broadcast %c8_i32 : i32 to vector<1x128xi32>
    %3 = arith.cmpi sge, %1, %2 : vector<1x128xi32>
    %c16_i32 = arith.constant 16 : i32
    %4 = vector.broadcast %c16_i32 : i32 to vector<1x128xi32>
    %5 = arith.cmpi slt, %1, %4 : vector<1x128xi32>
    %6 = arith.andi %3, %5 : vector<1x128xi1>
    %cst = arith.constant 1.000000e+00 : f32
    %cst_1 = arith.constant 0.000000e+00 : f32
    %7 = vector.broadcast %cst : f32 to vector<1x128xf32>
    %8 = vector.broadcast %cst_1 : f32 to vector<1x128xf32>
    %9 = arith.select %6, %7, %8 : vector<1x128xi1>, vector<1x128xf32>
    %10 = vector.extract_strided_slice %0 {offsets = [0, 0], sizes = [8, 1], strides = [1, 1]} : vector<8x128xf32> to vector<8x1xf32>
    %11 = vector.shape_cast %10 : vector<8x1xf32> to vector<8x1xf32>
    %12 = vector.broadcast %11 : vector<8x1xf32> to vector<8x128xf32>
    %c0_2 = arith.constant 0 : index
    %c0_3 = arith.constant 0 : index
    %13 = vector.load %arg2[%c0_2, %c0_3] : memref<128x384xf32, #tpu.memory_space<vmem>>, vector<128x384xf32>
    %cst_4 = arith.constant dense<0.000000e+00> : vector<8x384xf32>
    %14 = tpu.matmul %0, %13, %cst_4 {dimension_numbers = #tpu.dot_dimension_numbers<[1], [0], [0], [1], [0, 0, 1, 1], [], []>} : vector<8x128xf32>, vector<128x384xf32>, vector<8x384xf32> -> vector<8x384xf32>
    %15 = vector.extract_strided_slice %14 {offsets = [0, 0], sizes = [8, 128], strides = [1, 1]} : vector<8x384xf32> to vector<8x128xf32>
    %16 = vector.extract_strided_slice %14 {offsets = [0, 128], sizes = [8, 128], strides = [1, 1]} : vector<8x384xf32> to vector<8x128xf32>
    %17 = arith.maximumf %15, %16 : vector<8x128xf32>
    %18 = vector.extract_strided_slice %14 {offsets = [0, 256], sizes = [8, 128], strides = [1, 1]} : vector<8x384xf32> to vector<8x128xf32>
    %19 = arith.maximumf %17, %18 : vector<8x128xf32>
    %c0_5 = arith.constant 0 : index
    %c0_6 = arith.constant 0 : index
    %20 = vector.load %arg3[%c0_5, %c0_6] : memref<128x128xf32, #tpu.memory_space<vmem>>, vector<128x128xf32>
    %cst_7 = arith.constant dense<0.000000e+00> : vector<8x128xf32>
    %21 = tpu.matmul %19, %20, %cst_7 {dimension_numbers = #tpu.dot_dimension_numbers<[1], [0], [0], [1], [0, 0, 1, 1], [], []>} : vector<8x128xf32>, vector<128x128xf32>, vector<8x128xf32> -> vector<8x128xf32>
    %c0_8 = arith.constant 0 : index
    %c0_9 = arith.constant 0 : index
    %22 = vector.load %arg4[%c0_8, %c0_9] : memref<1x128xf32, #tpu.memory_space<vmem>>, vector<1x128xf32>
    %23 = vector.broadcast %22 : vector<1x128xf32> to vector<8x128xf32>
    %24 = arith.addf %21, %23 : vector<8x128xf32>
    %cst_10 = arith.constant 0.000000e+00 : f32
    %25 = vector.broadcast %cst_10 : f32 to vector<8x128xf32>
    %26 = arith.maximumf %24, %25 : vector<8x128xf32>
    %c0_11 = arith.constant 0 : index
    %c0_12 = arith.constant 0 : index
    %27 = vector.load %arg5[%c0_11, %c0_12] : memref<128x128xf32, #tpu.memory_space<vmem>>, vector<128x128xf32>
    %cst_13 = arith.constant dense<0.000000e+00> : vector<8x128xf32>
    %28 = tpu.matmul %26, %27, %cst_13 {dimension_numbers = #tpu.dot_dimension_numbers<[1], [0], [0], [1], [0, 0, 1, 1], [], []>} : vector<8x128xf32>, vector<128x128xf32>, vector<8x128xf32> -> vector<8x128xf32>
    %c0_14 = arith.constant 0 : index
    %c0_15 = arith.constant 0 : index
    %29 = vector.load %arg6[%c0_14, %c0_15] : memref<1x128xf32, #tpu.memory_space<vmem>>, vector<1x128xf32>
    %30 = vector.broadcast %29 : vector<1x128xf32> to vector<8x128xf32>
    %31 = arith.addf %28, %30 : vector<8x128xf32>
    %cst_16 = arith.constant 0.000000e+00 : f32
    %32 = vector.broadcast %cst_16 : f32 to vector<8x128xf32>
    %33 = arith.maximumf %31, %32 : vector<8x128xf32>
    %c0_17 = arith.constant 0 : index
    %c0_18 = arith.constant 0 : index
    %34 = vector.load %arg7[%c0_17, %c0_18] : memref<128x256xf32, #tpu.memory_space<vmem>>, vector<128x256xf32>
    %cst_19 = arith.constant dense<0.000000e+00> : vector<8x256xf32>
    %35 = tpu.matmul %33, %34, %cst_19 {dimension_numbers = #tpu.dot_dimension_numbers<[1], [0], [0], [1], [0, 0, 1, 1], [], []>} : vector<8x128xf32>, vector<128x256xf32>, vector<8x256xf32> -> vector<8x256xf32>
    %c0_20 = arith.constant 0 : index
    %c0_21 = arith.constant 0 : index
    %36 = vector.load %arg8[%c0_20, %c0_21] : memref<1x256xf32, #tpu.memory_space<vmem>>, vector<1x256xf32>
    %37 = vector.broadcast %36 : vector<1x256xf32> to vector<8x256xf32>
    %38 = arith.addf %35, %37 : vector<8x256xf32>
    %39 = vector.extract_strided_slice %38 {offsets = [0, 0], sizes = [8, 128], strides = [1, 1]} : vector<8x256xf32> to vector<8x128xf32>
    %40 = vector.extract_strided_slice %38 {offsets = [0, 128], sizes = [8, 128], strides = [1, 1]} : vector<8x256xf32> to vector<8x128xf32>
    %41 = arith.subf %0, %39 : vector<8x128xf32>
    %42 = vector.broadcast %9 : vector<1x128xf32> to vector<8x128xf32>
    %43 = arith.mulf %41, %42 : vector<8x128xf32>
    %44 = arith.addf %12, %40 : vector<8x128xf32>
    %c0_22 = arith.constant 0 : index
    %c0_23 = arith.constant 0 : index
    %45 = vector.load %arg9[%c0_22, %c0_23] : memref<128x256xf32, #tpu.memory_space<vmem>>, vector<128x256xf32>
    %cst_24 = arith.constant dense<0.000000e+00> : vector<8x256xf32>
    %46 = tpu.matmul %43, %45, %cst_24 {dimension_numbers = #tpu.dot_dimension_numbers<[1], [0], [0], [1], [0, 0, 1, 1], [], []>} : vector<8x128xf32>, vector<128x256xf32>, vector<8x256xf32> -> vector<8x256xf32>
    %47 = vector.extract_strided_slice %46 {offsets = [0, 0], sizes = [8, 128], strides = [1, 1]} : vector<8x256xf32> to vector<8x128xf32>
    %48 = vector.extract_strided_slice %46 {offsets = [0, 128], sizes = [8, 128], strides = [1, 1]} : vector<8x256xf32> to vector<8x128xf32>
    %49 = arith.maximumf %47, %48 : vector<8x128xf32>
    %c0_25 = arith.constant 0 : index
    %c0_26 = arith.constant 0 : index
    %50 = vector.load %arg10[%c0_25, %c0_26] : memref<128x128xf32, #tpu.memory_space<vmem>>, vector<128x128xf32>
    %cst_27 = arith.constant dense<0.000000e+00> : vector<8x128xf32>
    %51 = tpu.matmul %49, %50, %cst_27 {dimension_numbers = #tpu.dot_dimension_numbers<[1], [0], [0], [1], [0, 0, 1, 1], [], []>} : vector<8x128xf32>, vector<128x128xf32>, vector<8x128xf32> -> vector<8x128xf32>
    %c0_28 = arith.constant 0 : index
    %c0_29 = arith.constant 0 : index
    %52 = vector.load %arg11[%c0_28, %c0_29] : memref<1x128xf32, #tpu.memory_space<vmem>>, vector<1x128xf32>
    %53 = vector.broadcast %52 : vector<1x128xf32> to vector<8x128xf32>
    %54 = arith.addf %51, %53 : vector<8x128xf32>
    %cst_30 = arith.constant 0.000000e+00 : f32
    %55 = vector.broadcast %cst_30 : f32 to vector<8x128xf32>
    %56 = arith.maximumf %54, %55 : vector<8x128xf32>
    %c0_31 = arith.constant 0 : index
    %c0_32 = arith.constant 0 : index
    %57 = vector.load %arg12[%c0_31, %c0_32] : memref<128x128xf32, #tpu.memory_space<vmem>>, vector<128x128xf32>
    %cst_33 = arith.constant dense<0.000000e+00> : vector<8x128xf32>
    %58 = tpu.matmul %56, %57, %cst_33 {dimension_numbers = #tpu.dot_dimension_numbers<[1], [0], [0], [1], [0, 0, 1, 1], [], []>} : vector<8x128xf32>, vector<128x128xf32>, vector<8x128xf32> -> vector<8x128xf32>
    %c0_34 = arith.constant 0 : index
    %c0_35 = arith.constant 0 : index
    %59 = vector.load %arg13[%c0_34, %c0_35] : memref<1x128xf32, #tpu.memory_space<vmem>>, vector<1x128xf32>
    %60 = vector.broadcast %59 : vector<1x128xf32> to vector<8x128xf32>
    %61 = arith.addf %58, %60 : vector<8x128xf32>
    %cst_36 = arith.constant 0.000000e+00 : f32
    %62 = vector.broadcast %cst_36 : f32 to vector<8x128xf32>
    %63 = arith.maximumf %61, %62 : vector<8x128xf32>
    %c0_37 = arith.constant 0 : index
    %c0_38 = arith.constant 0 : index
    %64 = vector.load %arg14[%c0_37, %c0_38] : memref<128x256xf32, #tpu.memory_space<vmem>>, vector<128x256xf32>
    %cst_39 = arith.constant dense<0.000000e+00> : vector<8x256xf32>
    %65 = tpu.matmul %63, %64, %cst_39 {dimension_numbers = #tpu.dot_dimension_numbers<[1], [0], [0], [1], [0, 0, 1, 1], [], []>} : vector<8x128xf32>, vector<128x256xf32>, vector<8x256xf32> -> vector<8x256xf32>
    %c0_40 = arith.constant 0 : index
    %c0_41 = arith.constant 0 : index
    %66 = vector.load %arg15[%c0_40, %c0_41] : memref<1x256xf32, #tpu.memory_space<vmem>>, vector<1x256xf32>
    %67 = vector.broadcast %66 : vector<1x256xf32> to vector<8x256xf32>
    %68 = arith.addf %65, %67 : vector<8x256xf32>
    %69 = vector.extract_strided_slice %68 {offsets = [0, 0], sizes = [8, 128], strides = [1, 1]} : vector<8x256xf32> to vector<8x128xf32>
    %70 = vector.extract_strided_slice %68 {offsets = [0, 128], sizes = [8, 128], strides = [1, 1]} : vector<8x256xf32> to vector<8x128xf32>
    %71 = arith.subf %43, %69 : vector<8x128xf32>
    %72 = vector.broadcast %9 : vector<1x128xf32> to vector<8x128xf32>
    %73 = arith.mulf %71, %72 : vector<8x128xf32>
    %74 = arith.addf %44, %70 : vector<8x128xf32>
    %c0_42 = arith.constant 0 : index
    %c0_43 = arith.constant 0 : index
    %75 = vector.load %arg16[%c0_42, %c0_43] : memref<128x128xf32, #tpu.memory_space<vmem>>, vector<128x128xf32>
    %cst_44 = arith.constant dense<0.000000e+00> : vector<8x128xf32>
    %76 = tpu.matmul %73, %75, %cst_44 {dimension_numbers = #tpu.dot_dimension_numbers<[1], [0], [0], [1], [0, 0, 1, 1], [], []>} : vector<8x128xf32>, vector<128x128xf32>, vector<8x128xf32> -> vector<8x128xf32>
    %c0_45 = arith.constant 0 : index
    %c0_46 = arith.constant 0 : index
    %77 = vector.load %arg17[%c0_45, %c0_46] : memref<1x128xf32, #tpu.memory_space<vmem>>, vector<1x128xf32>
    %78 = vector.broadcast %77 : vector<1x128xf32> to vector<8x128xf32>
    %79 = arith.addf %76, %78 : vector<8x128xf32>
    %cst_47 = arith.constant 0.000000e+00 : f32
    %80 = vector.broadcast %cst_47 : f32 to vector<8x128xf32>
    %81 = arith.maximumf %79, %80 : vector<8x128xf32>
    %c0_48 = arith.constant 0 : index
    %c0_49 = arith.constant 0 : index
    %82 = vector.load %arg18[%c0_48, %c0_49] : memref<128x128xf32, #tpu.memory_space<vmem>>, vector<128x128xf32>
    %cst_50 = arith.constant dense<0.000000e+00> : vector<8x128xf32>
    %83 = tpu.matmul %81, %82, %cst_50 {dimension_numbers = #tpu.dot_dimension_numbers<[1], [0], [0], [1], [0, 0, 1, 1], [], []>} : vector<8x128xf32>, vector<128x128xf32>, vector<8x128xf32> -> vector<8x128xf32>
    %c0_51 = arith.constant 0 : index
    %c0_52 = arith.constant 0 : index
    %84 = vector.load %arg19[%c0_51, %c0_52] : memref<1x128xf32, #tpu.memory_space<vmem>>, vector<1x128xf32>
    %85 = vector.broadcast %84 : vector<1x128xf32> to vector<8x128xf32>
    %86 = arith.addf %83, %85 : vector<8x128xf32>
    %cst_53 = arith.constant 0.000000e+00 : f32
    %87 = vector.broadcast %cst_53 : f32 to vector<8x128xf32>
    %88 = arith.maximumf %86, %87 : vector<8x128xf32>
    %c0_54 = arith.constant 0 : index
    %c0_55 = arith.constant 0 : index
    %89 = vector.load %arg20[%c0_54, %c0_55] : memref<128x256xf32, #tpu.memory_space<vmem>>, vector<128x256xf32>
    %cst_56 = arith.constant dense<0.000000e+00> : vector<8x256xf32>
    %90 = tpu.matmul %88, %89, %cst_56 {dimension_numbers = #tpu.dot_dimension_numbers<[1], [0], [0], [1], [0, 0, 1, 1], [], []>} : vector<8x128xf32>, vector<128x256xf32>, vector<8x256xf32> -> vector<8x256xf32>
    %c0_57 = arith.constant 0 : index
    %c0_58 = arith.constant 0 : index
    %91 = vector.load %arg21[%c0_57, %c0_58] : memref<1x256xf32, #tpu.memory_space<vmem>>, vector<1x256xf32>
    %92 = vector.broadcast %91 : vector<1x256xf32> to vector<8x256xf32>
    %93 = arith.addf %90, %92 : vector<8x256xf32>
    %94 = vector.extract_strided_slice %93 {offsets = [0, 128], sizes = [8, 128], strides = [1, 1]} : vector<8x256xf32> to vector<8x128xf32>
    %95 = arith.addf %74, %94 : vector<8x128xf32>
    %c0_59 = arith.constant 0 : index
    %c0_60 = arith.constant 0 : index
    %96 = vector.load %arg22[%c0_59, %c0_60] : memref<8x128xf32, #tpu.memory_space<vmem>>, vector<8x128xf32>
    tpu.vector_store %arg22[%c0_59, %c0_60], %95 {strides = array<i32>} : memref<8x128xf32, #tpu.memory_space<vmem>>, vector<8x128xf32>,
    return
  }
  func.func @transform_0(%arg0: i32) -> (i32, i32) {
    %c0_i32 = arith.constant 0 : i32
    %c0_i32_0 = arith.constant 0 : i32
    return %arg0, %c0_i32 : i32, i32
  }
  func.func @transform_1(%arg0: i32) -> (i32, i32) {
    %c0_i32 = arith.constant 0 : i32
    %c0_i32_0 = arith.constant 0 : i32
    %c0_i32_1 = arith.constant 0 : i32
    return %c0_i32, %c0_i32_0 : i32, i32
  }
  func.func @transform_2(%arg0: i32) -> (i32, i32) {
    %c0_i32 = arith.constant 0 : i32
    %c0_i32_0 = arith.constant 0 : i32
    %c0_i32_1 = arith.constant 0 : i32
    return %c0_i32, %c0_i32_0 : i32, i32
  }
  func.func @transform_3(%arg0: i32) -> (i32, i32) {
    %c0_i32 = arith.constant 0 : i32
    %c0_i32_0 = arith.constant 0 : i32
    %c0_i32_1 = arith.constant 0 : i32
    return %c0_i32, %c0_i32_0 : i32, i32
  }
  func.func @transform_4(%arg0: i32) -> (i32, i32) {
    %c0_i32 = arith.constant 0 : i32
    %c0_i32_0 = arith.constant 0 : i32
    %c0_i32_1 = arith.constant 0 : i32
    return %c0_i32, %c0_i32_0 : i32, i32
  }
  func.func @transform_5(%arg0: i32) -> (i32, i32) {
    %c0_i32 = arith.constant 0 : i32
    %c0_i32_0 = arith.constant 0 : i32
    %c0_i32_1 = arith.constant 0 : i32
    return %c0_i32, %c0_i32_0 : i32, i32
  }
  func.func @transform_6(%arg0: i32) -> (i32, i32) {
    %c0_i32 = arith.constant 0 : i32
    %c0_i32_0 = arith.constant 0 : i32
    %c0_i32_1 = arith.constant 0 : i32
    return %c0_i32, %c0_i32_0 : i32, i32
  }
  func.func @transform_7(%arg0: i32) -> (i32, i32) {
    %c0_i32 = arith.constant 0 : i32
    %c0_i32_0 = arith.constant 0 : i32
    %c0_i32_1 = arith.constant 0 : i32
    return %c0_i32, %c0_i32_0 : i32, i32
  }
  func.func @transform_8(%arg0: i32) -> (i32, i32) {
    %c0_i32 = arith.constant 0 : i32
    %c0_i32_0 = arith.constant 0 : i32
    %c0_i32_1 = arith.constant 0 : i32
    return %c0_i32, %c0_i32_0 : i32, i32
  }
  func.func @transform_9(%arg0: i32) -> (i32, i32) {
    %c0_i32 = arith.constant 0 : i32
    %c0_i32_0 = arith.constant 0 : i32
    %c0_i32_1 = arith.constant 0 : i32
    return %c0_i32, %c0_i32_0 : i32, i32
  }
  func.func @transform_10(%arg0: i32) -> (i32, i32) {
    %c0_i32 = arith.constant 0 : i32
    %c0_i32_0 = arith.constant 0 : i32
    %c0_i32_1 = arith.constant 0 : i32
    return %c0_i32, %c0_i32_0 : i32, i32
  }
  func.func @transform_11(%arg0: i32) -> (i32, i32) {
    %c0_i32 = arith.constant 0 : i32
    %c0_i32_0 = arith.constant 0 : i32
    %c0_i32_1 = arith.constant 0 : i32
    return %c0_i32, %c0_i32_0 : i32, i32
  }
  func.func @transform_12(%arg0: i32) -> (i32, i32) {
    %c0_i32 = arith.constant 0 : i32
    %c0_i32_0 = arith.constant 0 : i32
    %c0_i32_1 = arith.constant 0 : i32
    return %c0_i32, %c0_i32_0 : i32, i32
  }
  func.func @transform_13(%arg0: i32) -> (i32, i32) {
    %c0_i32 = arith.constant 0 : i32
    %c0_i32_0 = arith.constant 0 : i32
    %c0_i32_1 = arith.constant 0 : i32
    return %c0_i32, %c0_i32_0 : i32, i32
  }
  func.func @transform_14(%arg0: i32) -> (i32, i32) {
    %c0_i32 = arith.constant 0 : i32
    %c0_i32_0 = arith.constant 0 : i32
    %c0_i32_1 = arith.constant 0 : i32
    return %c0_i32, %c0_i32_0 : i32, i32
  }
  func.func @transform_15(%arg0: i32) -> (i32, i32) {
    %c0_i32 = arith.constant 0 : i32
    %c0_i32_0 = arith.constant 0 : i32
    %c0_i32_1 = arith.constant 0 : i32
    return %c0_i32, %c0_i32_0 : i32, i32
  }
  func.func @transform_16(%arg0: i32) -> (i32, i32) {
    %c0_i32 = arith.constant 0 : i32
    %c0_i32_0 = arith.constant 0 : i32
    %c0_i32_1 = arith.constant 0 : i32
    return %c0_i32, %c0_i32_0 : i32, i32
  }
  func.func @transform_17(%arg0: i32) -> (i32, i32) {
    %c0_i32 = arith.constant 0 : i32
    %c0_i32_0 = arith.constant 0 : i32
    %c0_i32_1 = arith.constant 0 : i32
    return %c0_i32, %c0_i32_0 : i32, i32
  }
  func.func @transform_18(%arg0: i32) -> (i32, i32) {
    %c0_i32 = arith.constant 0 : i32
    %c0_i32_0 = arith.constant 0 : i32
    %c0_i32_1 = arith.constant 0 : i32
    return %c0_i32, %c0_i32_0 : i32, i32
  }
  func.func @transform_19(%arg0: i32) -> (i32, i32) {
    %c0_i32 = arith.constant 0 : i32
    %c0_i32_0 = arith.constant 0 : i32
    %c0_i32_1 = arith.constant 0 : i32
    return %c0_i32, %c0_i32_0 : i32, i32
  }
  func.func @transform_20(%arg0: i32) -> (i32, i32) {
    %c0_i32 = arith.constant 0 : i32
    %c0_i32_0 = arith.constant 0 : i32
    %c0_i32_1 = arith.constant 0 : i32
    return %c0_i32, %c0_i32_0 : i32, i32
  }
  func.func @transform_21(%arg0: i32) -> (i32, i32) {
    %c0_i32 = arith.constant 0 : i32
    %c0_i32_0 = arith.constant 0 : i32
    return %arg0, %c0_i32 : i32, i32
  }
}

module attributes {stable_mosaic.version = 11 : i64} {
  func.func @_nhits_stack_kernel(%arg0: i32, %arg1: memref<8x128xf32, #tpu.memory_space<vmem>>, %arg2: memref<128x384xf32, #tpu.memory_space<vmem>>, %arg3: memref<128x128xf32, #tpu.memory_space<vmem>>, %arg4: memref<1x128xf32, #tpu.memory_space<vmem>>, %arg5: memref<128x128xf32, #tpu.memory_space<vmem>>, %arg6: memref<1x128xf32, #tpu.memory_space<vmem>>, %arg7: memref<128x256xf32, #tpu.memory_space<vmem>>, %arg8: memref<1x256xf32, #tpu.memory_space<vmem>>, %arg9: memref<128x256xf32, #tpu.memory_space<vmem>>, %arg10: memref<128x128xf32, #tpu.memory_space<vmem>>, %arg11: memref<1x128xf32, #tpu.memory_space<vmem>>, %arg12: memref<128x128xf32, #tpu.memory_space<vmem>>, %arg13: memref<1x128xf32, #tpu.memory_space<vmem>>, %arg14: memref<128x256xf32, #tpu.memory_space<vmem>>, %arg15: memref<1x256xf32, #tpu.memory_space<vmem>>, %arg16: memref<128x128xf32, #tpu.memory_space<vmem>>, %arg17: memref<1x128xf32, #tpu.memory_space<vmem>>, %arg18: memref<128x128xf32, #tpu.memory_space<vmem>>, %arg19: memref<1x128xf32, #tpu.memory_space<vmem>>, %arg20: memref<128x256xf32, #tpu.memory_space<vmem>>, %arg21: memref<1x256xf32, #tpu.memory_space<vmem>>, %arg22: memref<8x128xf32, #tpu.memory_space<vmem>>) attributes {dimension_semantics = [#tpu.dimension_semantics<parallel>], iteration_bounds = array<i64: 2>, scalar_prefetch = 0 : i64, scratch_operands = 0 : i64, tpu.core_type = #tpu.core_type<tc>, window_params = [{transform_indices = @transform_0, window_bounds = array<i64: 8, 128>}, {pipeline_mode = #tpu.pipeline_mode<synchronous>, transform_indices = @transform_1, window_bounds = array<i64: 128, 384>}, {pipeline_mode = #tpu.pipeline_mode<synchronous>, transform_indices = @transform_2, window_bounds = array<i64: 128, 128>}, {pipeline_mode = #tpu.pipeline_mode<synchronous>, transform_indices = @transform_3, window_bounds = array<i64: 1, 128>}, {pipeline_mode = #tpu.pipeline_mode<synchronous>, transform_indices = @transform_4, window_bounds = array<i64: 128, 128>}, {pipeline_mode = #tpu.pipeline_mode<synchronous>, transform_indices = @transform_5, window_bounds = array<i64: 1, 128>}, {pipeline_mode = #tpu.pipeline_mode<synchronous>, transform_indices = @transform_6, window_bounds = array<i64: 128, 256>}, {pipeline_mode = #tpu.pipeline_mode<synchronous>, transform_indices = @transform_7, window_bounds = array<i64: 1, 256>}, {pipeline_mode = #tpu.pipeline_mode<synchronous>, transform_indices = @transform_8, window_bounds = array<i64: 128, 256>}, {pipeline_mode = #tpu.pipeline_mode<synchronous>, transform_indices = @transform_9, window_bounds = array<i64: 128, 128>}, {pipeline_mode = #tpu.pipeline_mode<synchronous>, transform_indices = @transform_10, window_bounds = array<i64: 1, 128>}, {pipeline_mode = #tpu.pipeline_mode<synchronous>, transform_indices = @transform_11, window_bounds = array<i64: 128, 128>}, {pipeline_mode = #tpu.pipeline_mode<synchronous>, transform_indices = @transform_12, window_bounds = array<i64: 1, 128>}, {pipeline_mode = #tpu.pipeline_mode<synchronous>, transform_indices = @transform_13, window_bounds = array<i64: 128, 256>}, {pipeline_mode = #tpu.pipeline_mode<synchronous>, transform_indices = @transform_14, window_bounds = array<i64: 1, 256>}, {pipeline_mode = #tpu.pipeline_mode<synchronous>, transform_indices = @transform_15, window_bounds = array<i64: 128, 128>}, {pipeline_mode = #tpu.pipeline_mode<synchronous>, transform_indices = @transform_16, window_bounds = array<i64: 1, 128>}, {pipeline_mode = #tpu.pipeline_mode<synchronous>, transform_indices = @transform_17, window_bounds = array<i64: 128, 128>}, {pipeline_mode = #tpu.pipeline_mode<synchronous>, transform_indices = @transform_18, window_bounds = array<i64: 1, 128>}, {pipeline_mode = #tpu.pipeline_mode<synchronous>, transform_indices = @transform_19, window_bounds = array<i64: 128, 256>}, {pipeline_mode = #tpu.pipeline_mode<synchronous>, transform_indices = @transform_20, window_bounds = array<i64: 1, 256>}, {transform_indices = @transform_21, window_bounds = array<i64: 8, 128>}]} {
    %c0 = arith.constant 0 : index
    %c0_0 = arith.constant 0 : index
    %0 = vector.load %arg1[%c0, %c0_0] : memref<8x128xf32, #tpu.memory_space<vmem>>, vector<8x128xf32>
    %1 = tpu.iota {dimensions = array<i32: 1>} : vector<1x128xi32>
    %c8_i32 = arith.constant 8 : i32
    %2 = vector.broadcast %c8_i32 : i32 to vector<1x128xi32>
    %3 = arith.cmpi sge, %1, %2 : vector<1x128xi32>
    %c16_i32 = arith.constant 16 : i32
    %4 = vector.broadcast %c16_i32 : i32 to vector<1x128xi32>
    %5 = arith.cmpi slt, %1, %4 : vector<1x128xi32>
    %6 = arith.andi %3, %5 : vector<1x128xi1>
    %cst = arith.constant 1.000000e+00 : f32
    %cst_1 = arith.constant 0.000000e+00 : f32
    %7 = vector.broadcast %cst : f32 to vector<1x128xf32>
    %8 = vector.broadcast %cst_1 : f32 to vector<1x128xf32>
    %9 = arith.select %6, %7, %8 : vector<1x128xi1>, vector<1x128xf32>
    %10 = vector.extract_strided_slice %0 {offsets = [0, 0], sizes = [8, 1], strides = [1, 1]} : vector<8x128xf32> to vector<8x1xf32>
    %11 = vector.shape_cast %10 : vector<8x1xf32> to vector<8x1xf32>
    %12 = vector.broadcast %11 : vector<8x1xf32> to vector<8x128xf32>
    %c0_2 = arith.constant 0 : index
    %c0_3 = arith.constant 0 : index
    %13 = vector.load %arg2[%c0_2, %c0_3] : memref<128x384xf32, #tpu.memory_space<vmem>>, vector<128x384xf32>
    %cst_4 = arith.constant dense<0.000000e+00> : vector<8x384xf32>
    %14 = tpu.matmul %0, %13, %cst_4 {dimension_numbers = #tpu.dot_dimension_numbers<[1], [0], [0], [1], [0, 0, 1, 1], [], []>} : vector<8x128xf32>, vector<128x384xf32>, vector<8x384xf32> -> vector<8x384xf32>
    %15 = vector.extract_strided_slice %14 {offsets = [0, 0], sizes = [8, 128], strides = [1, 1]} : vector<8x384xf32> to vector<8x128xf32>
    %16 = vector.extract_strided_slice %14 {offsets = [0, 128], sizes = [8, 128], strides = [1, 1]} : vector<8x384xf32> to vector<8x128xf32>
    %17 = arith.maximumf %15, %16 : vector<8x128xf32>
    %18 = vector.extract_strided_slice %14 {offsets = [0, 256], sizes = [8, 128], strides = [1, 1]} : vector<8x384xf32> to vector<8x128xf32>
    %19 = arith.maximumf %17, %18 : vector<8x128xf32>
    %c0_5 = arith.constant 0 : index
    %c0_6 = arith.constant 0 : index
    %20 = vector.load %arg3[%c0_5, %c0_6] : memref<128x128xf32, #tpu.memory_space<vmem>>, vector<128x128xf32>
    %cst_7 = arith.constant dense<0.000000e+00> : vector<8x128xf32>
    %21 = tpu.matmul %19, %20, %cst_7 {dimension_numbers = #tpu.dot_dimension_numbers<[1], [0], [0], [1], [0, 0, 1, 1], [], []>} : vector<8x128xf32>, vector<128x128xf32>, vector<8x128xf32> -> vector<8x128xf32>
    %c0_8 = arith.constant 0 : index
    %c0_9 = arith.constant 0 : index
    %22 = vector.load %arg4[%c0_8, %c0_9] : memref<1x128xf32, #tpu.memory_space<vmem>>, vector<1x128xf32>
    %23 = vector.broadcast %22 : vector<1x128xf32> to vector<8x128xf32>
    %24 = arith.addf %21, %23 : vector<8x128xf32>
    %cst_10 = arith.constant 0.000000e+00 : f32
    %25 = vector.broadcast %cst_10 : f32 to vector<8x128xf32>
    %26 = arith.maximumf %24, %25 : vector<8x128xf32>
    %c0_11 = arith.constant 0 : index
    %c0_12 = arith.constant 0 : index
    %27 = vector.load %arg5[%c0_11, %c0_12] : memref<128x128xf32, #tpu.memory_space<vmem>>, vector<128x128xf32>
    %cst_13 = arith.constant dense<0.000000e+00> : vector<8x128xf32>
    %28 = tpu.matmul %26, %27, %cst_13 {dimension_numbers = #tpu.dot_dimension_numbers<[1], [0], [0], [1], [0, 0, 1, 1], [], []>} : vector<8x128xf32>, vector<128x128xf32>, vector<8x128xf32> -> vector<8x128xf32>
    %c0_14 = arith.constant 0 : index
    %c0_15 = arith.constant 0 : index
    %29 = vector.load %arg6[%c0_14, %c0_15] : memref<1x128xf32, #tpu.memory_space<vmem>>, vector<1x128xf32>
    %30 = vector.broadcast %29 : vector<1x128xf32> to vector<8x128xf32>
    %31 = arith.addf %28, %30 : vector<8x128xf32>
    %cst_16 = arith.constant 0.000000e+00 : f32
    %32 = vector.broadcast %cst_16 : f32 to vector<8x128xf32>
    %33 = arith.maximumf %31, %32 : vector<8x128xf32>
    %c0_17 = arith.constant 0 : index
    %c0_18 = arith.constant 0 : index
    %34 = vector.load %arg7[%c0_17, %c0_18] : memref<128x256xf32, #tpu.memory_space<vmem>>, vector<128x256xf32>
    %cst_19 = arith.constant dense<0.000000e+00> : vector<8x256xf32>
    %35 = tpu.matmul %33, %34, %cst_19 {dimension_numbers = #tpu.dot_dimension_numbers<[1], [0], [0], [1], [0, 0, 1, 1], [], []>} : vector<8x128xf32>, vector<128x256xf32>, vector<8x256xf32> -> vector<8x256xf32>
    %c0_20 = arith.constant 0 : index
    %c0_21 = arith.constant 0 : index
    %36 = vector.load %arg8[%c0_20, %c0_21] : memref<1x256xf32, #tpu.memory_space<vmem>>, vector<1x256xf32>
    %37 = vector.broadcast %36 : vector<1x256xf32> to vector<8x256xf32>
    %38 = arith.addf %35, %37 : vector<8x256xf32>
    %39 = vector.extract_strided_slice %38 {offsets = [0, 0], sizes = [8, 128], strides = [1, 1]} : vector<8x256xf32> to vector<8x128xf32>
    %40 = vector.extract_strided_slice %38 {offsets = [0, 128], sizes = [8, 128], strides = [1, 1]} : vector<8x256xf32> to vector<8x128xf32>
    %41 = arith.subf %0, %39 : vector<8x128xf32>
    %42 = vector.broadcast %9 : vector<1x128xf32> to vector<8x128xf32>
    %43 = arith.mulf %41, %42 : vector<8x128xf32>
    %44 = arith.addf %12, %40 : vector<8x128xf32>
    %c0_22 = arith.constant 0 : index
    %c0_23 = arith.constant 0 : index
    %45 = vector.load %arg9[%c0_22, %c0_23] : memref<128x256xf32, #tpu.memory_space<vmem>>, vector<128x256xf32>
    %cst_24 = arith.constant dense<0.000000e+00> : vector<8x256xf32>
    %46 = tpu.matmul %43, %45, %cst_24 {dimension_numbers = #tpu.dot_dimension_numbers<[1], [0], [0], [1], [0, 0, 1, 1], [], []>} : vector<8x128xf32>, vector<128x256xf32>, vector<8x256xf32> -> vector<8x256xf32>
    %47 = vector.extract_strided_slice %46 {offsets = [0, 0], sizes = [8, 128], strides = [1, 1]} : vector<8x256xf32> to vector<8x128xf32>
    %48 = vector.extract_strided_slice %46 {offsets = [0, 128], sizes = [8, 128], strides = [1, 1]} : vector<8x256xf32> to vector<8x128xf32>
    %49 = arith.maximumf %47, %48 : vector<8x128xf32>
    %c0_25 = arith.constant 0 : index
    %c0_26 = arith.constant 0 : index
    %50 = vector.load %arg10[%c0_25, %c0_26] : memref<128x128xf32, #tpu.memory_space<vmem>>, vector<128x128xf32>
    %cst_27 = arith.constant dense<0.000000e+00> : vector<8x128xf32>
    %51 = tpu.matmul %49, %50, %cst_27 {dimension_numbers = #tpu.dot_dimension_numbers<[1], [0], [0], [1], [0, 0, 1, 1], [], []>} : vector<8x128xf32>, vector<128x128xf32>, vector<8x128xf32> -> vector<8x128xf32>
    %c0_28 = arith.constant 0 : index
    %c0_29 = arith.constant 0 : index
    %52 = vector.load %arg11[%c0_28, %c0_29] : memref<1x128xf32, #tpu.memory_space<vmem>>, vector<1x128xf32>
    %53 = vector.broadcast %52 : vector<1x128xf32> to vector<8x128xf32>
    %54 = arith.addf %51, %53 : vector<8x128xf32>
    %cst_30 = arith.constant 0.000000e+00 : f32
    %55 = vector.broadcast %cst_30 : f32 to vector<8x128xf32>
    %56 = arith.maximumf %54, %55 : vector<8x128xf32>
    %c0_31 = arith.constant 0 : index
    %c0_32 = arith.constant 0 : index
    %57 = vector.load %arg12[%c0_31, %c0_32] : memref<128x128xf32, #tpu.memory_space<vmem>>, vector<128x128xf32>
    %cst_33 = arith.constant dense<0.000000e+00> : vector<8x128xf32>
    %58 = tpu.matmul %56, %57, %cst_33 {dimension_numbers = #tpu.dot_dimension_numbers<[1], [0], [0], [1], [0, 0, 1, 1], [], []>} : vector<8x128xf32>, vector<128x128xf32>, vector<8x128xf32> -> vector<8x128xf32>
    %c0_34 = arith.constant 0 : index
    %c0_35 = arith.constant 0 : index
    %59 = vector.load %arg13[%c0_34, %c0_35] : memref<1x128xf32, #tpu.memory_space<vmem>>, vector<1x128xf32>
    %60 = vector.broadcast %59 : vector<1x128xf32> to vector<8x128xf32>
    %61 = arith.addf %58, %60 : vector<8x128xf32>
    %cst_36 = arith.constant 0.000000e+00 : f32
    %62 = vector.broadcast %cst_36 : f32 to vector<8x128xf32>
    %63 = arith.maximumf %61, %62 : vector<8x128xf32>
    %c0_37 = arith.constant 0 : index
    %c0_38 = arith.constant 0 : index
    %64 = vector.load %arg14[%c0_37, %c0_38] : memref<128x256xf32, #tpu.memory_space<vmem>>, vector<128x256xf32>
    %cst_39 = arith.constant dense<0.000000e+00> : vector<8x256xf32>
    %65 = tpu.matmul %63, %64, %cst_39 {dimension_numbers = #tpu.dot_dimension_numbers<[1], [0], [0], [1], [0, 0, 1, 1], [], []>} : vector<8x128xf32>, vector<128x256xf32>, vector<8x256xf32> -> vector<8x256xf32>
    %c0_40 = arith.constant 0 : index
    %c0_41 = arith.constant 0 : index
    %66 = vector.load %arg15[%c0_40, %c0_41] : memref<1x256xf32, #tpu.memory_space<vmem>>, vector<1x256xf32>
    %67 = vector.broadcast %66 : vector<1x256xf32> to vector<8x256xf32>
    %68 = arith.addf %65, %67 : vector<8x256xf32>
    %69 = vector.extract_strided_slice %68 {offsets = [0, 0], sizes = [8, 128], strides = [1, 1]} : vector<8x256xf32> to vector<8x128xf32>
    %70 = vector.extract_strided_slice %68 {offsets = [0, 128], sizes = [8, 128], strides = [1, 1]} : vector<8x256xf32> to vector<8x128xf32>
    %71 = arith.subf %43, %69 : vector<8x128xf32>
    %72 = vector.broadcast %9 : vector<1x128xf32> to vector<8x128xf32>
    %73 = arith.mulf %71, %72 : vector<8x128xf32>
    %74 = arith.addf %44, %70 : vector<8x128xf32>
    %c0_42 = arith.constant 0 : index
    %c0_43 = arith.constant 0 : index
    %75 = vector.load %arg16[%c0_42, %c0_43] : memref<128x128xf32, #tpu.memory_space<vmem>>, vector<128x128xf32>
    %cst_44 = arith.constant dense<0.000000e+00> : vector<8x128xf32>
    %76 = tpu.matmul %73, %75, %cst_44 {dimension_numbers = #tpu.dot_dimension_numbers<[1], [0], [0], [1], [0, 0, 1, 1], [], []>} : vector<8x128xf32>, vector<128x128xf32>, vector<8x128xf32> -> vector<8x128xf32>
    %c0_45 = arith.constant 0 : index
    %c0_46 = arith.constant 0 : index
    %77 = vector.load %arg17[%c0_45, %c0_46] : memref<1x128xf32, #tpu.memory_space<vmem>>, vector<1x128xf32>
    %78 = vector.broadcast %77 : vector<1x128xf32> to vector<8x128xf32>
    %79 = arith.addf %76, %78 : vector<8x128xf32>
    %cst_47 = arith.constant 0.000000e+00 : f32
    %80 = vector.broadcast %cst_47 : f32 to vector<8x128xf32>
    %81 = arith.maximumf %79, %80 : vector<8x128xf32>
    %c0_48 = arith.constant 0 : index
    %c0_49 = arith.constant 0 : index
    %82 = vector.load %arg18[%c0_48, %c0_49] : memref<128x128xf32, #tpu.memory_space<vmem>>, vector<128x128xf32>
    %cst_50 = arith.constant dense<0.000000e+00> : vector<8x128xf32>
    %83 = tpu.matmul %81, %82, %cst_50 {dimension_numbers = #tpu.dot_dimension_numbers<[1], [0], [0], [1], [0, 0, 1, 1], [], []>} : vector<8x128xf32>, vector<128x128xf32>, vector<8x128xf32> -> vector<8x128xf32>
    %c0_51 = arith.constant 0 : index
    %c0_52 = arith.constant 0 : index
    %84 = vector.load %arg19[%c0_51, %c0_52] : memref<1x128xf32, #tpu.memory_space<vmem>>, vector<1x128xf32>
    %85 = vector.broadcast %84 : vector<1x128xf32> to vector<8x128xf32>
    %86 = arith.addf %83, %85 : vector<8x128xf32>
    %cst_53 = arith.constant 0.000000e+00 : f32
    %87 = vector.broadcast %cst_53 : f32 to vector<8x128xf32>
    %88 = arith.maximumf %86, %87 : vector<8x128xf32>
    %c0_54 = arith.constant 0 : index
    %c0_55 = arith.constant 0 : index
    %89 = vector.load %arg20[%c0_54, %c0_55] : memref<128x256xf32, #tpu.memory_space<vmem>>, vector<128x256xf32>
    %cst_56 = arith.constant dense<0.000000e+00> : vector<8x256xf32>
    %90 = tpu.matmul %88, %89, %cst_56 {dimension_numbers = #tpu.dot_dimension_numbers<[1], [0], [0], [1], [0, 0, 1, 1], [], []>} : vector<8x128xf32>, vector<128x256xf32>, vector<8x256xf32> -> vector<8x256xf32>
    %c0_57 = arith.constant 0 : index
    %c0_58 = arith.constant 0 : index
    %91 = vector.load %arg21[%c0_57, %c0_58] : memref<1x256xf32, #tpu.memory_space<vmem>>, vector<1x256xf32>
    %92 = vector.broadcast %91 : vector<1x256xf32> to vector<8x256xf32>
    %93 = arith.addf %90, %92 : vector<8x256xf32>
    %94 = vector.extract_strided_slice %93 {offsets = [0, 128], sizes = [8, 128], strides = [1, 1]} : vector<8x256xf32> to vector<8x128xf32>
    %95 = arith.addf %74, %94 : vector<8x128xf32>
    %c0_59 = arith.constant 0 : index
    %c0_60 = arith.constant 0 : index
    %96 = vector.load %arg22[%c0_59, %c0_60] : memref<8x128xf32, #tpu.memory_space<vmem>>, vector<8x128xf32>
    tpu.vector_store %arg22[%c0_59, %c0_60], %95 {strides = array<i32>} : memref<8x128xf32, #tpu.memory_space<vmem>>, vector<8x128xf32>,
    return
  }
  func.func @transform_0(%arg0: i32) -> (i32, i32) {
    %c0_i32 = arith.constant 0 : i32
    %c0_i32_0 = arith.constant 0 : i32
    return %arg0, %c0_i32 : i32, i32
  }
  func.func @transform_1(%arg0: i32) -> (i32, i32) {
    %c0_i32 = arith.constant 0 : i32
    %c0_i32_0 = arith.constant 0 : i32
    %c0_i32_1 = arith.constant 0 : i32
    return %c0_i32, %c0_i32_0 : i32, i32
  }
  func.func @transform_2(%arg0: i32) -> (i32, i32) {
    %c0_i32 = arith.constant 0 : i32
    %c0_i32_0 = arith.constant 0 : i32
    %c0_i32_1 = arith.constant 0 : i32
    return %c0_i32, %c0_i32_0 : i32, i32
  }
  func.func @transform_3(%arg0: i32) -> (i32, i32) {
    %c0_i32 = arith.constant 0 : i32
    %c0_i32_0 = arith.constant 0 : i32
    %c0_i32_1 = arith.constant 0 : i32
    return %c0_i32, %c0_i32_0 : i32, i32
  }
  func.func @transform_4(%arg0: i32) -> (i32, i32) {
    %c0_i32 = arith.constant 0 : i32
    %c0_i32_0 = arith.constant 0 : i32
    %c0_i32_1 = arith.constant 0 : i32
    return %c0_i32, %c0_i32_0 : i32, i32
  }
  func.func @transform_5(%arg0: i32) -> (i32, i32) {
    %c0_i32 = arith.constant 0 : i32
    %c0_i32_0 = arith.constant 0 : i32
    %c0_i32_1 = arith.constant 0 : i32
    return %c0_i32, %c0_i32_0 : i32, i32
  }
  func.func @transform_6(%arg0: i32) -> (i32, i32) {
    %c0_i32 = arith.constant 0 : i32
    %c0_i32_0 = arith.constant 0 : i32
    %c0_i32_1 = arith.constant 0 : i32
    return %c0_i32, %c0_i32_0 : i32, i32
  }
  func.func @transform_7(%arg0: i32) -> (i32, i32) {
    %c0_i32 = arith.constant 0 : i32
    %c0_i32_0 = arith.constant 0 : i32
    %c0_i32_1 = arith.constant 0 : i32
    return %c0_i32, %c0_i32_0 : i32, i32
  }
  func.func @transform_8(%arg0: i32) -> (i32, i32) {
    %c0_i32 = arith.constant 0 : i32
    %c0_i32_0 = arith.constant 0 : i32
    %c0_i32_1 = arith.constant 0 : i32
    return %c0_i32, %c0_i32_0 : i32, i32
  }
  func.func @transform_9(%arg0: i32) -> (i32, i32) {
    %c0_i32 = arith.constant 0 : i32
    %c0_i32_0 = arith.constant 0 : i32
    %c0_i32_1 = arith.constant 0 : i32
    return %c0_i32, %c0_i32_0 : i32, i32
  }
  func.func @transform_10(%arg0: i32) -> (i32, i32) {
    %c0_i32 = arith.constant 0 : i32
    %c0_i32_0 = arith.constant 0 : i32
    %c0_i32_1 = arith.constant 0 : i32
    return %c0_i32, %c0_i32_0 : i32, i32
  }
  func.func @transform_11(%arg0: i32) -> (i32, i32) {
    %c0_i32 = arith.constant 0 : i32
    %c0_i32_0 = arith.constant 0 : i32
    %c0_i32_1 = arith.constant 0 : i32
    return %c0_i32, %c0_i32_0 : i32, i32
  }
  func.func @transform_12(%arg0: i32) -> (i32, i32) {
    %c0_i32 = arith.constant 0 : i32
    %c0_i32_0 = arith.constant 0 : i32
    %c0_i32_1 = arith.constant 0 : i32
    return %c0_i32, %c0_i32_0 : i32, i32
  }
  func.func @transform_13(%arg0: i32) -> (i32, i32) {
    %c0_i32 = arith.constant 0 : i32
    %c0_i32_0 = arith.constant 0 : i32
    %c0_i32_1 = arith.constant 0 : i32
    return %c0_i32, %c0_i32_0 : i32, i32
  }
  func.func @transform_14(%arg0: i32) -> (i32, i32) {
    %c0_i32 = arith.constant 0 : i32
    %c0_i32_0 = arith.constant 0 : i32
    %c0_i32_1 = arith.constant 0 : i32
    return %c0_i32, %c0_i32_0 : i32, i32
  }
  func.func @transform_15(%arg0: i32) -> (i32, i32) {
    %c0_i32 = arith.constant 0 : i32
    %c0_i32_0 = arith.constant 0 : i32
    %c0_i32_1 = arith.constant 0 : i32
    return %c0_i32, %c0_i32_0 : i32, i32
  }
  func.func @transform_16(%arg0: i32) -> (i32, i32) {
    %c0_i32 = arith.constant 0 : i32
    %c0_i32_0 = arith.constant 0 : i32
    %c0_i32_1 = arith.constant 0 : i32
    return %c0_i32, %c0_i32_0 : i32, i32
  }
  func.func @transform_17(%arg0: i32) -> (i32, i32) {
    %c0_i32 = arith.constant 0 : i32
    %c0_i32_0 = arith.constant 0 : i32
    %c0_i32_1 = arith.constant 0 : i32
    return %c0_i32, %c0_i32_0 : i32, i32
  }
  func.func @transform_18(%arg0: i32) -> (i32, i32) {
    %c0_i32 = arith.constant 0 : i32
    %c0_i32_0 = arith.constant 0 : i32
    %c0_i32_1 = arith.constant 0 : i32
    return %c0_i32, %c0_i32_0 : i32, i32
  }
  func.func @transform_19(%arg0: i32) -> (i32, i32) {
    %c0_i32 = arith.constant 0 : i32
    %c0_i32_0 = arith.constant 0 : i32
    %c0_i32_1 = arith.constant 0 : i32
    return %c0_i32, %c0_i32_0 : i32, i32
  }
  func.func @transform_20(%arg0: i32) -> (i32, i32) {
    %c0_i32 = arith.constant 0 : i32
    %c0_i32_0 = arith.constant 0 : i32
    %c0_i32_1 = arith.constant 0 : i32
    return %c0_i32, %c0_i32_0 : i32, i32
  }
  func.func @transform_21(%arg0: i32) -> (i32, i32) {
    %c0_i32 = arith.constant 0 : i32
    %c0_i32_0 = arith.constant 0 : i32
    return %arg0, %c0_i32 : i32, i32
  }
}

</mosaic_0001>

<llo_original>
// kernel: tpu_custom_call.1
$region0: #{tpu_custom_call.1}
  #allocation0 [shape = 'u32[]', space=smem, size = 0x4, offset = 0x4, fixed_abs, tag = 'smem constant byte address 0x4 - core index']
  #allocation1 [shape = 'u32[144,128]{1,0:T(1,128)}', space=vmem, size = 0x12000, scoped, tag = 'internal scratch']
  %s0 = inlined_call_operand.hbm [shape: f32[16,128], index: 0, kind: input, shape index: {}]
  %s1 = inlined_call_operand.hbm [shape: f32[128,384], index: 1, kind: input, shape index: {}]
  %s2 = inlined_call_operand.hbm [shape: f32[128,128], index: 2, kind: input, shape index: {}]
  %s3 = inlined_call_operand.vmem [shape: f32[1,128], index: 3, kind: input, shape index: {}]
  %s4 = inlined_call_operand.hbm [shape: f32[128,128], index: 4, kind: input, shape index: {}]
  %s5 = inlined_call_operand.vmem [shape: f32[1,128], index: 5, kind: input, shape index: {}]
  %s6 = inlined_call_operand.hbm [shape: f32[128,256], index: 6, kind: input, shape index: {}]
  %s7 = inlined_call_operand.vmem [shape: f32[1,256], index: 7, kind: input, shape index: {}]
  %s8 = inlined_call_operand.hbm [shape: f32[128,256], index: 8, kind: input, shape index: {}]
  %s9 = inlined_call_operand.hbm [shape: f32[128,128], index: 9, kind: input, shape index: {}]
  %s10 = inlined_call_operand.vmem [shape: f32[1,128], index: 10, kind: input, shape index: {}]
  %s11 = inlined_call_operand.hbm [shape: f32[128,128], index: 11, kind: input, shape index: {}]
  %s12 = inlined_call_operand.vmem [shape: f32[1,128], index: 12, kind: input, shape index: {}]
  %s13 = inlined_call_operand.hbm [shape: f32[128,256], index: 13, kind: input, shape index: {}]
  %s14 = inlined_call_operand.vmem [shape: f32[1,256], index: 14, kind: input, shape index: {}]
  %s15 = inlined_call_operand.hbm [shape: f32[128,128], index: 15, kind: input, shape index: {}]
  %s16 = inlined_call_operand.vmem [shape: f32[1,128], index: 16, kind: input, shape index: {}]
  %s17 = inlined_call_operand.hbm [shape: f32[128,128], index: 17, kind: input, shape index: {}]
  %s18 = inlined_call_operand.vmem [shape: f32[1,128], index: 18, kind: input, shape index: {}]
  %s19 = inlined_call_operand.hbm [shape: f32[128,256], index: 19, kind: input, shape index: {}]
  %s20 = inlined_call_operand.vmem [shape: f32[1,256], index: 20, kind: input, shape index: {}]
  %s21 = inlined_call_operand.hbm [shape: f32[16,128], index: 21, kind: output, shape index: {}]
  %s22 = sld [smem:[#allocation0]]
  $region165: #{tpu_custom_call.1} parent=0
    _
  %s24 = ssub.s32 1, %s22
  %s25 = scalar_select 0, %s24, %s22
  $region1: #{tpu_custom_call.1} parent=0
    #allocation2 [shape = 'u8[8192]{0}', space=vmem, size = 0x2000, scoped, tag = 'input window, operand 0']
    #allocation3 [shape = 's32[2]{0}', space=sflag, size = 0x8, scoped, tag = 'scoped memory for tpu_custom_call.1']
    #allocation4 [shape = 's32[2]{0}', space=sflag, size = 0x8, scoped, tag = 'scoped memory for tpu_custom_call.1']
    #allocation5 [shape = 'u8[196608]{0}', space=vmem, size = 0x30000, scoped, tag = 'input window, operand 1, single buffered']
    #allocation6 [shape = 's32[1]{0}', space=sflag, size = 0x4, scoped, tag = 'scoped memory for tpu_custom_call.1']
    #allocation7 [shape = 'u8[65536]{0}', space=vmem, size = 0x10000, scoped, tag = 'input window, operand 2, single buffered']
    #allocation8 [shape = 'u8[65536]{0}', space=vmem, size = 0x10000, scoped, tag = 'input window, operand 4, single buffered']
    #allocation9 [shape = 's32[1]{0}', space=sflag, size = 0x4, scoped, tag = 'scoped memory for tpu_custom_call.1']
    #allocation10 [shape = 'u8[131072]{0}', space=vmem, size = 0x20000, scoped, tag = 'input window, operand 6, single buffered']
    #allocation11 [shape = 'u8[131072]{0}', space=vmem, size = 0x20000, scoped, tag = 'input window, operand 8, single buffered']
    #allocation12 [shape = 's32[1]{0}', space=sflag, size = 0x4, scoped, tag = 'scoped memory for tpu_custom_call.1']
    #allocation13 [shape = 'u8[65536]{0}', space=vmem, size = 0x10000, scoped, tag = 'input window, operand 9, single buffered']
    #allocation14 [shape = 'u8[65536]{0}', space=vmem, size = 0x10000, scoped, tag = 'input window, operand 11, single buffered']
    #allocation15 [shape = 's32[1]{0}', space=sflag, size = 0x4, scoped, tag = 'scoped memory for tpu_custom_call.1']
    #allocation16 [shape = 'u8[131072]{0}', space=vmem, size = 0x20000, scoped, tag = 'input window, operand 13, single buffered']
    #allocation17 [shape = 'u8[65536]{0}', space=vmem, size = 0x10000, scoped, tag = 'input window, operand 15, single buffered']
    #allocation18 [shape = 's32[1]{0}', space=sflag, size = 0x4, scoped, tag = 'scoped memory for tpu_custom_call.1']
    #allocation19 [shape = 'u8[65536]{0}', space=vmem, size = 0x10000, scoped, tag = 'input window, operand 17, single buffered']
    #allocation20 [shape = 'u8[131072]{0}', space=vmem, size = 0x20000, scoped, tag = 'input window, operand 19, single buffered']
    #allocation21 [shape = 's32[1]{0}', space=sflag, size = 0x4, scoped, tag = 'scoped memory for tpu_custom_call.1']
    #allocation22 [shape = 'u8[8192]{0}', space=vmem, size = 0x2000, scoped, tag = 'output window, operand 0']
    %26 = vsyncpa [#allocation3], 0
    %s27 = scalar_lea.sflag [#allocation3], 1
    %28 = vsyncpa %s27, 0
    %29 = vsyncpa [#allocation6], 0
    %30 = vsyncpa [#allocation9], 0
    %31 = vsyncpa [#allocation12], 0
    %32 = vsyncpa [#allocation15], 0
    %33 = vsyncpa [#allocation18], 0
    %34 = vsyncpa [#allocation21], 0
    %35 = vsyncpa [#allocation4], 0
    %s36 = scalar_lea.sflag [#allocation4], 1
    %37 = vsyncpa %s36, 0
    loop: start=0, step=1, limit=4
    $region2: #{tpu_custom_call.1} parent=1 // loop_pre_header
      _
    $region3: #{tpu_custom_call.1} parent=1 // loop_header
      %s39 = sphi 0, %s43
      %p40 = scmp.ge.s32.totalorder %s39, 4
      %s49 = sphi 0, %s51
      %s52 = sphi 0, %s49
      %s53 = sphi 0, %s52
      %s69 = sphi 0, %s53
      %s73 = sphi 0, %s73
      %s75 = sphi 0, %s73
      %s76 = sphi 0, %s75
      %s90 = sphi 0, %s76
      %s94 = sphi 0, %s94
      %s96 = sphi 0, %s94
      %s97 = sphi 0, %s96
      %s111 = sphi 0, %s97
      %s115 = sphi 0, %s115
      %s117 = sphi 0, %s115
      %s118 = sphi 0, %s117
      %s132 = sphi 0, %s118
      %s136 = sphi 0, %s136
      %s138 = sphi 0, %s136
      %s139 = sphi 0, %s138
      %s153 = sphi 0, %s139
      %s157 = sphi 0, %s157
      %s159 = sphi 0, %s157
      %s160 = sphi 0, %s159
      %s174 = sphi 0, %s160
      %s178 = sphi 0, %s178
      %s180 = sphi 0, %s178
      %s181 = sphi 0, %s180
      %s195 = sphi 0, %s181
      %s199 = sphi 0, %s199
      %s201 = sphi 0, %s199
      %s202 = sphi 0, %s201
      %s216 = sphi 0, %s202
      %s220 = sphi 0, %s220
      %s222 = sphi 0, %s220
      %s223 = sphi 0, %s222
      %s237 = sphi 0, %s223
      %s241 = sphi 0, %s241
      %s243 = sphi 0, %s241
      %s244 = sphi 0, %s243
      %s258 = sphi 0, %s244
      %s262 = sphi 0, %s262
      %s264 = sphi 0, %s262
      %s265 = sphi 0, %s264
      %s279 = sphi 0, %s265
      %s283 = sphi 0, %s283
      %s285 = sphi 0, %s283
      %s286 = sphi 0, %s285
      %s300 = sphi 0, %s286
      %s304 = sphi 0, %s304
      %s306 = sphi 0, %s304
      %s307 = sphi 0, %s306
      %s321 = sphi 0, %s307
      %s325 = sphi 0, %s325
      %s327 = sphi 0, %s325
      %s328 = sphi 0, %s327
      %s342 = sphi 0, %s328
      %s346 = sphi 0, %s346
      %s348 = sphi 0, %s346
      %s349 = sphi 0, %s348
      %s363 = sphi 0, %s349
      %s367 = sphi 0, %s367
      %s369 = sphi 0, %s367
      %s370 = sphi 0, %s369
      %s384 = sphi 0, %s370
      %s388 = sphi 0, %s388
      %s390 = sphi 0, %s388
      %s391 = sphi 0, %s390
      %s405 = sphi 0, %s391
      %s409 = sphi 0, %s409
      %s411 = sphi 0, %s409
      %s412 = sphi 0, %s411
      %s426 = sphi 0, %s412
      %s430 = sphi 0, %s430
      %s432 = sphi 0, %s430
      %s433 = sphi 0, %s432
      %s447 = sphi 0, %s433
      %s451 = sphi 0, %s451
      %s453 = sphi 0, %s451
      %s454 = sphi 0, %s453
      %s468 = sphi 0, %s454
      %s472 = sphi 0, %s472
      %s474 = sphi 0, %s472
      %s475 = sphi 0, %s474
      %s489 = sphi 0, %s475
      %s495 = sphi 0, %s497
      %s498 = sphi 0, %s495
      %s499 = sphi 0, %s498
      %s515 = sphi 0, %s499
    $region4: #{tpu_custom_call.1} parent=1 // loop_header_branch
      %42 = sbr.rel (%p40) target = $region8
    $region5: #{tpu_custom_call.1} parent=1 // loop_body
      %s44 = ssub.s32 %s39, 1
      %s45 = ssub.s32 %s39, 2
      %s46 = sadd.s32 %s39, 1
      %s47 = ssub.s32 %s39, %s46
      %p48 = scmp.eq.s32.totalorder %s47, 0
      %s50 = sadd.s32 %s49, 1
      %s51 = scalar_select %p48, %s49, %s50
      %p54 = pneg %p48
      %p55 = scmp.eq.s32.totalorder %s39, 1
      %p56 = por %p54, %p55
      %p57 = scmp.ne.s32.totalorder %s49, %s52
      %p58 = scmp.eq.s32.totalorder %s39, 0
      %p59 = por %p57, %p58
      %p60 = scmp.ne.s32.totalorder %s49, %s52
      %p61 = scmp.eq.s32.totalorder %s44, 1
      %p62 = por %p60, %p61
      %p63 = scmp.ne.s32.totalorder %s52, %s53
      %p64 = scmp.eq.s32.totalorder %s44, 0
      %p65 = por %p63, %p64
      %p66 = scmp.ne.s32.totalorder %s52, %s53
      %p67 = scmp.eq.s32.totalorder %s45, 1
      %p68 = por %p66, %p67
      %p70 = scmp.ne.s32.totalorder %s53, %s69
      %p71 = scmp.eq.s32.totalorder %s45, 0
      %p72 = por %p70, %p71
      %s74 = sadd.s32 %s73, 1
      %p77 = scmp.eq.s32.totalorder %s39, 1
      %p78 = scmp.ne.s32.totalorder %s73, %s75
      %p79 = scmp.eq.s32.totalorder %s39, 0
      %p80 = por %p78, %p79
      %p81 = scmp.ne.s32.totalorder %s73, %s75
      %p82 = scmp.eq.s32.totalorder %s44, 1
      %p83 = por %p81, %p82
      %p84 = scmp.ne.s32.totalorder %s75, %s76
      %p85 = scmp.eq.s32.totalorder %s44, 0
      %p86 = por %p84, %p85
      %p87 = scmp.ne.s32.totalorder %s75, %s76
      %p88 = scmp.eq.s32.totalorder %s45, 1
      %p89 = por %p87, %p88
      %p91 = scmp.ne.s32.totalorder %s76, %s90
      %p92 = scmp.eq.s32.totalorder %s45, 0
      %p93 = por %p91, %p92
      %s95 = sadd.s32 %s94, 1
      %p98 = scmp.eq.s32.totalorder %s39, 1
      %p99 = scmp.ne.s32.totalorder %s94, %s96
      %p100 = scmp.eq.s32.totalorder %s39, 0
      %p101 = por %p99, %p100
      %p102 = scmp.ne.s32.totalorder %s94, %s96
      %p103 = scmp.eq.s32.totalorder %s44, 1
      %p104 = por %p102, %p103
      %p105 = scmp.ne.s32.totalorder %s96, %s97
      %p106 = scmp.eq.s32.totalorder %s44, 0
      %p107 = por %p105, %p106
      %p108 = scmp.ne.s32.totalorder %s96, %s97
      %p109 = scmp.eq.s32.totalorder %s45, 1
      %p110 = por %p108, %p109
      %p112 = scmp.ne.s32.totalorder %s97, %s111
      %p113 = scmp.eq.s32.totalorder %s45, 0
      %p114 = por %p112, %p113
      %s116 = sadd.s32 %s115, 1
      %p119 = scmp.eq.s32.totalorder %s39, 1
      %p120 = scmp.ne.s32.totalorder %s115, %s117
      %p121 = scmp.eq.s32.totalorder %s39, 0
      %p122 = por %p120, %p121
      %p123 = scmp.ne.s32.totalorder %s115, %s117
      %p124 = scmp.eq.s32.totalorder %s44, 1
      %p125 = por %p123, %p124
      %p126 = scmp.ne.s32.totalorder %s117, %s118
      %p127 = scmp.eq.s32.totalorder %s44, 0
      %p128 = por %p126, %p127
      %p129 = scmp.ne.s32.totalorder %s117, %s118
      %p130 = scmp.eq.s32.totalorder %s45, 1
      %p131 = por %p129, %p130
      %p133 = scmp.ne.s32.totalorder %s118, %s132
      %p134 = scmp.eq.s32.totalorder %s45, 0
      %p135 = por %p133, %p134
      %s137 = sadd.s32 %s136, 1
      %p140 = scmp.eq.s32.totalorder %s39, 1
      %p141 = scmp.ne.s32.totalorder %s136, %s138
      %p142 = scmp.eq.s32.totalorder %s39, 0
      %p143 = por %p141, %p142
      %p144 = scmp.ne.s32.totalorder %s136, %s138
      %p145 = scmp.eq.s32.totalorder %s44, 1
      %p146 = por %p144, %p145
      %p147 = scmp.ne.s32.totalorder %s138, %s139
      %p148 = scmp.eq.s32.totalorder %s44, 0
      %p149 = por %p147, %p148
      %p150 = scmp.ne.s32.totalorder %s138, %s139
      %p151 = scmp.eq.s32.totalorder %s45, 1
      %p152 = por %p150, %p151
      %p154 = scmp.ne.s32.totalorder %s139, %s153
      %p155 = scmp.eq.s32.totalorder %s45, 0
      %p156 = por %p154, %p155
      %s158 = sadd.s32 %s157, 1
      %p161 = scmp.eq.s32.totalorder %s39, 1
      %p162 = scmp.ne.s32.totalorder %s157, %s159
      %p163 = scmp.eq.s32.totalorder %s39, 0
      %p164 = por %p162, %p163
      %p165 = scmp.ne.s32.totalorder %s157, %s159
      %p166 = scmp.eq.s32.totalorder %s44, 1
      %p167 = por %p165, %p166
      %p168 = scmp.ne.s32.totalorder %s159, %s160
      %p169 = scmp.eq.s32.totalorder %s44, 0
      %p170 = por %p168, %p169
      %p171 = scmp.ne.s32.totalorder %s159, %s160
      %p172 = scmp.eq.s32.totalorder %s45, 1
      %p173 = por %p171, %p172
      %p175 = scmp.ne.s32.totalorder %s160, %s174
      %p176 = scmp.eq.s32.totalorder %s45, 0
      %p177 = por %p175, %p176
      %s179 = sadd.s32 %s178, 1
      %p182 = scmp.eq.s32.totalorder %s39, 1
      %p183 = scmp.ne.s32.totalorder %s178, %s180
      %p184 = scmp.eq.s32.totalorder %s39, 0
      %p185 = por %p183, %p184
      %p186 = scmp.ne.s32.totalorder %s178, %s180
      %p187 = scmp.eq.s32.totalorder %s44, 1
      %p188 = por %p186, %p187
      %p189 = scmp.ne.s32.totalorder %s180, %s181
      %p190 = scmp.eq.s32.totalorder %s44, 0
      %p191 = por %p189, %p190
      %p192 = scmp.ne.s32.totalorder %s180, %s181
      %p193 = scmp.eq.s32.totalorder %s45, 1
      %p194 = por %p192, %p193
      %p196 = scmp.ne.s32.totalorder %s181, %s195
      %p197 = scmp.eq.s32.totalorder %s45, 0
      %p198 = por %p196, %p197
      %s200 = sadd.s32 %s199, 1
      %p203 = scmp.eq.s32.totalorder %s39, 1
      %p204 = scmp.ne.s32.totalorder %s199, %s201
      %p205 = scmp.eq.s32.totalorder %s39, 0
      %p206 = por %p204, %p205
      %p207 = scmp.ne.s32.totalorder %s199, %s201
      %p208 = scmp.eq.s32.totalorder %s44, 1
      %p209 = por %p207, %p208
      %p210 = scmp.ne.s32.totalorder %s201, %s202
      %p211 = scmp.eq.s32.totalorder %s44, 0
      %p212 = por %p210, %p211
      %p213 = scmp.ne.s32.totalorder %s201, %s202
      %p214 = scmp.eq.s32.totalorder %s45, 1
      %p215 = por %p213, %p214
      %p217 = scmp.ne.s32.totalorder %s202, %s216
      %p218 = scmp.eq.s32.totalorder %s45, 0
      %p219 = por %p217, %p218
      %s221 = sadd.s32 %s220, 1
      %p224 = scmp.eq.s32.totalorder %s39, 1
      %p225 = scmp.ne.s32.totalorder %s220, %s222
      %p226 = scmp.eq.s32.totalorder %s39, 0
      %p227 = por %p225, %p226
      %p228 = scmp.ne.s32.totalorder %s220, %s222
      %p229 = scmp.eq.s32.totalorder %s44, 1
      %p230 = por %p228, %p229
      %p231 = scmp.ne.s32.totalorder %s222, %s223
      %p232 = scmp.eq.s32.totalorder %s44, 0
      %p233 = por %p231, %p232
      %p234 = scmp.ne.s32.totalorder %s222, %s223
      %p235 = scmp.eq.s32.totalorder %s45, 1
      %p236 = por %p234, %p235
      %p238 = scmp.ne.s32.totalorder %s223, %s237
      %p239 = scmp.eq.s32.totalorder %s45, 0
      %p240 = por %p238, %p239
      %s242 = sadd.s32 %s241, 1
      %p245 = scmp.eq.s32.totalorder %s39, 1
      %p246 = scmp.ne.s32.totalorder %s241, %s243
      %p247 = scmp.eq.s32.totalorder %s39, 0
      %p248 = por %p246, %p247
      %p249 = scmp.ne.s32.totalorder %s241, %s243
      %p250 = scmp.eq.s32.totalorder %s44, 1
      %p251 = por %p249, %p250
      %p252 = scmp.ne.s32.totalorder %s243, %s244
      %p253 = scmp.eq.s32.totalorder %s44, 0
      %p254 = por %p252, %p253
      %p255 = scmp.ne.s32.totalorder %s243, %s244
      %p256 = scmp.eq.s32.totalorder %s45, 1
      %p257 = por %p255, %p256
      %p259 = scmp.ne.s32.totalorder %s244, %s258
      %p260 = scmp.eq.s32.totalorder %s45, 0
      %p261 = por %p259, %p260
      %s263 = sadd.s32 %s262, 1
      %p266 = scmp.eq.s32.totalorder %s39, 1
      %p267 = scmp.ne.s32.totalorder %s262, %s264
      %p268 = scmp.eq.s32.totalorder %s39, 0
      %p269 = por %p267, %p268
      %p270 = scmp.ne.s32.totalorder %s262, %s264
      %p271 = scmp.eq.s32.totalorder %s44, 1
      %p272 = por %p270, %p271
      %p273 = scmp.ne.s32.totalorder %s264, %s265
      %p274 = scmp.eq.s32.totalorder %s44, 0
      %p275 = por %p273, %p274
      %p276 = scmp.ne.s32.totalorder %s264, %s265
      %p277 = scmp.eq.s32.totalorder %s45, 1
      %p278 = por %p276, %p277
      %p280 = scmp.ne.s32.totalorder %s265, %s279
      %p281 = scmp.eq.s32.totalorder %s45, 0
      %p282 = por %p280, %p281
      %s284 = sadd.s32 %s283, 1
      %p287 = scmp.eq.s32.totalorder %s39, 1
      %p288 = scmp.ne.s32.totalorder %s283, %s285
      %p289 = scmp.eq.s32.totalorder %s39, 0
      %p290 = por %p288, %p289
      %p291 = scmp.ne.s32.totalorder %s283, %s285
      %p292 = scmp.eq.s32.totalorder %s44, 1
      %p293 = por %p291, %p292
      %p294 = scmp.ne.s32.totalorder %s285, %s286
      %p295 = scmp.eq.s32.totalorder %s44, 0
      %p296 = por %p294, %p295
      %p297 = scmp.ne.s32.totalorder %s285, %s286
      %p298 = scmp.eq.s32.totalorder %s45, 1
      %p299 = por %p297, %p298
      %p301 = scmp.ne.s32.totalorder %s286, %s300
      %p302 = scmp.eq.s32.totalorder %s45, 0
      %p303 = por %p301, %p302
      %s305 = sadd.s32 %s304, 1
      %p308 = scmp.eq.s32.totalorder %s39, 1
      %p309 = scmp.ne.s32.totalorder %s304, %s306
      %p310 = scmp.eq.s32.totalorder %s39, 0
      %p311 = por %p309, %p310
      %p312 = scmp.ne.s32.totalorder %s304, %s306
      %p313 = scmp.eq.s32.totalorder %s44, 1
      %p314 = por %p312, %p313
      %p315 = scmp.ne.s32.totalorder %s306, %s307
      %p316 = scmp.eq.s32.totalorder %s44, 0
      %p317 = por %p315, %p316
      %p318 = scmp.ne.s32.totalorder %s306, %s307
      %p319 = scmp.eq.s32.totalorder %s45, 1
      %p320 = por %p318, %p319
      %p322 = scmp.ne.s32.totalorder %s307, %s321
      %p323 = scmp.eq.s32.totalorder %s45, 0
      %p324 = por %p322, %p323
      %s326 = sadd.s32 %s325, 1
      %p329 = scmp.eq.s32.totalorder %s39, 1
      %p330 = scmp.ne.s32.totalorder %s325, %s327
      %p331 = scmp.eq.s32.totalorder %s39, 0
      %p332 = por %p330, %p331
      %p333 = scmp.ne.s32.totalorder %s325, %s327
      %p334 = scmp.eq.s32.totalorder %s44, 1
      %p335 = por %p333, %p334
      %p336 = scmp.ne.s32.totalorder %s327, %s328
      %p337 = scmp.eq.s32.totalorder %s44, 0
      %p338 = por %p336, %p337
      %p339 = scmp.ne.s32.totalorder %s327, %s328
      %p340 = scmp.eq.s32.totalorder %s45, 1
      %p341 = por %p339, %p340
      %p343 = scmp.ne.s32.totalorder %s328, %s342
      %p344 = scmp.eq.s32.totalorder %s45, 0
      %p345 = por %p343, %p344
      %s347 = sadd.s32 %s346, 1
      %p350 = scmp.eq.s32.totalorder %s39, 1
      %p351 = scmp.ne.s32.totalorder %s346, %s348
      %p352 = scmp.eq.s32.totalorder %s39, 0
      %p353 = por %p351, %p352
      %p354 = scmp.ne.s32.totalorder %s346, %s348
      %p355 = scmp.eq.s32.totalorder %s44, 1
      %p356 = por %p354, %p355
      %p357 = scmp.ne.s32.totalorder %s348, %s349
      %p358 = scmp.eq.s32.totalorder %s44, 0
      %p359 = por %p357, %p358
      %p360 = scmp.ne.s32.totalorder %s348, %s349
      %p361 = scmp.eq.s32.totalorder %s45, 1
      %p362 = por %p360, %p361
      %p364 = scmp.ne.s32.totalorder %s349, %s363
      %p365 = scmp.eq.s32.totalorder %s45, 0
      %p366 = por %p364, %p365
      %s368 = sadd.s32 %s367, 1
      %p371 = scmp.eq.s32.totalorder %s39, 1
      %p372 = scmp.ne.s32.totalorder %s367, %s369
      %p373 = scmp.eq.s32.totalorder %s39, 0
      %p374 = por %p372, %p373
      %p375 = scmp.ne.s32.totalorder %s367, %s369
      %p376 = scmp.eq.s32.totalorder %s44, 1
      %p377 = por %p375, %p376
      %p378 = scmp.ne.s32.totalorder %s369, %s370
      %p379 = scmp.eq.s32.totalorder %s44, 0
      %p380 = por %p378, %p379
      %p381 = scmp.ne.s32.totalorder %s369, %s370
      %p382 = scmp.eq.s32.totalorder %s45, 1
      %p383 = por %p381, %p382
      %p385 = scmp.ne.s32.totalorder %s370, %s384
      %p386 = scmp.eq.s32.totalorder %s45, 0
      %p387 = por %p385, %p386
      %s389 = sadd.s32 %s388, 1
      %p392 = scmp.eq.s32.totalorder %s39, 1
      %p393 = scmp.ne.s32.totalorder %s388, %s390
      %p394 = scmp.eq.s32.totalorder %s39, 0
      %p395 = por %p393, %p394
      %p396 = scmp.ne.s32.totalorder %s388, %s390
      %p397 = scmp.eq.s32.totalorder %s44, 1
      %p398 = por %p396, %p397
      %p399 = scmp.ne.s32.totalorder %s390, %s391
      %p400 = scmp.eq.s32.totalorder %s44, 0
      %p401 = por %p399, %p400
      %p402 = scmp.ne.s32.totalorder %s390, %s391
      %p403 = scmp.eq.s32.totalorder %s45, 1
      %p404 = por %p402, %p403
      %p406 = scmp.ne.s32.totalorder %s391, %s405
      %p407 = scmp.eq.s32.totalorder %s45, 0
      %p408 = por %p406, %p407
      %s410 = sadd.s32 %s409, 1
      %p413 = scmp.eq.s32.totalorder %s39, 1
      %p414 = scmp.ne.s32.totalorder %s409, %s411
      %p415 = scmp.eq.s32.totalorder %s39, 0
      %p416 = por %p414, %p415
      %p417 = scmp.ne.s32.totalorder %s409, %s411
      %p418 = scmp.eq.s32.totalorder %s44, 1
      %p419 = por %p417, %p418
      %p420 = scmp.ne.s32.totalorder %s411, %s412
      %p421 = scmp.eq.s32.totalorder %s44, 0
      %p422 = por %p420, %p421
      %p423 = scmp.ne.s32.totalorder %s411, %s412
      %p424 = scmp.eq.s32.totalorder %s45, 1
      %p425 = por %p423, %p424
      %p427 = scmp.ne.s32.totalorder %s412, %s426
      %p428 = scmp.eq.s32.totalorder %s45, 0
      %p429 = por %p427, %p428
      %s431 = sadd.s32 %s430, 1
      %p434 = scmp.eq.s32.totalorder %s39, 1
      %p435 = scmp.ne.s32.totalorder %s430, %s432
      %p436 = scmp.eq.s32.totalorder %s39, 0
      %p437 = por %p435, %p436
      %p438 = scmp.ne.s32.totalorder %s430, %s432
      %p439 = scmp.eq.s32.totalorder %s44, 1
      %p440 = por %p438, %p439
      %p441 = scmp.ne.s32.totalorder %s432, %s433
      %p442 = scmp.eq.s32.totalorder %s44, 0
      %p443 = por %p441, %p442
      %p444 = scmp.ne.s32.totalorder %s432, %s433
      %p445 = scmp.eq.s32.totalorder %s45, 1
      %p446 = por %p444, %p445
      %p448 = scmp.ne.s32.totalorder %s433, %s447
      %p449 = scmp.eq.s32.totalorder %s45, 0
      %p450 = por %p448, %p449
      %s452 = sadd.s32 %s451, 1
      %p455 = scmp.eq.s32.totalorder %s39, 1
      %p456 = scmp.ne.s32.totalorder %s451, %s453
      %p457 = scmp.eq.s32.totalorder %s39, 0
      %p458 = por %p456, %p457
      %p459 = scmp.ne.s32.totalorder %s451, %s453
      %p460 = scmp.eq.s32.totalorder %s44, 1
      %p461 = por %p459, %p460
      %p462 = scmp.ne.s32.totalorder %s453, %s454
      %p463 = scmp.eq.s32.totalorder %s44, 0
      %p464 = por %p462, %p463
      %p465 = scmp.ne.s32.totalorder %s453, %s454
      %p466 = scmp.eq.s32.totalorder %s45, 1
      %p467 = por %p465, %p466
      %p469 = scmp.ne.s32.totalorder %s454, %s468
      %p470 = scmp.eq.s32.totalorder %s45, 0
      %p471 = por %p469, %p470
      %s473 = sadd.s32 %s472, 1
      %p476 = scmp.eq.s32.totalorder %s39, 1
      %p477 = scmp.ne.s32.totalorder %s472, %s474
      %p478 = scmp.eq.s32.totalorder %s39, 0
      %p479 = por %p477, %p478
      %p480 = scmp.ne.s32.totalorder %s472, %s474
      %p481 = scmp.eq.s32.totalorder %s44, 1
      %p482 = por %p480, %p481
      %p483 = scmp.ne.s32.totalorder %s474, %s475
      %p484 = scmp.eq.s32.totalorder %s44, 0
      %p485 = por %p483, %p484
      %p486 = scmp.ne.s32.totalorder %s474, %s475
      %p487 = scmp.eq.s32.totalorder %s45, 1
      %p488 = por %p486, %p487
      %p490 = scmp.ne.s32.totalorder %s475, %s489
      %p491 = scmp.eq.s32.totalorder %s45, 0
      %p492 = por %p490, %p491
      %s493 = ssub.s32 %s39, %s46
      %p494 = scmp.eq.s32.totalorder %s493, 0
      %s496 = sadd.s32 %s495, 1
      %s497 = scalar_select %p494, %s495, %s496
      %p500 = pneg %p494
      %p501 = scmp.eq.s32.totalorder %s39, 1
      %p502 = por %p500, %p501
      %p503 = scmp.ne.s32.totalorder %s495, %s498
      %p504 = scmp.eq.s32.totalorder %s39, 0
      %p505 = por %p503, %p504
      %p506 = scmp.ne.s32.totalorder %s495, %s498
      %p507 = scmp.eq.s32.totalorder %s44, 1
      %p508 = por %p506, %p507
      %p509 = scmp.ne.s32.totalorder %s498, %s499
      %p510 = scmp.eq.s32.totalorder %s44, 0
      %p511 = por %p509, %p510
      %p512 = scmp.ne.s32.totalorder %s498, %s499
      %p513 = scmp.eq.s32.totalorder %s45, 1
      %p514 = por %p512, %p513
      %p516 = scmp.ne.s32.totalorder %s499, %s515
      %p517 = scmp.eq.s32.totalorder %s45, 0
      %p518 = por %p516, %p517
      %p519 = scmp.le.s32.totalorder 1, %s39
      %p520 = scmp.lt.s32.totalorder %s39, 3
      %p521 = pnand %p519, %p520
      %p522 = pneg %p521
      // Predicated region
      $region9: #{tpu_custom_call.1} parent=5 // pred_check
        _
      $region10: #{tpu_custom_call.1} parent=5 // pred_check_branch
        %524 = sbr.rel (%p521) target = $region12
      $region11: #{tpu_custom_call.1} parent=5 // pred_region
        %s525 = ssub.s32 %s39, 1
        // Predicated region
        $region13: #{tpu_custom_call.1} parent=11 // pred_check
          %p526 = pneg %p86
        $region14: #{tpu_custom_call.1} parent=11 // pred_check_branch
          %528 = sbr.rel (%p526) target = $region16
        $region15: #{tpu_custom_call.1} parent=11 // pred_region
          %s530 = ssub.s32 6144, 6144
          %531 = vsyncadd [#allocation6], %s530
          %s532 = sshll.u32 [#allocation5], 4
          %s533 = int_to_ptr.vmem [resolvable:$true] %s532
          %538 = dma.hbm_to_vmem [thread:$0]  %s1, 6144, %s533, [#allocation6], 384, 384, 24
        $region16: #{tpu_custom_call.1} parent=11 // pred_fallthru
          _
        // Predicated region
        $region17: #{tpu_custom_call.1} parent=11 // pred_check
          %p539 = pneg %p107
        $region18: #{tpu_custom_call.1} parent=11 // pred_check_branch
          %541 = sbr.rel (%p539) target = $region20
        $region19: #{tpu_custom_call.1} parent=11 // pred_region
          %s543 = ssub.s32 2048, 2048
          %544 = vsyncadd [#allocation6], %s543
          %s545 = sshll.u32 [#allocation7], 4
          %s546 = int_to_ptr.vmem [resolvable:$true] %s545
          %551 = dma.hbm_to_vmem [thread:$0]  %s2, 2048, %s546, [#allocation6], 128, 128, 8
        $region20: #{tpu_custom_call.1} parent=11 // pred_fallthru
          _
        // Predicated region
        $region21: #{tpu_custom_call.1} parent=11 // pred_check
          %p552 = pneg %p128
        $region22: #{tpu_custom_call.1} parent=11 // pred_check_branch
          %554 = sbr.rel (%p552) target = $region24
        $region23: #{tpu_custom_call.1} parent=11 // pred_region
          _
        $region24: #{tpu_custom_call.1} parent=11 // pred_fallthru
          _
        // Predicated region
        $region25: #{tpu_custom_call.1} parent=11 // pred_check
          %p555 = pneg %p149
        $region26: #{tpu_custom_call.1} parent=11 // pred_check_branch
          %557 = sbr.rel (%p555) target = $region28
        $region27: #{tpu_custom_call.1} parent=11 // pred_region
          %s559 = ssub.s32 2048, 2048
          %560 = vsyncadd [#allocation9], %s559
          %s561 = sshll.u32 [#allocation8], 4
          %s562 = int_to_ptr.vmem [resolvable:$true] %s561
          %567 = dma.hbm_to_vmem [thread:$0]  %s4, 2048, %s562, [#allocation9], 128, 128, 8
        $region28: #{tpu_custom_call.1} parent=11 // pred_fallthru
          _
        // Predicated region
        $region29: #{tpu_custom_call.1} parent=11 // pred_check
          %p568 = pneg %p170
        $region30: #{tpu_custom_call.1} parent=11 // pred_check_branch
          %570 = sbr.rel (%p568) target = $region32
        $region31: #{tpu_custom_call.1} parent=11 // pred_region
          _
        $region32: #{tpu_custom_call.1} parent=11 // pred_fallthru
          _
        // Predicated region
        $region33: #{tpu_custom_call.1} parent=11 // pred_check
          %p571 = pneg %p191
        $region34: #{tpu_custom_call.1} parent=11 // pred_check_branch
          %573 = sbr.rel (%p571) target = $region36
        $region35: #{tpu_custom_call.1} parent=11 // pred_region
          %s575 = ssub.s32 4096, 4096
          %576 = vsyncadd [#allocation9], %s575
          %s577 = sshll.u32 [#allocation10], 4
          %s578 = int_to_ptr.vmem [resolvable:$true] %s577
          %583 = dma.hbm_to_vmem [thread:$0]  %s6, 4096, %s578, [#allocation9], 256, 256, 16
        $region36: #{tpu_custom_call.1} parent=11 // pred_fallthru
          _
        // Predicated region
        $region37: #{tpu_custom_call.1} parent=11 // pred_check
          %p584 = pneg %p212
        $region38: #{tpu_custom_call.1} parent=11 // pred_check_branch
          %586 = sbr.rel (%p584) target = $region40
        $region39: #{tpu_custom_call.1} parent=11 // pred_region
          _
        $region40: #{tpu_custom_call.1} parent=11 // pred_fallthru
          _
        // Predicated region
        $region41: #{tpu_custom_call.1} parent=11 // pred_check
          %p587 = pneg %p233
        $region42: #{tpu_custom_call.1} parent=11 // pred_check_branch
          %589 = sbr.rel (%p587) target = $region44
        $region43: #{tpu_custom_call.1} parent=11 // pred_region
          %s591 = ssub.s32 4096, 4096
          %592 = vsyncadd [#allocation12], %s591
          %s593 = sshll.u32 [#allocation11], 4
          %s594 = int_to_ptr.vmem [resolvable:$true] %s593
          %599 = dma.hbm_to_vmem [thread:$0]  %s8, 4096, %s594, [#allocation12], 256, 256, 16
        $region44: #{tpu_custom_call.1} parent=11 // pred_fallthru
          _
        // Predicated region
        $region45: #{tpu_custom_call.1} parent=11 // pred_check
          %p600 = pneg %p254
        $region46: #{tpu_custom_call.1} parent=11 // pred_check_branch
          %602 = sbr.rel (%p600) target = $region48
        $region47: #{tpu_custom_call.1} parent=11 // pred_region
          %s604 = ssub.s32 2048, 2048
          %605 = vsyncadd [#allocation12], %s604
          %s606 = sshll.u32 [#allocation13], 4
          %s607 = int_to_ptr.vmem [resolvable:$true] %s606
          %612 = dma.hbm_to_vmem [thread:$0]  %s9, 2048, %s607, [#allocation12], 128, 128, 8
        $region48: #{tpu_custom_call.1} parent=11 // pred_fallthru
          _
        // Predicated region
        $region49: #{tpu_custom_call.1} parent=11 // pred_check
          %p613 = pneg %p275
        $region50: #{tpu_custom_call.1} parent=11 // pred_check_branch
          %615 = sbr.rel (%p613) target = $region52
        $region51: #{tpu_custom_call.1} parent=11 // pred_region
          _
        $region52: #{tpu_custom_call.1} parent=11 // pred_fallthru
          _
        // Predicated region
        $region53: #{tpu_custom_call.1} parent=11 // pred_check
          %p616 = pneg %p296
        $region54: #{tpu_custom_call.1} parent=11 // pred_check_branch
          %618 = sbr.rel (%p616) target = $region56
        $region55: #{tpu_custom_call.1} parent=11 // pred_region
          %s620 = ssub.s32 2048, 2048
          %621 = vsyncadd [#allocation15], %s620
          %s622 = sshll.u32 [#allocation14], 4
          %s623 = int_to_ptr.vmem [resolvable:$true] %s622
          %628 = dma.hbm_to_vmem [thread:$0]  %s11, 2048, %s623, [#allocation15], 128, 128, 8
        $region56: #{tpu_custom_call.1} parent=11 // pred_fallthru
          _
        // Predicated region
        $region57: #{tpu_custom_call.1} parent=11 // pred_check
          %p629 = pneg %p317
        $region58: #{tpu_custom_call.1} parent=11 // pred_check_branch
          %631 = sbr.rel (%p629) target = $region60
        $region59: #{tpu_custom_call.1} parent=11 // pred_region
          _
        $region60: #{tpu_custom_call.1} parent=11 // pred_fallthru
          _
        // Predicated region
        $region61: #{tpu_custom_call.1} parent=11 // pred_check
          %p632 = pneg %p338
        $region62: #{tpu_custom_call.1} parent=11 // pred_check_branch
          %634 = sbr.rel (%p632) target = $region64
        $region63: #{tpu_custom_call.1} parent=11 // pred_region
          %s636 = ssub.s32 4096, 4096
          %637 = vsyncadd [#allocation15], %s636
          %s638 = sshll.u32 [#allocation16], 4
          %s639 = int_to_ptr.vmem [resolvable:$true] %s638
          %644 = dma.hbm_to_vmem [thread:$0]  %s13, 4096, %s639, [#allocation15], 256, 256, 16
        $region64: #{tpu_custom_call.1} parent=11 // pred_fallthru
          _
        // Predicated region
        $region65: #{tpu_custom_call.1} parent=11 // pred_check
          %p645 = pneg %p359
        $region66: #{tpu_custom_call.1} parent=11 // pred_check_branch
          %647 = sbr.rel (%p645) target = $region68
        $region67: #{tpu_custom_call.1} parent=11 // pred_region
          _
        $region68: #{tpu_custom_call.1} parent=11 // pred_fallthru
          _
        // Predicated region
        $region69: #{tpu_custom_call.1} parent=11 // pred_check
          %p648 = pneg %p380
        $region70: #{tpu_custom_call.1} parent=11 // pred_check_branch
          %650 = sbr.rel (%p648) target = $region72
        $region71: #{tpu_custom_call.1} parent=11 // pred_region
          %s652 = ssub.s32 2048, 2048
          %653 = vsyncadd [#allocation18], %s652
          %s654 = sshll.u32 [#allocation17], 4
          %s655 = int_to_ptr.vmem [resolvable:$true] %s654
          %660 = dma.hbm_to_vmem [thread:$0]  %s15, 2048, %s655, [#allocation18], 128, 128, 8
        $region72: #{tpu_custom_call.1} parent=11 // pred_fallthru
          _
        // Predicated region
        $region73: #{tpu_custom_call.1} parent=11 // pred_check
          %p661 = pneg %p401
        $region74: #{tpu_custom_call.1} parent=11 // pred_check_branch
          %663 = sbr.rel (%p661) target = $region76
        $region75: #{tpu_custom_call.1} parent=11 // pred_region
          _
        $region76: #{tpu_custom_call.1} parent=11 // pred_fallthru
          _
        // Predicated region
        $region77: #{tpu_custom_call.1} parent=11 // pred_check
          %p664 = pneg %p422
        $region78: #{tpu_custom_call.1} parent=11 // pred_check_branch
          %666 = sbr.rel (%p664) target = $region80
        $region79: #{tpu_custom_call.1} parent=11 // pred_region
          %s668 = ssub.s32 2048, 2048
          %669 = vsyncadd [#allocation18], %s668
          %s670 = sshll.u32 [#allocation19], 4
          %s671 = int_to_ptr.vmem [resolvable:$true] %s670
          %676 = dma.hbm_to_vmem [thread:$0]  %s17, 2048, %s671, [#allocation18], 128, 128, 8
        $region80: #{tpu_custom_call.1} parent=11 // pred_fallthru
          _
        // Predicated region
        $region81: #{tpu_custom_call.1} parent=11 // pred_check
          %p677 = pneg %p443
        $region82: #{tpu_custom_call.1} parent=11 // pred_check_branch
          %679 = sbr.rel (%p677) target = $region84
        $region83: #{tpu_custom_call.1} parent=11 // pred_region
          _
        $region84: #{tpu_custom_call.1} parent=11 // pred_fallthru
          _
        // Predicated region
        $region85: #{tpu_custom_call.1} parent=11 // pred_check
          %p680 = pneg %p464
        $region86: #{tpu_custom_call.1} parent=11 // pred_check_branch
          %682 = sbr.rel (%p680) target = $region88
        $region87: #{tpu_custom_call.1} parent=11 // pred_region
          %s684 = ssub.s32 4096, 4096
          %685 = vsyncadd [#allocation21], %s684
          %s686 = sshll.u32 [#allocation20], 4
          %s687 = int_to_ptr.vmem [resolvable:$true] %s686
          %692 = dma.hbm_to_vmem [thread:$0]  %s19, 4096, %s687, [#allocation21], 256, 256, 16
        $region88: #{tpu_custom_call.1} parent=11 // pred_fallthru
          _
        // Predicated region
        $region89: #{tpu_custom_call.1} parent=11 // pred_check
          %p693 = pneg %p485
        $region90: #{tpu_custom_call.1} parent=11 // pred_check_branch
          %695 = sbr.rel (%p693) target = $region92
        $region91: #{tpu_custom_call.1} parent=11 // pred_region
          _
        $region92: #{tpu_custom_call.1} parent=11 // pred_fallthru
          _
      $region12: #{tpu_custom_call.1} parent=5 // pred_fallthru
        _
      %p696 = scmp.lt.s32.totalorder %s39, 2
      // Predicated region
      $region93: #{tpu_custom_call.1} parent=5 // pred_check
        %p697 = pneg %p696
      $region94: #{tpu_custom_call.1} parent=5 // pred_check_branch
        %699 = sbr.rel (%p697) target = $region96
      $region95: #{tpu_custom_call.1} parent=5 // pred_region
        // Predicated region
        $region97: #{tpu_custom_call.1} parent=95 // pred_check
          %p700 = pneg %p59
        $region98: #{tpu_custom_call.1} parent=95 // pred_check_branch
          %702 = sbr.rel (%p700) target = $region100
        $region99: #{tpu_custom_call.1} parent=95 // pred_region
          %s703 = sand.u32 %s49, 1
          %s704 = scalar_lea.sflag [#allocation3], %s703
          %s705 = sand.u32 %s49, 1
          %s706 = smul.addr %s705, 8
          %s707 = scalar_lea.vmem [#allocation2], %s706
          %s709 = ssub.s32 128, 128
          %710 = vsyncadd %s704, %s709
          %s711 = smul.addr %s39, 128
          %s712 = scalar_lea.hbm %s0, %s711
          %s714 = sshll.u32 %s707, 4
          %s715 = int_to_ptr.vmem [resolvable:$true] %s714
          %717 = dma.hbm_to_vmem [thread:$0]  %s712, 128, %s715, %s704
        $region100: #{tpu_custom_call.1} parent=95 // pred_fallthru
          _
      $region96: #{tpu_custom_call.1} parent=5 // pred_fallthru
        _
      %p718 = scmp.le.s32.totalorder 1, %s39
      %p719 = scmp.lt.s32.totalorder %s39, 3
      %p720 = pnand %p718, %p719
      %p721 = pneg %p720
      // Predicated region
      $region101: #{tpu_custom_call.1} parent=5 // pred_check
        _
      $region102: #{tpu_custom_call.1} parent=5 // pred_check_branch
        %723 = sbr.rel (%p720) target = $region104
      $region103: #{tpu_custom_call.1} parent=5 // pred_region
        %s724 = ssub.s32 %s39, 1
        %s725 = sand.u32 %s52, 1
        %s726 = scalar_lea.sflag [#allocation3], %s725
        %s727 = sand.u32 %s52, 1
        %s728 = smul.addr %s727, 8
        %s729 = scalar_lea.vmem [#allocation2], %s728
        // Predicated region
        $region105: #{tpu_custom_call.1} parent=103 // pred_check
          %p730 = pneg %p65
        $region106: #{tpu_custom_call.1} parent=103 // pred_check_branch
          %732 = sbr.rel (%p730) target = $region108
        $region107: #{tpu_custom_call.1} parent=103 // pred_region
          %733 = dma.done %s726, 128
        $region108: #{tpu_custom_call.1} parent=103 // pred_fallthru
          _
        // Predicated region
        $region109: #{tpu_custom_call.1} parent=103 // pred_check
          %p734 = pneg %p86
        $region110: #{tpu_custom_call.1} parent=103 // pred_check_branch
          %736 = sbr.rel (%p734) target = $region112
        $region111: #{tpu_custom_call.1} parent=103 // pred_region
          %737 = dma.done [#allocation6], 6144
        $region112: #{tpu_custom_call.1} parent=103 // pred_fallthru
          _
        // Predicated region
        $region113: #{tpu_custom_call.1} parent=103 // pred_check
          %p738 = pneg %p107
        $region114: #{tpu_custom_call.1} parent=103 // pred_check_branch
          %740 = sbr.rel (%p738) target = $region116
        $region115: #{tpu_custom_call.1} parent=103 // pred_region
          %741 = dma.done [#allocation6], 2048
        $region116: #{tpu_custom_call.1} parent=103 // pred_fallthru
          _
        // Predicated region
        $region117: #{tpu_custom_call.1} parent=103 // pred_check
          %p742 = pneg %p149
        $region118: #{tpu_custom_call.1} parent=103 // pred_check_branch
          %744 = sbr.rel (%p742) target = $region120
        $region119: #{tpu_custom_call.1} parent=103 // pred_region
          %745 = dma.done [#allocation9], 2048
        $region120: #{tpu_custom_call.1} parent=103 // pred_fallthru
          _
        // Predicated region
        $region121: #{tpu_custom_call.1} parent=103 // pred_check
          %p746 = pneg %p191
        $region122: #{tpu_custom_call.1} parent=103 // pred_check_branch
          %748 = sbr.rel (%p746) target = $region124
        $region123: #{tpu_custom_call.1} parent=103 // pred_region
          %749 = dma.done [#allocation9], 4096
        $region124: #{tpu_custom_call.1} parent=103 // pred_fallthru
          _
        // Predicated region
        $region125: #{tpu_custom_call.1} parent=103 // pred_check
          %p750 = pneg %p233
        $region126: #{tpu_custom_call.1} parent=103 // pred_check_branch
          %752 = sbr.rel (%p750) target = $region128
        $region127: #{tpu_custom_call.1} parent=103 // pred_region
          %753 = dma.done [#allocation12], 4096
        $region128: #{tpu_custom_call.1} parent=103 // pred_fallthru
          _
        // Predicated region
        $region129: #{tpu_custom_call.1} parent=103 // pred_check
          %p754 = pneg %p254
        $region130: #{tpu_custom_call.1} parent=103 // pred_check_branch
          %756 = sbr.rel (%p754) target = $region132
        $region131: #{tpu_custom_call.1} parent=103 // pred_region
          %757 = dma.done [#allocation12], 2048
        $region132: #{tpu_custom_call.1} parent=103 // pred_fallthru
          _
        // Predicated region
        $region133: #{tpu_custom_call.1} parent=103 // pred_check
          %p758 = pneg %p296
        $region134: #{tpu_custom_call.1} parent=103 // pred_check_branch
          %760 = sbr.rel (%p758) target = $region136
        $region135: #{tpu_custom_call.1} parent=103 // pred_region
          %761 = dma.done [#allocation15], 2048
        $region136: #{tpu_custom_call.1} parent=103 // pred_fallthru
          _
        // Predicated region
        $region137: #{tpu_custom_call.1} parent=103 // pred_check
          %p762 = pneg %p338
        $region138: #{tpu_custom_call.1} parent=103 // pred_check_branch
          %764 = sbr.rel (%p762) target = $region140
        $region139: #{tpu_custom_call.1} parent=103 // pred_region
          %765 = dma.done [#allocation15], 4096
        $region140: #{tpu_custom_call.1} parent=103 // pred_fallthru
          _
        // Predicated region
        $region141: #{tpu_custom_call.1} parent=103 // pred_check
          %p766 = pneg %p380
        $region142: #{tpu_custom_call.1} parent=103 // pred_check_branch
          %768 = sbr.rel (%p766) target = $region144
        $region143: #{tpu_custom_call.1} parent=103 // pred_region
          %769 = dma.done [#allocation18], 2048
        $region144: #{tpu_custom_call.1} parent=103 // pred_fallthru
          _
        // Predicated region
        $region145: #{tpu_custom_call.1} parent=103 // pred_check
          %p770 = pneg %p422
        $region146: #{tpu_custom_call.1} parent=103 // pred_check_branch
          %772 = sbr.rel (%p770) target = $region148
        $region147: #{tpu_custom_call.1} parent=103 // pred_region
          %773 = dma.done [#allocation18], 2048
        $region148: #{tpu_custom_call.1} parent=103 // pred_fallthru
          _
        // Predicated region
        $region149: #{tpu_custom_call.1} parent=103 // pred_check
          %p774 = pneg %p464
        $region150: #{tpu_custom_call.1} parent=103 // pred_check_branch
          %776 = sbr.rel (%p774) target = $region152
        $region151: #{tpu_custom_call.1} parent=103 // pred_region
          %777 = dma.done [#allocation21], 4096
        $region152: #{tpu_custom_call.1} parent=103 // pred_fallthru
          _
        %s778 = sand.u32 %s52, 1
        %s779 = scalar_lea.sflag [#allocation3], %s778
        %s780 = sand.u32 %s52, 1
        %s781 = smul.addr %s780, 8
        %s782 = scalar_lea.vmem [#allocation2], %s781
        %p783 = pneg %p65
        %p784 = pneg %p62
        %p785 = pneg %p86
        %p786 = pneg %p83
        %p787 = pneg %p107
        %p788 = pneg %p104
        %p789 = pneg %p128
        %p790 = pneg %p125
        %p791 = pneg %p149
        %p792 = pneg %p146
        %p793 = pneg %p170
        %p794 = pneg %p167
        %p795 = pneg %p191
        %p796 = pneg %p188
        %p797 = pneg %p212
        %p798 = pneg %p209
        %p799 = pneg %p233
        %p800 = pneg %p230
        %p801 = pneg %p254
        %p802 = pneg %p251
        %p803 = pneg %p275
        %p804 = pneg %p272
        %p805 = pneg %p296
        %p806 = pneg %p293
        %p807 = pneg %p317
        %p808 = pneg %p314
        %p809 = pneg %p338
        %p810 = pneg %p335
        %p811 = pneg %p359
        %p812 = pneg %p356
        %p813 = pneg %p380
        %p814 = pneg %p377
        %p815 = pneg %p401
        %p816 = pneg %p398
        %p817 = pneg %p422
        %p818 = pneg %p419
        %p819 = pneg %p443
        %p820 = pneg %p440
        %p821 = pneg %p464
        %p822 = pneg %p461
        %p823 = pneg %p485
        %p824 = pneg %p482
        %p825 = pneg %p511
        %p826 = pneg %p508
        %s827 = sand.u32 %s498, 1
        %s828 = scalar_lea.sflag [#allocation4], %s827
        %s829 = sand.u32 %s498, 1
        %s830 = smul.addr %s829, 8
        %s831 = scalar_lea.vmem [#allocation22], %s830
        %v832 = vld [vmem:[%s729] sm:$0xff]
        %v833 = vlaneseq
        %v834 = vand.u32 %v833, 127
        %vm835 = vcmp.ge.s32.totalorder %v834, 8
        %vm836 = vcmp.lt.s32.totalorder %v834, 16
        %vm837 = vmand %vm835, %vm836
        %v838 = vsel %vm837, 1.0, 0.0
        %840 = vset.pattern.permute.xlu0 0
        %841 = vperm.xlu0 %840, %v832
        %v842 = vpop.permute.xlu0 %841
        %v844 = vld [vmem:[#allocation5] sm:$0xff]
        %v845 = vld [vmem:[#allocation5 + $0x8] sm:$0xff]
        %v846 = vld [vmem:[#allocation5 + $0x10] sm:$0xff]
        %v847 = vld [vmem:[#allocation5 + $0x18] sm:$0xff]
        %v848 = vld [vmem:[#allocation5 + $0x20] sm:$0xff]
        %v849 = vld [vmem:[#allocation5 + $0x28] sm:$0xff]
        %v850 = vld [vmem:[#allocation5 + $0x30] sm:$0xff]
        %v851 = vld [vmem:[#allocation5 + $0x38] sm:$0xff]
        %v852 = vld [vmem:[#allocation5 + $0x40] sm:$0xff]
        %v853 = vld [vmem:[#allocation5 + $0x48] sm:$0xff]
        %v854 = vld [vmem:[#allocation5 + $0x50] sm:$0xff]
        %v855 = vld [vmem:[#allocation5 + $0x58] sm:$0xff]
        %v856 = vld [vmem:[#allocation5 + $0x60] sm:$0xff]
        %v857 = vld [vmem:[#allocation5 + $0x68] sm:$0xff]
        %v858 = vld [vmem:[#allocation5 + $0x70] sm:$0xff]
        %v859 = vld [vmem:[#allocation5 + $0x78] sm:$0xff]
        %v860 = vld [vmem:[#allocation5 + $0x80] sm:$0xff]
        %v861 = vld [vmem:[#allocation5 + $0x88] sm:$0xff]
        %v862 = vld [vmem:[#allocation5 + $0x90] sm:$0xff]
        %v863 = vld [vmem:[#allocation5 + $0x98] sm:$0xff]
        %v864 = vld [vmem:[#allocation5 + $0xa0] sm:$0xff]
        %v865 = vld [vmem:[#allocation5 + $0xa8] sm:$0xff]
        %v866 = vld [vmem:[#allocation5 + $0xb0] sm:$0xff]
        %v867 = vld [vmem:[#allocation5 + $0xb8] sm:$0xff]
        %v868 = vld [vmem:[#allocation5 + $0xc0] sm:$0xff]
        %v869 = vld [vmem:[#allocation5 + $0xc8] sm:$0xff]
        %v870 = vld [vmem:[#allocation5 + $0xd0] sm:$0xff]
        %v871 = vld [vmem:[#allocation5 + $0xd8] sm:$0xff]
        %v872 = vld [vmem:[#allocation5 + $0xe0] sm:$0xff]
        %v873 = vld [vmem:[#allocation5 + $0xe8] sm:$0xff]
        %v874 = vld [vmem:[#allocation5 + $0xf0] sm:$0xff]
        %v875 = vld [vmem:[#allocation5 + $0xf8] sm:$0xff]
        %v876 = vld [vmem:[#allocation5 + $0x100] sm:$0xff]
        %v877 = vld [vmem:[#allocation5 + $0x108] sm:$0xff]
        %v878 = vld [vmem:[#allocation5 + $0x110] sm:$0xff]
        %v879 = vld [vmem:[#allocation5 + $0x118] sm:$0xff]
        %v880 = vld [vmem:[#allocation5 + $0x120] sm:$0xff]
        %v881 = vld [vmem:[#allocation5 + $0x128] sm:$0xff]
        %v882 = vld [vmem:[#allocation5 + $0x130] sm:$0xff]
        %v883 = vld [vmem:[#allocation5 + $0x138] sm:$0xff]
        %v884 = vld [vmem:[#allocation5 + $0x140] sm:$0xff]
        %v885 = vld [vmem:[#allocation5 + $0x148] sm:$0xff]
        %v886 = vld [vmem:[#allocation5 + $0x150] sm:$0xff]
        %v887 = vld [vmem:[#allocation5 + $0x158] sm:$0xff]
        %v888 = vld [vmem:[#allocation5 + $0x160] sm:$0xff]
        %v889 = vld [vmem:[#allocation5 + $0x168] sm:$0xff]
        %v890 = vld [vmem:[#allocation5 + $0x170] sm:$0xff]
        %v891 = vld [vmem:[#allocation5 + $0x178] sm:$0xff]
        %892 = vmatprep.subr.mxu0 %v890
        %893 = vmatpush1.msra.mxu0 %v889
        %894 = vmatprep.subr.mxu0 %v887
        %895 = vmatpush1.msra.mxu0 %v886
        %896 = vmatprep.subr.mxu0 %v884
        %897 = vmatpush1.msra.mxu0 %v883
        %898 = vmatprep.subr.mxu0 %v881
        %899 = vmatpush1.msra.mxu0 %v880
        %900 = vmatprep.subr.mxu0 %v878
        %901 = vmatpush1.msra.mxu0 %v877
        %902 = vmatprep.subr.mxu0 %v875
        %903 = vmatpush1.msra.mxu0 %v874
        %904 = vmatprep.subr.mxu0 %v872
        %905 = vmatpush1.msra.mxu0 %v871
        %906 = vmatprep.subr.mxu0 %v869
        %907 = vmatpush1.msra.mxu0 %v868
        %908 = vmatprep.subr.mxu0 %v866
        %909 = vmatpush1.msra.mxu0 %v865
        %910 = vmatprep.subr.mxu0 %v863
        %911 = vmatpush1.msra.mxu0 %v862
        %912 = vmatprep.subr.mxu0 %v860
        %913 = vmatpush1.msra.mxu0 %v859
        %914 = vmatprep.subr.mxu0 %v857
        %915 = vmatpush1.msra.mxu0 %v856
        %916 = vmatprep.subr.mxu0 %v854
        %917 = vmatpush1.msra.mxu0 %v853
        %918 = vmatprep.subr.mxu0 %v851
        %919 = vmatpush1.msra.mxu0 %v850
        %920 = vmatprep.subr.mxu0 %v848
        %921 = vmatpush1.msra.mxu0 %v847
        %922 = vmatprep.subr.mxu0 %v845
        %923 = vmatpush1.msra.mxu0 %v844
        %924 = vmatprep.subr.mxu0 0.0
        %925 = vmatpush2.msra.mxu0 0.0
        %926 = vmatprep.subr.mxu0 0.0
        %927 = vmatpush2.msra.mxu0 0.0
        %928 = vmatprep.subr.mxu0 0.0
        %929 = vmatpush2.msra.mxu0 0.0
        %930 = vmatprep.subr.mxu0 0.0
        %931 = vmatpush2.msra.mxu0 0.0
        %932 = vmatprep.subr.mxu0 0.0
        %933 = vmatpush2.msra.mxu0 0.0
        %934 = vmatprep.subr.mxu0 0.0
        %935 = vmatpush2.msra.mxu0 0.0
        %936 = vmatprep.subr.mxu0 0.0
        %937 = vmatpush2.msra.mxu0 0.0
        %938 = vmatprep.subr.mxu0 0.0
        %939 = vmatpush2.msra.mxu0 0.0
        %940 = vmatprep.subr.mxu0 0.0
        %941 = vmatpush2.msra.mxu0 0.0
        %942 = vmatprep.subr.mxu0 0.0
        %943 = vmatpush2.msra.mxu0 0.0
        %944 = vmatprep.subr.mxu0 0.0
        %945 = vmatpush2.msra.mxu0 0.0
        %946 = vmatprep.subr.mxu0 0.0
        %947 = vmatpush2.msra.mxu0 0.0
        %948 = vmatprep.subr.mxu0 0.0
        %949 = vmatpush2.msra.mxu0 0.0
        %950 = vmatprep.subr.mxu0 0.0
        %951 = vmatpush2.msra.mxu0 0.0
        %952 = vmatprep.subr.mxu0 0.0
        %953 = vmatpush2.msra.mxu0 0.0
        %954 = vmatprep.subr.mxu0 0.0
        %955 = vmatpush2.msra.mxu0 0.0
        %956 = vmatprep.mubr.f32.mxu0 0.0
        %957 = vmatmul.mubr.f32.gmra.mxu0 %v832
        %v958 = vpop.f32.mrf.mxu0
        %v959 = vadd.f32 0.0, %v958
        %v960 = vpop.f32.mrf.mxu0
        %v961 = vadd.f32 0.0, %v960
        %962 = vdwg.mxu0
        %963 = vmatprep.subr.mxu0 0.0
        %964 = vmatpush1.msra.mxu0 %v891
        %965 = vmatprep.subr.mxu0 0.0
        %966 = vmatpush1.msra.mxu0 %v888
        %967 = vmatprep.subr.mxu0 0.0
        %968 = vmatpush1.msra.mxu0 %v885
        %969 = vmatprep.subr.mxu0 0.0
        %970 = vmatpush1.msra.mxu0 %v882
        %971 = vmatprep.subr.mxu0 0.0
        %972 = vmatpush1.msra.mxu0 %v879
        %973 = vmatprep.subr.mxu0 0.0
        %974 = vmatpush1.msra.mxu0 %v876
        %975 = vmatprep.subr.mxu0 0.0
        %976 = vmatpush1.msra.mxu0 %v873
        %977 = vmatprep.subr.mxu0 0.0
        %978 = vmatpush1.msra.mxu0 %v870
        %979 = vmatprep.subr.mxu0 0.0
        %980 = vmatpush1.msra.mxu0 %v867
        %981 = vmatprep.subr.mxu0 0.0
        %982 = vmatpush1.msra.mxu0 %v864
        %983 = vmatprep.subr.mxu0 0.0
        %984 = vmatpush1.msra.mxu0 %v861
        %985 = vmatprep.subr.mxu0 0.0
        %986 = vmatpush1.msra.mxu0 %v858
        %987 = vmatprep.subr.mxu0 0.0
        %988 = vmatpush1.msra.mxu0 %v855
        %989 = vmatprep.subr.mxu0 0.0
        %990 = vmatpush1.msra.mxu0 %v852
        %991 = vmatprep.subr.mxu0 0.0
        %992 = vmatpush1.msra.mxu0 %v849
        %993 = vmatprep.subr.mxu0 0.0
        %994 = vmatpush1.msra.mxu0 %v846
        %995 = vmatprep.subr.mxu0 0.0
        %996 = vmatpush2.msra.mxu0 0.0
        %997 = vmatprep.subr.mxu0 0.0
        %998 = vmatpush2.msra.mxu0 0.0
        %999 = vmatprep.subr.mxu0 0.0
        %1000 = vmatpush2.msra.mxu0 0.0
        %1001 = vmatprep.subr.mxu0 0.0
        %1002 = vmatpush2.msra.mxu0 0.0
        %1003 = vmatprep.subr.mxu0 0.0
        %1004 = vmatpush2.msra.mxu0 0.0
        %1005 = vmatprep.subr.mxu0 0.0
        %1006 = vmatpush2.msra.mxu0 0.0
        %1007 = vmatprep.subr.mxu0 0.0
        %1008 = vmatpush2.msra.mxu0 0.0
        %1009 = vmatprep.subr.mxu0 0.0
        %1010 = vmatpush2.msra.mxu0 0.0
        %1011 = vmatprep.subr.mxu0 0.0
        %1012 = vmatpush2.msra.mxu0 0.0
        %1013 = vmatprep.subr.mxu0 0.0
        %1014 = vmatpush2.msra.mxu0 0.0
        %1015 = vmatprep.subr.mxu0 0.0
        %1016 = vmatpush2.msra.mxu0 0.0
        %1017 = vmatprep.subr.mxu0 0.0
        %1018 = vmatpush2.msra.mxu0 0.0
        %1019 = vmatprep.subr.mxu0 0.0
        %1020 = vmatpush2.msra.mxu0 0.0
        %1021 = vmatprep.subr.mxu0 0.0
        %1022 = vmatpush2.msra.mxu0 0.0
        %1023 = vmatprep.subr.mxu0 0.0
        %1024 = vmatpush2.msra.mxu0 0.0
        %1025 = vmatprep.subr.mxu0 0.0
        %1026 = vmatpush2.msra.mxu0 0.0
        %1027 = vmatprep.mubr.f32.mxu0 0.0
        %1028 = vmatmul.mubr.f32.gmra.mxu0 %v832
        %v1029 = vpop.f32.mrf.mxu0
        %v1030 = vadd.f32 0.0, %v1029
        %v1031 = vpop.f32.mrf.mxu0
        %1032 = vdwg.mxu0
        %v1033 = vmax.f32 %v959, %v961
        %v1034 = vmax.f32 %v1033, %v1030
        %v1035 = vld [vmem:[#allocation7] sm:$0xff]
        %v1036 = vld [vmem:[#allocation7 + $0x8] sm:$0xff]
        %v1037 = vld [vmem:[#allocation7 + $0x10] sm:$0xff]
        %v1038 = vld [vmem:[#allocation7 + $0x18] sm:$0xff]
        %v1039 = vld [vmem:[#allocation7 + $0x20] sm:$0xff]
        %v1040 = vld [vmem:[#allocation7 + $0x28] sm:$0xff]
        %v1041 = vld [vmem:[#allocation7 + $0x30] sm:$0xff]
        %v1042 = vld [vmem:[#allocation7 + $0x38] sm:$0xff]
        %v1043 = vld [vmem:[#allocation7 + $0x40] sm:$0xff]
        %v1044 = vld [vmem:[#allocation7 + $0x48] sm:$0xff]
        %v1045 = vld [vmem:[#allocation7 + $0x50] sm:$0xff]
        %v1046 = vld [vmem:[#allocation7 + $0x58] sm:$0xff]
        %v1047 = vld [vmem:[#allocation7 + $0x60] sm:$0xff]
        %v1048 = vld [vmem:[#allocation7 + $0x68] sm:$0xff]
        %v1049 = vld [vmem:[#allocation7 + $0x70] sm:$0xff]
        %v1050 = vld [vmem:[#allocation7 + $0x78] sm:$0xff]
        %v1051 = vld [vmem:[%s3] sm:$0x1]
        %v1053 = vlaneseq
        %v1054 = vshrl.u32 %v1053, 7
        %v1055 = vsub.s32 0, %v1054
        %v1056 = vrot.slane %v1051, %v1055
        %1058 = vmatprep.subr.mxu0 0.0
        %1059 = vmatpush1.msra.mxu0 %v1050
        %1060 = vmatprep.subr.mxu0 0.0
        %1061 = vmatpush1.msra.mxu0 %v1049
        %1062 = vmatprep.subr.mxu0 0.0
        %1063 = vmatpush1.msra.mxu0 %v1048
        %1064 = vmatprep.subr.mxu0 0.0
        %1065 = vmatpush1.msra.mxu0 %v1047
        %1066 = vmatprep.subr.mxu0 0.0
        %1067 = vmatpush1.msra.mxu0 %v1046
        %1068 = vmatprep.subr.mxu0 0.0
        %1069 = vmatpush1.msra.mxu0 %v1045
        %1070 = vmatprep.subr.mxu0 0.0
        %1071 = vmatpush1.msra.mxu0 %v1044
        %1072 = vmatprep.subr.mxu0 0.0
        %1073 = vmatpush1.msra.mxu0 %v1043
        %1074 = vmatprep.subr.mxu0 0.0
        %1075 = vmatpush1.msra.mxu0 %v1042
        %1076 = vmatprep.subr.mxu0 0.0
        %1077 = vmatpush1.msra.mxu0 %v1041
        %1078 = vmatprep.subr.mxu0 0.0
        %1079 = vmatpush1.msra.mxu0 %v1040
        %1080 = vmatprep.subr.mxu0 0.0
        %1081 = vmatpush1.msra.mxu0 %v1039
        %1082 = vmatprep.subr.mxu0 0.0
        %1083 = vmatpush1.msra.mxu0 %v1038
        %1084 = vmatprep.subr.mxu0 0.0
        %1085 = vmatpush1.msra.mxu0 %v1037
        %1086 = vmatprep.subr.mxu0 0.0
        %1087 = vmatpush1.msra.mxu0 %v1036
        %1088 = vmatprep.subr.mxu0 0.0
        %1089 = vmatpush1.msra.mxu0 %v1035
        %1090 = vmatprep.subr.mxu0 0.0
        %1091 = vmatpush2.msra.mxu0 0.0
        %1092 = vmatprep.subr.mxu0 0.0
        %1093 = vmatpush2.msra.mxu0 0.0
        %1094 = vmatprep.subr.mxu0 0.0
        %1095 = vmatpush2.msra.mxu0 0.0
        %1096 = vmatprep.subr.mxu0 0.0
        %1097 = vmatpush2.msra.mxu0 0.0
        %1098 = vmatprep.subr.mxu0 0.0
        %1099 = vmatpush2.msra.mxu0 0.0
        %1100 = vmatprep.subr.mxu0 0.0
        %1101 = vmatpush2.msra.mxu0 0.0
        %1102 = vmatprep.subr.mxu0 0.0
        %1103 = vmatpush2.msra.mxu0 0.0
        %1104 = vmatprep.subr.mxu0 0.0
        %1105 = vmatpush2.msra.mxu0 0.0
        %1106 = vmatprep.subr.mxu0 0.0
        %1107 = vmatpush2.msra.mxu0 0.0
        %1108 = vmatprep.subr.mxu0 0.0
        %1109 = vmatpush2.msra.mxu0 0.0
        %1110 = vmatprep.subr.mxu0 0.0
        %1111 = vmatpush2.msra.mxu0 0.0
        %1112 = vmatprep.subr.mxu0 0.0
        %1113 = vmatpush2.msra.mxu0 0.0
        %1114 = vmatprep.subr.mxu0 0.0
        %1115 = vmatpush2.msra.mxu0 0.0
        %1116 = vmatprep.subr.mxu0 0.0
        %1117 = vmatpush2.msra.mxu0 0.0
        %1118 = vmatprep.subr.mxu0 0.0
        %1119 = vmatpush2.msra.mxu0 0.0
        %1120 = vmatprep.subr.mxu0 0.0
        %1121 = vmatpush2.msra.mxu0 0.0
        %1122 = vmatprep.mubr.f32.mxu0 0.0
        %1123 = vmatmul.mubr.f32.gmra.mxu0 %v1034
        %v1124 = vpop.f32.mrf.mxu0
        %v1125 = vadd.f32 %v1056, %v1124
        %v1126 = vpop.f32.mrf.mxu0
        %1127 = vdwg.mxu0
        %v1128 = vmax.f32 %v1125, 0.0
        %v1129 = vld [vmem:[#allocation8] sm:$0xff]
        %v1130 = vld [vmem:[#allocation8 + $0x8] sm:$0xff]
        %v1131 = vld [vmem:[#allocation8 + $0x10] sm:$0xff]
        %v1132 = vld [vmem:[#allocation8 + $0x18] sm:$0xff]
        %v1133 = vld [vmem:[#allocation8 + $0x20] sm:$0xff]
        %v1134 = vld [vmem:[#allocation8 + $0x28] sm:$0xff]
        %v1135 = vld [vmem:[#allocation8 + $0x30] sm:$0xff]
        %v1136 = vld [vmem:[#allocation8 + $0x38] sm:$0xff]
        %v1137 = vld [vmem:[#allocation8 + $0x40] sm:$0xff]
        %v1138 = vld [vmem:[#allocation8 + $0x48] sm:$0xff]
        %v1139 = vld [vmem:[#allocation8 + $0x50] sm:$0xff]
        %v1140 = vld [vmem:[#allocation8 + $0x58] sm:$0xff]
        %v1141 = vld [vmem:[#allocation8 + $0x60] sm:$0xff]
        %v1142 = vld [vmem:[#allocation8 + $0x68] sm:$0xff]
        %v1143 = vld [vmem:[#allocation8 + $0x70] sm:$0xff]
        %v1144 = vld [vmem:[#allocation8 + $0x78] sm:$0xff]
        %v1145 = vld [vmem:[%s5] sm:$0x1]
        %v1147 = vlaneseq
        %v1148 = vshrl.u32 %v1147, 7
        %v1149 = vsub.s32 0, %v1148
        %v1150 = vrot.slane %v1145, %v1149
        %1152 = vmatprep.subr.mxu0 0.0
        %1153 = vmatpush1.msra.mxu0 %v1144
        %1154 = vmatprep.subr.mxu0 0.0
        %1155 = vmatpush1.msra.mxu0 %v1143
        %1156 = vmatprep.subr.mxu0 0.0
        %1157 = vmatpush1.msra.mxu0 %v1142
        %1158 = vmatprep.subr.mxu0 0.0
        %1159 = vmatpush1.msra.mxu0 %v1141
        %1160 = vmatprep.subr.mxu0 0.0
        %1161 = vmatpush1.msra.mxu0 %v1140
        %1162 = vmatprep.subr.mxu0 0.0
        %1163 = vmatpush1.msra.mxu0 %v1139
        %1164 = vmatprep.subr.mxu0 0.0
        %1165 = vmatpush1.msra.mxu0 %v1138
        %1166 = vmatprep.subr.mxu0 0.0
        %1167 = vmatpush1.msra.mxu0 %v1137
        %1168 = vmatprep.subr.mxu0 0.0
        %1169 = vmatpush1.msra.mxu0 %v1136
        %1170 = vmatprep.subr.mxu0 0.0
        %1171 = vmatpush1.msra.mxu0 %v1135
        %1172 = vmatprep.subr.mxu0 0.0
        %1173 = vmatpush1.msra.mxu0 %v1134
        %1174 = vmatprep.subr.mxu0 0.0
        %1175 = vmatpush1.msra.mxu0 %v1133
        %1176 = vmatprep.subr.mxu0 0.0
        %1177 = vmatpush1.msra.mxu0 %v1132
        %1178 = vmatprep.subr.mxu0 0.0
        %1179 = vmatpush1.msra.mxu0 %v1131
        %1180 = vmatprep.subr.mxu0 0.0
        %1181 = vmatpush1.msra.mxu0 %v1130
        %1182 = vmatprep.subr.mxu0 0.0
        %1183 = vmatpush1.msra.mxu0 %v1129
        %1184 = vmatprep.subr.mxu0 0.0
        %1185 = vmatpush2.msra.mxu0 0.0
        %1186 = vmatprep.subr.mxu0 0.0
        %1187 = vmatpush2.msra.mxu0 0.0
        %1188 = vmatprep.subr.mxu0 0.0
        %1189 = vmatpush2.msra.mxu0 0.0
        %1190 = vmatprep.subr.mxu0 0.0
        %1191 = vmatpush2.msra.mxu0 0.0
        %1192 = vmatprep.subr.mxu0 0.0
        %1193 = vmatpush2.msra.mxu0 0.0
        %1194 = vmatprep.subr.mxu0 0.0
        %1195 = vmatpush2.msra.mxu0 0.0
        %1196 = vmatprep.subr.mxu0 0.0
        %1197 = vmatpush2.msra.mxu0 0.0
        %1198 = vmatprep.subr.mxu0 0.0
        %1199 = vmatpush2.msra.mxu0 0.0
        %1200 = vmatprep.subr.mxu0 0.0
        %1201 = vmatpush2.msra.mxu0 0.0
        %1202 = vmatprep.subr.mxu0 0.0
        %1203 = vmatpush2.msra.mxu0 0.0
        %1204 = vmatprep.subr.mxu0 0.0
        %1205 = vmatpush2.msra.mxu0 0.0
        %1206 = vmatprep.subr.mxu0 0.0
        %1207 = vmatpush2.msra.mxu0 0.0
        %1208 = vmatprep.subr.mxu0 0.0
        %1209 = vmatpush2.msra.mxu0 0.0
        %1210 = vmatprep.subr.mxu0 0.0
        %1211 = vmatpush2.msra.mxu0 0.0
        %1212 = vmatprep.subr.mxu0 0.0
        %1213 = vmatpush2.msra.mxu0 0.0
        %1214 = vmatprep.subr.mxu0 0.0
        %1215 = vmatpush2.msra.mxu0 0.0
        %1216 = vmatprep.mubr.f32.mxu0 0.0
        %1217 = vmatmul.mubr.f32.gmra.mxu0 %v1128
        %v1218 = vpop.f32.mrf.mxu0
        %v1219 = vadd.f32 %v1150, %v1218
        %v1220 = vpop.f32.mrf.mxu0
        %1221 = vdwg.mxu0
        %v1222 = vmax.f32 %v1219, 0.0
        %v1223 = vld [vmem:[#allocation10] sm:$0xff]
        %v1224 = vld [vmem:[#allocation10 + $0x8] sm:$0xff]
        %v1225 = vld [vmem:[#allocation10 + $0x10] sm:$0xff]
        %v1226 = vld [vmem:[#allocation10 + $0x18] sm:$0xff]
        %v1227 = vld [vmem:[#allocation10 + $0x20] sm:$0xff]
        %v1228 = vld [vmem:[#allocation10 + $0x28] sm:$0xff]
        %v1229 = vld [vmem:[#allocation10 + $0x30] sm:$0xff]
        %v1230 = vld [vmem:[#allocation10 + $0x38] sm:$0xff]
        %v1231 = vld [vmem:[#allocation10 + $0x40] sm:$0xff]
        %v1232 = vld [vmem:[#allocation10 + $0x48] sm:$0xff]
        %v1233 = vld [vmem:[#allocation10 + $0x50] sm:$0xff]
        %v1234 = vld [vmem:[#allocation10 + $0x58] sm:$0xff]
        %v1235 = vld [vmem:[#allocation10 + $0x60] sm:$0xff]
        %v1236 = vld [vmem:[#allocation10 + $0x68] sm:$0xff]
        %v1237 = vld [vmem:[#allocation10 + $0x70] sm:$0xff]
        %v1238 = vld [vmem:[#allocation10 + $0x78] sm:$0xff]
        %v1239 = vld [vmem:[#allocation10 + $0x80] sm:$0xff]
        %v1240 = vld [vmem:[#allocation10 + $0x88] sm:$0xff]
        %v1241 = vld [vmem:[#allocation10 + $0x90] sm:$0xff]
        %v1242 = vld [vmem:[#allocation10 + $0x98] sm:$0xff]
        %v1243 = vld [vmem:[#allocation10 + $0xa0] sm:$0xff]
        %v1244 = vld [vmem:[#allocation10 + $0xa8] sm:$0xff]
        %v1245 = vld [vmem:[#allocation10 + $0xb0] sm:$0xff]
        %v1246 = vld [vmem:[#allocation10 + $0xb8] sm:$0xff]
        %v1247 = vld [vmem:[#allocation10 + $0xc0] sm:$0xff]
        %v1248 = vld [vmem:[#allocation10 + $0xc8] sm:$0xff]
        %v1249 = vld [vmem:[#allocation10 + $0xd0] sm:$0xff]
        %v1250 = vld [vmem:[#allocation10 + $0xd8] sm:$0xff]
        %v1251 = vld [vmem:[#allocation10 + $0xe0] sm:$0xff]
        %v1252 = vld [vmem:[#allocation10 + $0xe8] sm:$0xff]
        %v1253 = vld [vmem:[#allocation10 + $0xf0] sm:$0xff]
        %v1254 = vld [vmem:[#allocation10 + $0xf8] sm:$0xff]
        %v1255 = vld [vmem:[%s7] sm:$0x3]
        %v1257 = vlaneseq
        %v1258 = vshrl.u32 %v1257, 7
        %v1259 = vsub.s32 0, %v1258
        %v1260 = vrot.slane %v1255, %v1259
        %v1261 = vlaneseq
        %v1262 = vshrl.u32 %v1261, 7
        %v1263 = vsub.s32 1, %v1262
        %v1264 = vrot.slane %v1255, %v1263
        %1267 = vmatprep.subr.mxu0 %v1254
        %1268 = vmatpush1.msra.mxu0 %v1253
        %1269 = vmatprep.subr.mxu0 %v1252
        %1270 = vmatpush1.msra.mxu0 %v1251
        %1271 = vmatprep.subr.mxu0 %v1250
        %1272 = vmatpush1.msra.mxu0 %v1249
        %1273 = vmatprep.subr.mxu0 %v1248
        %1274 = vmatpush1.msra.mxu0 %v1247
        %1275 = vmatprep.subr.mxu0 %v1246
        %1276 = vmatpush1.msra.mxu0 %v1245
        %1277 = vmatprep.subr.mxu0 %v1244
        %1278 = vmatpush1.msra.mxu0 %v1243
        %1279 = vmatprep.subr.mxu0 %v1242
        %1280 = vmatpush1.msra.mxu0 %v1241
        %1281 = vmatprep.subr.mxu0 %v1240
        %1282 = vmatpush1.msra.mxu0 %v1239
        %1283 = vmatprep.subr.mxu0 %v1238
        %1284 = vmatpush1.msra.mxu0 %v1237
        %1285 = vmatprep.subr.mxu0 %v1236
        %1286 = vmatpush1.msra.mxu0 %v1235
        %1287 = vmatprep.subr.mxu0 %v1234
        %1288 = vmatpush1.msra.mxu0 %v1233
        %1289 = vmatprep.subr.mxu0 %v1232
        %1290 = vmatpush1.msra.mxu0 %v1231
        %1291 = vmatprep.subr.mxu0 %v1230
        %1292 = vmatpush1.msra.mxu0 %v1229
        %1293 = vmatprep.subr.mxu0 %v1228
        %1294 = vmatpush1.msra.mxu0 %v1227
        %1295 = vmatprep.subr.mxu0 %v1226
        %1296 = vmatpush1.msra.mxu0 %v1225
        %1297 = vmatprep.subr.mxu0 %v1224
        %1298 = vmatpush1.msra.mxu0 %v1223
        %1299 = vmatprep.subr.mxu0 0.0
        %1300 = vmatpush2.msra.mxu0 0.0
        %1301 = vmatprep.subr.mxu0 0.0
        %1302 = vmatpush2.msra.mxu0 0.0
        %1303 = vmatprep.subr.mxu0 0.0
        %1304 = vmatpush2.msra.mxu0 0.0
        %1305 = vmatprep.subr.mxu0 0.0
        %1306 = vmatpush2.msra.mxu0 0.0
        %1307 = vmatprep.subr.mxu0 0.0
        %1308 = vmatpush2.msra.mxu0 0.0
        %1309 = vmatprep.subr.mxu0 0.0
        %1310 = vmatpush2.msra.mxu0 0.0
        %1311 = vmatprep.subr.mxu0 0.0
        %1312 = vmatpush2.msra.mxu0 0.0
        %1313 = vmatprep.subr.mxu0 0.0
        %1314 = vmatpush2.msra.mxu0 0.0
        %1315 = vmatprep.subr.mxu0 0.0
        %1316 = vmatpush2.msra.mxu0 0.0
        %1317 = vmatprep.subr.mxu0 0.0
        %1318 = vmatpush2.msra.mxu0 0.0
        %1319 = vmatprep.subr.mxu0 0.0
        %1320 = vmatpush2.msra.mxu0 0.0
        %1321 = vmatprep.subr.mxu0 0.0
        %1322 = vmatpush2.msra.mxu0 0.0
        %1323 = vmatprep.subr.mxu0 0.0
        %1324 = vmatpush2.msra.mxu0 0.0
        %1325 = vmatprep.subr.mxu0 0.0
        %1326 = vmatpush2.msra.mxu0 0.0
        %1327 = vmatprep.subr.mxu0 0.0
        %1328 = vmatpush2.msra.mxu0 0.0
        %1329 = vmatprep.subr.mxu0 0.0
        %1330 = vmatpush2.msra.mxu0 0.0
        %1331 = vmatprep.mubr.f32.mxu0 0.0
        %1332 = vmatmul.mubr.f32.gmra.mxu0 %v1222
        %v1333 = vpop.f32.mrf.mxu0
        %v1334 = vadd.f32 %v1260, %v1333
        %v1335 = vpop.f32.mrf.mxu0
        %v1336 = vadd.f32 %v1264, %v1335
        %1337 = vdwg.mxu0
        %v1338 = vsub.f32 %v832, %v1334
        %v1339 = vmul.f32 %v1338, %v838
        %v1340 = vadd.f32 %v842, %v1336
        %v1341 = vld [vmem:[#allocation11] sm:$0xff]
        %v1342 = vld [vmem:[#allocation11 + $0x8] sm:$0xff]
        %v1343 = vld [vmem:[#allocation11 + $0x10] sm:$0xff]
        %v1344 = vld [vmem:[#allocation11 + $0x18] sm:$0xff]
        %v1345 = vld [vmem:[#allocation11 + $0x20] sm:$0xff]
        %v1346 = vld [vmem:[#allocation11 + $0x28] sm:$0xff]
        %v1347 = vld [vmem:[#allocation11 + $0x30] sm:$0xff]
        %v1348 = vld [vmem:[#allocation11 + $0x38] sm:$0xff]
        %v1349 = vld [vmem:[#allocation11 + $0x40] sm:$0xff]
        %v1350 = vld [vmem:[#allocation11 + $0x48] sm:$0xff]
        %v1351 = vld [vmem:[#allocation11 + $0x50] sm:$0xff]
        %v1352 = vld [vmem:[#allocation11 + $0x58] sm:$0xff]
        %v1353 = vld [vmem:[#allocation11 + $0x60] sm:$0xff]
        %v1354 = vld [vmem:[#allocation11 + $0x68] sm:$0xff]
        %v1355 = vld [vmem:[#allocation11 + $0x70] sm:$0xff]
        %v1356 = vld [vmem:[#allocation11 + $0x78] sm:$0xff]
        %v1357 = vld [vmem:[#allocation11 + $0x80] sm:$0xff]
        %v1358 = vld [vmem:[#allocation11 + $0x88] sm:$0xff]
        %v1359 = vld [vmem:[#allocation11 + $0x90] sm:$0xff]
        %v1360 = vld [vmem:[#allocation11 + $0x98] sm:$0xff]
        %v1361 = vld [vmem:[#allocation11 + $0xa0] sm:$0xff]
        %v1362 = vld [vmem:[#allocation11 + $0xa8] sm:$0xff]
        %v1363 = vld [vmem:[#allocation11 + $0xb0] sm:$0xff]
        %v1364 = vld [vmem:[#allocation11 + $0xb8] sm:$0xff]
        %v1365 = vld [vmem:[#allocation11 + $0xc0] sm:$0xff]
        %v1366 = vld [vmem:[#allocation11 + $0xc8] sm:$0xff]
        %v1367 = vld [vmem:[#allocation11 + $0xd0] sm:$0xff]
        %v1368 = vld [vmem:[#allocation11 + $0xd8] sm:$0xff]
        %v1369 = vld [vmem:[#allocation11 + $0xe0] sm:$0xff]
        %v1370 = vld [vmem:[#allocation11 + $0xe8] sm:$0xff]
        %v1371 = vld [vmem:[#allocation11 + $0xf0] sm:$0xff]
        %v1372 = vld [vmem:[#allocation11 + $0xf8] sm:$0xff]
        %1373 = vmatprep.subr.mxu0 %v1372
        %1374 = vmatpush1.msra.mxu0 %v1371
        %1375 = vmatprep.subr.mxu0 %v1370
        %1376 = vmatpush1.msra.mxu0 %v1369
        %1377 = vmatprep.subr.mxu0 %v1368
        %1378 = vmatpush1.msra.mxu0 %v1367
        %1379 = vmatprep.subr.mxu0 %v1366
        %1380 = vmatpush1.msra.mxu0 %v1365
        %1381 = vmatprep.subr.mxu0 %v1364
        %1382 = vmatpush1.msra.mxu0 %v1363
        %1383 = vmatprep.subr.mxu0 %v1362
        %1384 = vmatpush1.msra.mxu0 %v1361
        %1385 = vmatprep.subr.mxu0 %v1360
        %1386 = vmatpush1.msra.mxu0 %v1359
        %1387 = vmatprep.subr.mxu0 %v1358
        %1388 = vmatpush1.msra.mxu0 %v1357
        %1389 = vmatprep.subr.mxu0 %v1356
        %1390 = vmatpush1.msra.mxu0 %v1355
        %1391 = vmatprep.subr.mxu0 %v1354
        %1392 = vmatpush1.msra.mxu0 %v1353
        %1393 = vmatprep.subr.mxu0 %v1352
        %1394 = vmatpush1.msra.mxu0 %v1351
        %1395 = vmatprep.subr.mxu0 %v1350
        %1396 = vmatpush1.msra.mxu0 %v1349
        %1397 = vmatprep.subr.mxu0 %v1348
        %1398 = vmatpush1.msra.mxu0 %v1347
        %1399 = vmatprep.subr.mxu0 %v1346
        %1400 = vmatpush1.msra.mxu0 %v1345
        %1401 = vmatprep.subr.mxu0 %v1344
        %1402 = vmatpush1.msra.mxu0 %v1343
        %1403 = vmatprep.subr.mxu0 %v1342
        %1404 = vmatpush1.msra.mxu0 %v1341
        %1405 = vmatprep.subr.mxu0 0.0
        %1406 = vmatpush2.msra.mxu0 0.0
        %1407 = vmatprep.subr.mxu0 0.0
        %1408 = vmatpush2.msra.mxu0 0.0
        %1409 = vmatprep.subr.mxu0 0.0
        %1410 = vmatpush2.msra.mxu0 0.0
        %1411 = vmatprep.subr.mxu0 0.0
        %1412 = vmatpush2.msra.mxu0 0.0
        %1413 = vmatprep.subr.mxu0 0.0
        %1414 = vmatpush2.msra.mxu0 0.0
        %1415 = vmatprep.subr.mxu0 0.0
        %1416 = vmatpush2.msra.mxu0 0.0
        %1417 = vmatprep.subr.mxu0 0.0
        %1418 = vmatpush2.msra.mxu0 0.0
        %1419 = vmatprep.subr.mxu0 0.0
        %1420 = vmatpush2.msra.mxu0 0.0
        %1421 = vmatprep.subr.mxu0 0.0
        %1422 = vmatpush2.msra.mxu0 0.0
        %1423 = vmatprep.subr.mxu0 0.0
        %1424 = vmatpush2.msra.mxu0 0.0
        %1425 = vmatprep.subr.mxu0 0.0
        %1426 = vmatpush2.msra.mxu0 0.0
        %1427 = vmatprep.subr.mxu0 0.0
        %1428 = vmatpush2.msra.mxu0 0.0
        %1429 = vmatprep.subr.mxu0 0.0
        %1430 = vmatpush2.msra.mxu0 0.0
        %1431 = vmatprep.subr.mxu0 0.0
        %1432 = vmatpush2.msra.mxu0 0.0
        %1433 = vmatprep.subr.mxu0 0.0
        %1434 = vmatpush2.msra.mxu0 0.0
        %1435 = vmatprep.subr.mxu0 0.0
        %1436 = vmatpush2.msra.mxu0 0.0
        %1437 = vmatprep.mubr.f32.mxu0 0.0
        %1438 = vmatmul.mubr.f32.gmra.mxu0 %v1339
        %v1439 = vpop.f32.mrf.mxu0
        %v1440 = vadd.f32 0.0, %v1439
        %v1441 = vpop.f32.mrf.mxu0
        %v1442 = vadd.f32 0.0, %v1441
        %1443 = vdwg.mxu0
        %v1444 = vmax.f32 %v1440, %v1442
        %v1445 = vld [vmem:[#allocation13] sm:$0xff]
        %v1446 = vld [vmem:[#allocation13 + $0x8] sm:$0xff]
        %v1447 = vld [vmem:[#allocation13 + $0x10] sm:$0xff]
        %v1448 = vld [vmem:[#allocation13 + $0x18] sm:$0xff]
        %v1449 = vld [vmem:[#allocation13 + $0x20] sm:$0xff]
        %v1450 = vld [vmem:[#allocation13 + $0x28] sm:$0xff]
        %v1451 = vld [vmem:[#allocation13 + $0x30] sm:$0xff]
        %v1452 = vld [vmem:[#allocation13 + $0x38] sm:$0xff]
        %v1453 = vld [vmem:[#allocation13 + $0x40] sm:$0xff]
        %v1454 = vld [vmem:[#allocation13 + $0x48] sm:$0xff]
        %v1455 = vld [vmem:[#allocation13 + $0x50] sm:$0xff]
        %v1456 = vld [vmem:[#allocation13 + $0x58] sm:$0xff]
        %v1457 = vld [vmem:[#allocation13 + $0x60] sm:$0xff]
        %v1458 = vld [vmem:[#allocation13 + $0x68] sm:$0xff]
        %v1459 = vld [vmem:[#allocation13 + $0x70] sm:$0xff]
        %v1460 = vld [vmem:[#allocation13 + $0x78] sm:$0xff]
        %v1461 = vld [vmem:[%s10] sm:$0x1]
        %v1463 = vlaneseq
        %v1464 = vshrl.u32 %v1463, 7
        %v1465 = vsub.s32 0, %v1464
        %v1466 = vrot.slane %v1461, %v1465
        %1468 = vmatprep.subr.mxu0 0.0
        %1469 = vmatpush1.msra.mxu0 %v1460
        %1470 = vmatprep.subr.mxu0 0.0
        %1471 = vmatpush1.msra.mxu0 %v1459
        %1472 = vmatprep.subr.mxu0 0.0
        %1473 = vmatpush1.msra.mxu0 %v1458
        %1474 = vmatprep.subr.mxu0 0.0
        %1475 = vmatpush1.msra.mxu0 %v1457
        %1476 = vmatprep.subr.mxu0 0.0
        %1477 = vmatpush1.msra.mxu0 %v1456
        %1478 = vmatprep.subr.mxu0 0.0
        %1479 = vmatpush1.msra.mxu0 %v1455
        %1480 = vmatprep.subr.mxu0 0.0
        %1481 = vmatpush1.msra.mxu0 %v1454
        %1482 = vmatprep.subr.mxu0 0.0
        %1483 = vmatpush1.msra.mxu0 %v1453
        %1484 = vmatprep.subr.mxu0 0.0
        %1485 = vmatpush1.msra.mxu0 %v1452
        %1486 = vmatprep.subr.mxu0 0.0
        %1487 = vmatpush1.msra.mxu0 %v1451
        %1488 = vmatprep.subr.mxu0 0.0
        %1489 = vmatpush1.msra.mxu0 %v1450
        %1490 = vmatprep.subr.mxu0 0.0
        %1491 = vmatpush1.msra.mxu0 %v1449
        %1492 = vmatprep.subr.mxu0 0.0
        %1493 = vmatpush1.msra.mxu0 %v1448
        %1494 = vmatprep.subr.mxu0 0.0
        %1495 = vmatpush1.msra.mxu0 %v1447
        %1496 = vmatprep.subr.mxu0 0.0
        %1497 = vmatpush1.msra.mxu0 %v1446
        %1498 = vmatprep.subr.mxu0 0.0
        %1499 = vmatpush1.msra.mxu0 %v1445
        %1500 = vmatprep.subr.mxu0 0.0
        %1501 = vmatpush2.msra.mxu0 0.0
        %1502 = vmatprep.subr.mxu0 0.0
        %1503 = vmatpush2.msra.mxu0 0.0
        %1504 = vmatprep.subr.mxu0 0.0
        %1505 = vmatpush2.msra.mxu0 0.0
        %1506 = vmatprep.subr.mxu0 0.0
        %1507 = vmatpush2.msra.mxu0 0.0
        %1508 = vmatprep.subr.mxu0 0.0
        %1509 = vmatpush2.msra.mxu0 0.0
        %1510 = vmatprep.subr.mxu0 0.0
        %1511 = vmatpush2.msra.mxu0 0.0
        %1512 = vmatprep.subr.mxu0 0.0
        %1513 = vmatpush2.msra.mxu0 0.0
        %1514 = vmatprep.subr.mxu0 0.0
        %1515 = vmatpush2.msra.mxu0 0.0
        %1516 = vmatprep.subr.mxu0 0.0
        %1517 = vmatpush2.msra.mxu0 0.0
        %1518 = vmatprep.subr.mxu0 0.0
        %1519 = vmatpush2.msra.mxu0 0.0
        %1520 = vmatprep.subr.mxu0 0.0
        %1521 = vmatpush2.msra.mxu0 0.0
        %1522 = vmatprep.subr.mxu0 0.0
        %1523 = vmatpush2.msra.mxu0 0.0
        %1524 = vmatprep.subr.mxu0 0.0
        %1525 = vmatpush2.msra.mxu0 0.0
        %1526 = vmatprep.subr.mxu0 0.0
        %1527 = vmatpush2.msra.mxu0 0.0
        %1528 = vmatprep.subr.mxu0 0.0
        %1529 = vmatpush2.msra.mxu0 0.0
        %1530 = vmatprep.subr.mxu0 0.0
        %1531 = vmatpush2.msra.mxu0 0.0
        %1532 = vmatprep.mubr.f32.mxu0 0.0
        %1533 = vmatmul.mubr.f32.gmra.mxu0 %v1444
        %v1534 = vpop.f32.mrf.mxu0
        %v1535 = vadd.f32 %v1466, %v1534
        %v1536 = vpop.f32.mrf.mxu0
        %1537 = vdwg.mxu0
        %v1538 = vmax.f32 %v1535, 0.0
        %v1539 = vld [vmem:[#allocation14] sm:$0xff]
        %v1540 = vld [vmem:[#allocation14 + $0x8] sm:$0xff]
        %v1541 = vld [vmem:[#allocation14 + $0x10] sm:$0xff]
        %v1542 = vld [vmem:[#allocation14 + $0x18] sm:$0xff]
        %v1543 = vld [vmem:[#allocation14 + $0x20] sm:$0xff]
        %v1544 = vld [vmem:[#allocation14 + $0x28] sm:$0xff]
        %v1545 = vld [vmem:[#allocation14 + $0x30] sm:$0xff]
        %v1546 = vld [vmem:[#allocation14 + $0x38] sm:$0xff]
        %v1547 = vld [vmem:[#allocation14 + $0x40] sm:$0xff]
        %v1548 = vld [vmem:[#allocation14 + $0x48] sm:$0xff]
        %v1549 = vld [vmem:[#allocation14 + $0x50] sm:$0xff]
        %v1550 = vld [vmem:[#allocation14 + $0x58] sm:$0xff]
        %v1551 = vld [vmem:[#allocation14 + $0x60] sm:$0xff]
        %v1552 = vld [vmem:[#allocation14 + $0x68] sm:$0xff]
        %v1553 = vld [vmem:[#allocation14 + $0x70] sm:$0xff]
        %v1554 = vld [vmem:[#allocation14 + $0x78] sm:$0xff]
        %v1555 = vld [vmem:[%s12] sm:$0x1]
        %v1557 = vlaneseq
        %v1558 = vshrl.u32 %v1557, 7
        %v1559 = vsub.s32 0, %v1558
        %v1560 = vrot.slane %v1555, %v1559
        %1562 = vmatprep.subr.mxu0 0.0
        %1563 = vmatpush1.msra.mxu0 %v1554
        %1564 = vmatprep.subr.mxu0 0.0
        %1565 = vmatpush1.msra.mxu0 %v1553
        %1566 = vmatprep.subr.mxu0 0.0
        %1567 = vmatpush1.msra.mxu0 %v1552
        %1568 = vmatprep.subr.mxu0 0.0
        %1569 = vmatpush1.msra.mxu0 %v1551
        %1570 = vmatprep.subr.mxu0 0.0
        %1571 = vmatpush1.msra.mxu0 %v1550
        %1572 = vmatprep.subr.mxu0 0.0
        %1573 = vmatpush1.msra.mxu0 %v1549
        %1574 = vmatprep.subr.mxu0 0.0
        %1575 = vmatpush1.msra.mxu0 %v1548
        %1576 = vmatprep.subr.mxu0 0.0
        %1577 = vmatpush1.msra.mxu0 %v1547
        %1578 = vmatprep.subr.mxu0 0.0
        %1579 = vmatpush1.msra.mxu0 %v1546
        %1580 = vmatprep.subr.mxu0 0.0
        %1581 = vmatpush1.msra.mxu0 %v1545
        %1582 = vmatprep.subr.mxu0 0.0
        %1583 = vmatpush1.msra.mxu0 %v1544
        %1584 = vmatprep.subr.mxu0 0.0
        %1585 = vmatpush1.msra.mxu0 %v1543
        %1586 = vmatprep.subr.mxu0 0.0
        %1587 = vmatpush1.msra.mxu0 %v1542
        %1588 = vmatprep.subr.mxu0 0.0
        %1589 = vmatpush1.msra.mxu0 %v1541
        %1590 = vmatprep.subr.mxu0 0.0
        %1591 = vmatpush1.msra.mxu0 %v1540
        %1592 = vmatprep.subr.mxu0 0.0
        %1593 = vmatpush1.msra.mxu0 %v1539
        %1594 = vmatprep.subr.mxu0 0.0
        %1595 = vmatpush2.msra.mxu0 0.0
        %1596 = vmatprep.subr.mxu0 0.0
        %1597 = vmatpush2.msra.mxu0 0.0
        %1598 = vmatprep.subr.mxu0 0.0
        %1599 = vmatpush2.msra.mxu0 0.0
        %1600 = vmatprep.subr.mxu0 0.0
        %1601 = vmatpush2.msra.mxu0 0.0
        %1602 = vmatprep.subr.mxu0 0.0
        %1603 = vmatpush2.msra.mxu0 0.0
        %1604 = vmatprep.subr.mxu0 0.0
        %1605 = vmatpush2.msra.mxu0 0.0
        %1606 = vmatprep.subr.mxu0 0.0
        %1607 = vmatpush2.msra.mxu0 0.0
        %1608 = vmatprep.subr.mxu0 0.0
        %1609 = vmatpush2.msra.mxu0 0.0
        %1610 = vmatprep.subr.mxu0 0.0
        %1611 = vmatpush2.msra.mxu0 0.0
        %1612 = vmatprep.subr.mxu0 0.0
        %1613 = vmatpush2.msra.mxu0 0.0
        %1614 = vmatprep.subr.mxu0 0.0
        %1615 = vmatpush2.msra.mxu0 0.0
        %1616 = vmatprep.subr.mxu0 0.0
        %1617 = vmatpush2.msra.mxu0 0.0
        %1618 = vmatprep.subr.mxu0 0.0
        %1619 = vmatpush2.msra.mxu0 0.0
        %1620 = vmatprep.subr.mxu0 0.0
        %1621 = vmatpush2.msra.mxu0 0.0
        %1622 = vmatprep.subr.mxu0 0.0
        %1623 = vmatpush2.msra.mxu0 0.0
        %1624 = vmatprep.subr.mxu0 0.0
        %1625 = vmatpush2.msra.mxu0 0.0
        %1626 = vmatprep.mubr.f32.mxu0 0.0
        %1627 = vmatmul.mubr.f32.gmra.mxu0 %v1538
        %v1628 = vpop.f32.mrf.mxu0
        %v1629 = vadd.f32 %v1560, %v1628
        %v1630 = vpop.f32.mrf.mxu0
        %1631 = vdwg.mxu0
        %v1632 = vmax.f32 %v1629, 0.0
        %v1633 = vld [vmem:[#allocation16] sm:$0xff]
        %v1634 = vld [vmem:[#allocation16 + $0x8] sm:$0xff]
        %v1635 = vld [vmem:[#allocation16 + $0x10] sm:$0xff]
        %v1636 = vld [vmem:[#allocation16 + $0x18] sm:$0xff]
        %v1637 = vld [vmem:[#allocation16 + $0x20] sm:$0xff]
        %v1638 = vld [vmem:[#allocation16 + $0x28] sm:$0xff]
        %v1639 = vld [vmem:[#allocation16 + $0x30] sm:$0xff]
        %v1640 = vld [vmem:[#allocation16 + $0x38] sm:$0xff]
        %v1641 = vld [vmem:[#allocation16 + $0x40] sm:$0xff]
        %v1642 = vld [vmem:[#allocation16 + $0x48] sm:$0xff]
        %v1643 = vld [vmem:[#allocation16 + $0x50] sm:$0xff]
        %v1644 = vld [vmem:[#allocation16 + $0x58] sm:$0xff]
        %v1645 = vld [vmem:[#allocation16 + $0x60] sm:$0xff]
        %v1646 = vld [vmem:[#allocation16 + $0x68] sm:$0xff]
        %v1647 = vld [vmem:[#allocation16 + $0x70] sm:$0xff]
        %v1648 = vld [vmem:[#allocation16 + $0x78] sm:$0xff]
        %v1649 = vld [vmem:[#allocation16 + $0x80] sm:$0xff]
        %v1650 = vld [vmem:[#allocation16 + $0x88] sm:$0xff]
        %v1651 = vld [vmem:[#allocation16 + $0x90] sm:$0xff]
        %v1652 = vld [vmem:[#allocation16 + $0x98] sm:$0xff]
        %v1653 = vld [vmem:[#allocation16 + $0xa0] sm:$0xff]
        %v1654 = vld [vmem:[#allocation16 + $0xa8] sm:$0xff]
        %v1655 = vld [vmem:[#allocation16 + $0xb0] sm:$0xff]
        %v1656 = vld [vmem:[#allocation16 + $0xb8] sm:$0xff]
        %v1657 = vld [vmem:[#allocation16 + $0xc0] sm:$0xff]
        %v1658 = vld [vmem:[#allocation16 + $0xc8] sm:$0xff]
        %v1659 = vld [vmem:[#allocation16 + $0xd0] sm:$0xff]
        %v1660 = vld [vmem:[#allocation16 + $0xd8] sm:$0xff]
        %v1661 = vld [vmem:[#allocation16 + $0xe0] sm:$0xff]
        %v1662 = vld [vmem:[#allocation16 + $0xe8] sm:$0xff]
        %v1663 = vld [vmem:[#allocation16 + $0xf0] sm:$0xff]
        %v1664 = vld [vmem:[#allocation16 + $0xf8] sm:$0xff]
        %v1665 = vld [vmem:[%s14] sm:$0x3]
        %v1667 = vlaneseq
        %v1668 = vshrl.u32 %v1667, 7
        %v1669 = vsub.s32 0, %v1668
        %v1670 = vrot.slane %v1665, %v1669
        %v1671 = vlaneseq
        %v1672 = vshrl.u32 %v1671, 7
        %v1673 = vsub.s32 1, %v1672
        %v1674 = vrot.slane %v1665, %v1673
        %1677 = vmatprep.subr.mxu0 %v1664
        %1678 = vmatpush1.msra.mxu0 %v1663
        %1679 = vmatprep.subr.mxu0 %v1662
        %1680 = vmatpush1.msra.mxu0 %v1661
        %1681 = vmatprep.subr.mxu0 %v1660
        %1682 = vmatpush1.msra.mxu0 %v1659
        %1683 = vmatprep.subr.mxu0 %v1658
        %1684 = vmatpush1.msra.mxu0 %v1657
        %1685 = vmatprep.subr.mxu0 %v1656
        %1686 = vmatpush1.msra.mxu0 %v1655
        %1687 = vmatprep.subr.mxu0 %v1654
        %1688 = vmatpush1.msra.mxu0 %v1653
        %1689 = vmatprep.subr.mxu0 %v1652
        %1690 = vmatpush1.msra.mxu0 %v1651
        %1691 = vmatprep.subr.mxu0 %v1650
        %1692 = vmatpush1.msra.mxu0 %v1649
        %1693 = vmatprep.subr.mxu0 %v1648
        %1694 = vmatpush1.msra.mxu0 %v1647
        %1695 = vmatprep.subr.mxu0 %v1646
        %1696 = vmatpush1.msra.mxu0 %v1645
        %1697 = vmatprep.subr.mxu0 %v1644
        %1698 = vmatpush1.msra.mxu0 %v1643
        %1699 = vmatprep.subr.mxu0 %v1642
        %1700 = vmatpush1.msra.mxu0 %v1641
        %1701 = vmatprep.subr.mxu0 %v1640
        %1702 = vmatpush1.msra.mxu0 %v1639
        %1703 = vmatprep.subr.mxu0 %v1638
        %1704 = vmatpush1.msra.mxu0 %v1637
        %1705 = vmatprep.subr.mxu0 %v1636
        %1706 = vmatpush1.msra.mxu0 %v1635
        %1707 = vmatprep.subr.mxu0 %v1634
        %1708 = vmatpush1.msra.mxu0 %v1633
        %1709 = vmatprep.subr.mxu0 0.0
        %1710 = vmatpush2.msra.mxu0 0.0
        %1711 = vmatprep.subr.mxu0 0.0
        %1712 = vmatpush2.msra.mxu0 0.0
        %1713 = vmatprep.subr.mxu0 0.0
        %1714 = vmatpush2.msra.mxu0 0.0
        %1715 = vmatprep.subr.mxu0 0.0
        %1716 = vmatpush2.msra.mxu0 0.0
        %1717 = vmatprep.subr.mxu0 0.0
        %1718 = vmatpush2.msra.mxu0 0.0
        %1719 = vmatprep.subr.mxu0 0.0
        %1720 = vmatpush2.msra.mxu0 0.0
        %1721 = vmatprep.subr.mxu0 0.0
        %1722 = vmatpush2.msra.mxu0 0.0
        %1723 = vmatprep.subr.mxu0 0.0
        %1724 = vmatpush2.msra.mxu0 0.0
        %1725 = vmatprep.subr.mxu0 0.0
        %1726 = vmatpush2.msra.mxu0 0.0
        %1727 = vmatprep.subr.mxu0 0.0
        %1728 = vmatpush2.msra.mxu0 0.0
        %1729 = vmatprep.subr.mxu0 0.0
        %1730 = vmatpush2.msra.mxu0 0.0
        %1731 = vmatprep.subr.mxu0 0.0
        %1732 = vmatpush2.msra.mxu0 0.0
        %1733 = vmatprep.subr.mxu0 0.0
        %1734 = vmatpush2.msra.mxu0 0.0
        %1735 = vmatprep.subr.mxu0 0.0
        %1736 = vmatpush2.msra.mxu0 0.0
        %1737 = vmatprep.subr.mxu0 0.0
        %1738 = vmatpush2.msra.mxu0 0.0
        %1739 = vmatprep.subr.mxu0 0.0
        %1740 = vmatpush2.msra.mxu0 0.0
        %1741 = vmatprep.mubr.f32.mxu0 0.0
        %1742 = vmatmul.mubr.f32.gmra.mxu0 %v1632
        %v1743 = vpop.f32.mrf.mxu0
        %v1744 = vadd.f32 %v1670, %v1743
        %v1745 = vpop.f32.mrf.mxu0
        %v1746 = vadd.f32 %v1674, %v1745
        %1747 = vdwg.mxu0
        %v1748 = vsub.f32 %v1339, %v1744
        %v1749 = vmul.f32 %v1748, %v838
        %v1750 = vadd.f32 %v1340, %v1746
        %v1751 = vld [vmem:[#allocation17] sm:$0xff]
        %v1752 = vld [vmem:[#allocation17 + $0x8] sm:$0xff]
        %v1753 = vld [vmem:[#allocation17 + $0x10] sm:$0xff]
        %v1754 = vld [vmem:[#allocation17 + $0x18] sm:$0xff]
        %v1755 = vld [vmem:[#allocation17 + $0x20] sm:$0xff]
        %v1756 = vld [vmem:[#allocation17 + $0x28] sm:$0xff]
        %v1757 = vld [vmem:[#allocation17 + $0x30] sm:$0xff]
        %v1758 = vld [vmem:[#allocation17 + $0x38] sm:$0xff]
        %v1759 = vld [vmem:[#allocation17 + $0x40] sm:$0xff]
        %v1760 = vld [vmem:[#allocation17 + $0x48] sm:$0xff]
        %v1761 = vld [vmem:[#allocation17 + $0x50] sm:$0xff]
        %v1762 = vld [vmem:[#allocation17 + $0x58] sm:$0xff]
        %v1763 = vld [vmem:[#allocation17 + $0x60] sm:$0xff]
        %v1764 = vld [vmem:[#allocation17 + $0x68] sm:$0xff]
        %v1765 = vld [vmem:[#allocation17 + $0x70] sm:$0xff]
        %v1766 = vld [vmem:[#allocation17 + $0x78] sm:$0xff]
        %v1767 = vld [vmem:[%s16] sm:$0x1]
        %v1769 = vlaneseq
        %v1770 = vshrl.u32 %v1769, 7
        %v1771 = vsub.s32 0, %v1770
        %v1772 = vrot.slane %v1767, %v1771
        %1774 = vmatprep.subr.mxu0 0.0
        %1775 = vmatpush1.msra.mxu0 %v1766
        %1776 = vmatprep.subr.mxu0 0.0
        %1777 = vmatpush1.msra.mxu0 %v1765
        %1778 = vmatprep.subr.mxu0 0.0
        %1779 = vmatpush1.msra.mxu0 %v1764
        %1780 = vmatprep.subr.mxu0 0.0
        %1781 = vmatpush1.msra.mxu0 %v1763
        %1782 = vmatprep.subr.mxu0 0.0
        %1783 = vmatpush1.msra.mxu0 %v1762
        %1784 = vmatprep.subr.mxu0 0.0
        %1785 = vmatpush1.msra.mxu0 %v1761
        %1786 = vmatprep.subr.mxu0 0.0
        %1787 = vmatpush1.msra.mxu0 %v1760
        %1788 = vmatprep.subr.mxu0 0.0
        %1789 = vmatpush1.msra.mxu0 %v1759
        %1790 = vmatprep.subr.mxu0 0.0
        %1791 = vmatpush1.msra.mxu0 %v1758
        %1792 = vmatprep.subr.mxu0 0.0
        %1793 = vmatpush1.msra.mxu0 %v1757
        %1794 = vmatprep.subr.mxu0 0.0
        %1795 = vmatpush1.msra.mxu0 %v1756
        %1796 = vmatprep.subr.mxu0 0.0
        %1797 = vmatpush1.msra.mxu0 %v1755
        %1798 = vmatprep.subr.mxu0 0.0
        %1799 = vmatpush1.msra.mxu0 %v1754
        %1800 = vmatprep.subr.mxu0 0.0
        %1801 = vmatpush1.msra.mxu0 %v1753
        %1802 = vmatprep.subr.mxu0 0.0
        %1803 = vmatpush1.msra.mxu0 %v1752
        %1804 = vmatprep.subr.mxu0 0.0
        %1805 = vmatpush1.msra.mxu0 %v1751
        %1806 = vmatprep.subr.mxu0 0.0
        %1807 = vmatpush2.msra.mxu0 0.0
        %1808 = vmatprep.subr.mxu0 0.0
        %1809 = vmatpush2.msra.mxu0 0.0
        %1810 = vmatprep.subr.mxu0 0.0
        %1811 = vmatpush2.msra.mxu0 0.0
        %1812 = vmatprep.subr.mxu0 0.0
        %1813 = vmatpush2.msra.mxu0 0.0
        %1814 = vmatprep.subr.mxu0 0.0
        %1815 = vmatpush2.msra.mxu0 0.0
        %1816 = vmatprep.subr.mxu0 0.0
        %1817 = vmatpush2.msra.mxu0 0.0
        %1818 = vmatprep.subr.mxu0 0.0
        %1819 = vmatpush2.msra.mxu0 0.0
        %1820 = vmatprep.subr.mxu0 0.0
        %1821 = vmatpush2.msra.mxu0 0.0
        %1822 = vmatprep.subr.mxu0 0.0
        %1823 = vmatpush2.msra.mxu0 0.0
        %1824 = vmatprep.subr.mxu0 0.0
        %1825 = vmatpush2.msra.mxu0 0.0
        %1826 = vmatprep.subr.mxu0 0.0
        %1827 = vmatpush2.msra.mxu0 0.0
        %1828 = vmatprep.subr.mxu0 0.0
        %1829 = vmatpush2.msra.mxu0 0.0
        %1830 = vmatprep.subr.mxu0 0.0
        %1831 = vmatpush2.msra.mxu0 0.0
        %1832 = vmatprep.subr.mxu0 0.0
        %1833 = vmatpush2.msra.mxu0 0.0
        %1834 = vmatprep.subr.mxu0 0.0
        %1835 = vmatpush2.msra.mxu0 0.0
        %1836 = vmatprep.subr.mxu0 0.0
        %1837 = vmatpush2.msra.mxu0 0.0
        %1838 = vmatprep.mubr.f32.mxu0 0.0
        %1839 = vmatmul.mubr.f32.gmra.mxu0 %v1749
        %v1840 = vpop.f32.mrf.mxu0
        %v1841 = vadd.f32 %v1772, %v1840
        %v1842 = vpop.f32.mrf.mxu0
        %1843 = vdwg.mxu0
        %v1844 = vmax.f32 %v1841, 0.0
        %v1845 = vld [vmem:[#allocation19] sm:$0xff]
        %v1846 = vld [vmem:[#allocation19 + $0x8] sm:$0xff]
        %v1847 = vld [vmem:[#allocation19 + $0x10] sm:$0xff]
        %v1848 = vld [vmem:[#allocation19 + $0x18] sm:$0xff]
        %v1849 = vld [vmem:[#allocation19 + $0x20] sm:$0xff]
        %v1850 = vld [vmem:[#allocation19 + $0x28] sm:$0xff]
        %v1851 = vld [vmem:[#allocation19 + $0x30] sm:$0xff]
        %v1852 = vld [vmem:[#allocation19 + $0x38] sm:$0xff]
        %v1853 = vld [vmem:[#allocation19 + $0x40] sm:$0xff]
        %v1854 = vld [vmem:[#allocation19 + $0x48] sm:$0xff]
        %v1855 = vld [vmem:[#allocation19 + $0x50] sm:$0xff]
        %v1856 = vld [vmem:[#allocation19 + $0x58] sm:$0xff]
        %v1857 = vld [vmem:[#allocation19 + $0x60] sm:$0xff]
        %v1858 = vld [vmem:[#allocation19 + $0x68] sm:$0xff]
        %v1859 = vld [vmem:[#allocation19 + $0x70] sm:$0xff]
        %v1860 = vld [vmem:[#allocation19 + $0x78] sm:$0xff]
        %v1861 = vld [vmem:[%s18] sm:$0x1]
        %v1863 = vlaneseq
        %v1864 = vshrl.u32 %v1863, 7
        %v1865 = vsub.s32 0, %v1864
        %v1866 = vrot.slane %v1861, %v1865
        %1868 = vmatprep.subr.mxu0 0.0
        %1869 = vmatpush1.msra.mxu0 %v1860
        %1870 = vmatprep.subr.mxu0 0.0
        %1871 = vmatpush1.msra.mxu0 %v1859
        %1872 = vmatprep.subr.mxu0 0.0
        %1873 = vmatpush1.msra.mxu0 %v1858
        %1874 = vmatprep.subr.mxu0 0.0
        %1875 = vmatpush1.msra.mxu0 %v1857
        %1876 = vmatprep.subr.mxu0 0.0
        %1877 = vmatpush1.msra.mxu0 %v1856
        %1878 = vmatprep.subr.mxu0 0.0
        %1879 = vmatpush1.msra.mxu0 %v1855
        %1880 = vmatprep.subr.mxu0 0.0
        %1881 = vmatpush1.msra.mxu0 %v1854
        %1882 = vmatprep.subr.mxu0 0.0
        %1883 = vmatpush1.msra.mxu0 %v1853
        %1884 = vmatprep.subr.mxu0 0.0
        %1885 = vmatpush1.msra.mxu0 %v1852
        %1886 = vmatprep.subr.mxu0 0.0
        %1887 = vmatpush1.msra.mxu0 %v1851
        %1888 = vmatprep.subr.mxu0 0.0
        %1889 = vmatpush1.msra.mxu0 %v1850
        %1890 = vmatprep.subr.mxu0 0.0
        %1891 = vmatpush1.msra.mxu0 %v1849
        %1892 = vmatprep.subr.mxu0 0.0
        %1893 = vmatpush1.msra.mxu0 %v1848
        %1894 = vmatprep.subr.mxu0 0.0
        %1895 = vmatpush1.msra.mxu0 %v1847
        %1896 = vmatprep.subr.mxu0 0.0
        %1897 = vmatpush1.msra.mxu0 %v1846
        %1898 = vmatprep.subr.mxu0 0.0
        %1899 = vmatpush1.msra.mxu0 %v1845
        %1900 = vmatprep.subr.mxu0 0.0
        %1901 = vmatpush2.msra.mxu0 0.0
        %1902 = vmatprep.subr.mxu0 0.0
        %1903 = vmatpush2.msra.mxu0 0.0
        %1904 = vmatprep.subr.mxu0 0.0
        %1905 = vmatpush2.msra.mxu0 0.0
        %1906 = vmatprep.subr.mxu0 0.0
        %1907 = vmatpush2.msra.mxu0 0.0
        %1908 = vmatprep.subr.mxu0 0.0
        %1909 = vmatpush2.msra.mxu0 0.0
        %1910 = vmatprep.subr.mxu0 0.0
        %1911 = vmatpush2.msra.mxu0 0.0
        %1912 = vmatprep.subr.mxu0 0.0
        %1913 = vmatpush2.msra.mxu0 0.0
        %1914 = vmatprep.subr.mxu0 0.0
        %1915 = vmatpush2.msra.mxu0 0.0
        %1916 = vmatprep.subr.mxu0 0.0
        %1917 = vmatpush2.msra.mxu0 0.0
        %1918 = vmatprep.subr.mxu0 0.0
        %1919 = vmatpush2.msra.mxu0 0.0
        %1920 = vmatprep.subr.mxu0 0.0
        %1921 = vmatpush2.msra.mxu0 0.0
        %1922 = vmatprep.subr.mxu0 0.0
        %1923 = vmatpush2.msra.mxu0 0.0
        %1924 = vmatprep.subr.mxu0 0.0
        %1925 = vmatpush2.msra.mxu0 0.0
        %1926 = vmatprep.subr.mxu0 0.0
        %1927 = vmatpush2.msra.mxu0 0.0
        %1928 = vmatprep.subr.mxu0 0.0
        %1929 = vmatpush2.msra.mxu0 0.0
        %1930 = vmatprep.subr.mxu0 0.0
        %1931 = vmatpush2.msra.mxu0 0.0
        %1932 = vmatprep.mubr.f32.mxu0 0.0
        %1933 = vmatmul.mubr.f32.gmra.mxu0 %v1844
        %v1934 = vpop.f32.mrf.mxu0
        %v1935 = vadd.f32 %v1866, %v1934
        %v1936 = vpop.f32.mrf.mxu0
        %1937 = vdwg.mxu0
        %v1938 = vmax.f32 %v1935, 0.0
        %v1939 = vld [vmem:[#allocation20] sm:$0xff]
        %v1940 = vld [vmem:[#allocation20 + $0x8] sm:$0xff]
        %v1941 = vld [vmem:[#allocation20 + $0x10] sm:$0xff]
        %v1942 = vld [vmem:[#allocation20 + $0x18] sm:$0xff]
        %v1943 = vld [vmem:[#allocation20 + $0x20] sm:$0xff]
        %v1944 = vld [vmem:[#allocation20 + $0x28] sm:$0xff]
        %v1945 = vld [vmem:[#allocation20 + $0x30] sm:$0xff]
        %v1946 = vld [vmem:[#allocation20 + $0x38] sm:$0xff]
        %v1947 = vld [vmem:[#allocation20 + $0x40] sm:$0xff]
        %v1948 = vld [vmem:[#allocation20 + $0x48] sm:$0xff]
        %v1949 = vld [vmem:[#allocation20 + $0x50] sm:$0xff]
        %v1950 = vld [vmem:[#allocation20 + $0x58] sm:$0xff]
        %v1951 = vld [vmem:[#allocation20 + $0x60] sm:$0xff]
        %v1952 = vld [vmem:[#allocation20 + $0x68] sm:$0xff]
        %v1953 = vld [vmem:[#allocation20 + $0x70] sm:$0xff]
        %v1954 = vld [vmem:[#allocation20 + $0x78] sm:$0xff]
        %v1955 = vld [vmem:[#allocation20 + $0x80] sm:$0xff]
        %v1956 = vld [vmem:[#allocation20 + $0x88] sm:$0xff]
        %v1957 = vld [vmem:[#allocation20 + $0x90] sm:$0xff]
        %v1958 = vld [vmem:[#allocation20 + $0x98] sm:$0xff]
        %v1959 = vld [vmem:[#allocation20 + $0xa0] sm:$0xff]
        %v1960 = vld [vmem:[#allocation20 + $0xa8] sm:$0xff]
        %v1961 = vld [vmem:[#allocation20 + $0xb0] sm:$0xff]
        %v1962 = vld [vmem:[#allocation20 + $0xb8] sm:$0xff]
        %v1963 = vld [vmem:[#allocation20 + $0xc0] sm:$0xff]
        %v1964 = vld [vmem:[#allocation20 + $0xc8] sm:$0xff]
        %v1965 = vld [vmem:[#allocation20 + $0xd0] sm:$0xff]
        %v1966 = vld [vmem:[#allocation20 + $0xd8] sm:$0xff]
        %v1967 = vld [vmem:[#allocation20 + $0xe0] sm:$0xff]
        %v1968 = vld [vmem:[#allocation20 + $0xe8] sm:$0xff]
        %v1969 = vld [vmem:[#allocation20 + $0xf0] sm:$0xff]
        %v1970 = vld [vmem:[#allocation20 + $0xf8] sm:$0xff]
        %v1971 = vld [vmem:[%s20] sm:$0x3]
        %v1973 = vlaneseq
        %v1974 = vshrl.u32 %v1973, 7
        %v1975 = vsub.s32 1, %v1974
        %v1976 = vrot.slane %v1971, %v1975
        %1978 = vmatprep.subr.mxu0 %v1970
        %1979 = vmatpush1.msra.mxu0 %v1969
        %1980 = vmatprep.subr.mxu0 %v1968
        %1981 = vmatpush1.msra.mxu0 %v1967
        %1982 = vmatprep.subr.mxu0 %v1966
        %1983 = vmatpush1.msra.mxu0 %v1965
        %1984 = vmatprep.subr.mxu0 %v1964
        %1985 = vmatpush1.msra.mxu0 %v1963
        %1986 = vmatprep.subr.mxu0 %v1962
        %1987 = vmatpush1.msra.mxu0 %v1961
        %1988 = vmatprep.subr.mxu0 %v1960
        %1989 = vmatpush1.msra.mxu0 %v1959
        %1990 = vmatprep.subr.mxu0 %v1958
        %1991 = vmatpush1.msra.mxu0 %v1957
        %1992 = vmatprep.subr.mxu0 %v1956
        %1993 = vmatpush1.msra.mxu0 %v1955
        %1994 = vmatprep.subr.mxu0 %v1954
        %1995 = vmatpush1.msra.mxu0 %v1953
        %1996 = vmatprep.subr.mxu0 %v1952
        %1997 = vmatpush1.msra.mxu0 %v1951
        %1998 = vmatprep.subr.mxu0 %v1950
        %1999 = vmatpush1.msra.mxu0 %v1949
        %2000 = vmatprep.subr.mxu0 %v1948
        %2001 = vmatpush1.msra.mxu0 %v1947
        %2002 = vmatprep.subr.mxu0 %v1946
        %2003 = vmatpush1.msra.mxu0 %v1945
        %2004 = vmatprep.subr.mxu0 %v1944
        %2005 = vmatpush1.msra.mxu0 %v1943
        %2006 = vmatprep.subr.mxu0 %v1942
        %2007 = vmatpush1.msra.mxu0 %v1941
        %2008 = vmatprep.subr.mxu0 %v1940
        %2009 = vmatpush1.msra.mxu0 %v1939
        %2010 = vmatprep.subr.mxu0 0.0
        %2011 = vmatpush2.msra.mxu0 0.0
        %2012 = vmatprep.subr.mxu0 0.0
        %2013 = vmatpush2.msra.mxu0 0.0
        %2014 = vmatprep.subr.mxu0 0.0
        %2015 = vmatpush2.msra.mxu0 0.0
        %2016 = vmatprep.subr.mxu0 0.0
        %2017 = vmatpush2.msra.mxu0 0.0
        %2018 = vmatprep.subr.mxu0 0.0
        %2019 = vmatpush2.msra.mxu0 0.0
        %2020 = vmatprep.subr.mxu0 0.0
        %2021 = vmatpush2.msra.mxu0 0.0
        %2022 = vmatprep.subr.mxu0 0.0
        %2023 = vmatpush2.msra.mxu0 0.0
        %2024 = vmatprep.subr.mxu0 0.0
        %2025 = vmatpush2.msra.mxu0 0.0
        %2026 = vmatprep.subr.mxu0 0.0
        %2027 = vmatpush2.msra.mxu0 0.0
        %2028 = vmatprep.subr.mxu0 0.0
        %2029 = vmatpush2.msra.mxu0 0.0
        %2030 = vmatprep.subr.mxu0 0.0
        %2031 = vmatpush2.msra.mxu0 0.0
        %2032 = vmatprep.subr.mxu0 0.0
        %2033 = vmatpush2.msra.mxu0 0.0
        %2034 = vmatprep.subr.mxu0 0.0
        %2035 = vmatpush2.msra.mxu0 0.0
        %2036 = vmatprep.subr.mxu0 0.0
        %2037 = vmatpush2.msra.mxu0 0.0
        %2038 = vmatprep.subr.mxu0 0.0
        %2039 = vmatpush2.msra.mxu0 0.0
        %2040 = vmatprep.subr.mxu0 0.0
        %2041 = vmatpush2.msra.mxu0 0.0
        %2042 = vmatprep.mubr.f32.mxu0 0.0
        %2043 = vmatmul.mubr.f32.gmra.mxu0 %v1938
        %v2044 = vpop.f32.mrf.mxu0
        %v2045 = vpop.f32.mrf.mxu0
        %v2046 = vadd.f32 %v1976, %v2045
        %2047 = vdwg.mxu0
        %v2048 = vadd.f32 %v1750, %v2046
        %2049 = vst [vmem:[%s831] sm:$0xff] %v2048
        %s2050 = sand.u32 %s498, 1
        %s2051 = scalar_lea.sflag [#allocation4], %s2050
        %s2052 = sand.u32 %s498, 1
        %s2053 = smul.addr %s2052, 8
        %s2054 = scalar_lea.vmem [#allocation22], %s2053
        // Predicated region
        $region153: #{tpu_custom_call.1} parent=103 // pred_check
          %p2055 = pneg %p508
        $region154: #{tpu_custom_call.1} parent=103 // pred_check_branch
          %2057 = sbr.rel (%p2055) target = $region156
        $region155: #{tpu_custom_call.1} parent=103 // pred_region
          %s2059 = ssub.s32 128, 128
          %2060 = vsyncadd %s2051, %s2059
          %s2061 = smul.addr %s44, 128
          %s2062 = scalar_lea.hbm %s21, %s2061
          %s2064 = sshll.u32 %s2054, 4
          %s2065 = int_to_ptr.vmem [resolvable:$true] %s2064
          %2067 = dma.vmem_to_hbm [thread:$0]  %s2065, 128, %s2062, %s2051
        $region156: #{tpu_custom_call.1} parent=103 // pred_fallthru
          _
      $region104: #{tpu_custom_call.1} parent=5 // pred_fallthru
        _
      %p2068 = scmp.le.s32.totalorder 2, %s39
      // Predicated region
      $region157: #{tpu_custom_call.1} parent=5 // pred_check
        %p2069 = pneg %p2068
      $region158: #{tpu_custom_call.1} parent=5 // pred_check_branch
        %2071 = sbr.rel (%p2069) target = $region160
      $region159: #{tpu_custom_call.1} parent=5 // pred_region
        %s2072 = ssub.s32 %s39, 2
        // Predicated region
        $region161: #{tpu_custom_call.1} parent=159 // pred_check
          %p2073 = pneg %p514
        $region162: #{tpu_custom_call.1} parent=159 // pred_check_branch
          %2075 = sbr.rel (%p2073) target = $region164
        $region163: #{tpu_custom_call.1} parent=159 // pred_region
          %s2076 = sand.u32 %s499, 1
          %s2077 = scalar_lea.sflag [#allocation4], %s2076
          %s2078 = sand.u32 %s499, 1
          %s2079 = smul.addr %s2078, 8
          %s2080 = scalar_lea.vmem [#allocation22], %s2079
          %2081 = dma.done %s2077, 128
        $region164: #{tpu_custom_call.1} parent=159 // pred_fallthru
          _
      $region160: #{tpu_custom_call.1} parent=5 // pred_fallthru
        _
    $region6: #{tpu_custom_call.1} parent=1 // loop_footer
      %s43 = sadd.s32 1, %s39
    $region7: #{tpu_custom_call.1} parent=1 // loop_footer_branch
      %38 = sbr.rel target = $region3
    $region8: #{tpu_custom_call.1} parent=1 // loop_exit
      _
    %2082 = vsyncpa [#allocation3], 1
    %s2083 = scalar_lea.sflag [#allocation3], 1
    %2084 = vsyncpa %s2083, 1
    %2085 = vsyncpa [#allocation6], 1
    %2086 = vsyncpa [#allocation9], 1
    %2087 = vsyncpa [#allocation12], 1
    %2088 = vsyncpa [#allocation15], 1
    %2089 = vsyncpa [#allocation18], 1
    %2090 = vsyncpa [#allocation21], 1
    %2091 = vsyncpa [#allocation4], 1
    %s2092 = scalar_lea.sflag [#allocation4], 1
    %2093 = vsyncpa %s2092, 1

// kernel: tpu_custom_call.1
$region0: #{tpu_custom_call.1}
  #allocation0 [shape = 'u32[]', space=smem, size = 0x4, offset = 0x4, fixed_abs, tag = 'smem constant byte address 0x4 - core index']
  #allocation1 [shape = 'u32[144,128]{1,0:T(1,128)}', space=vmem, size = 0x12000, scoped, tag = 'internal scratch']
  %s0 = inlined_call_operand.hbm [shape: f32[16,128], index: 0, kind: input, shape index: {}]
  %s1 = inlined_call_operand.hbm [shape: f32[128,384], index: 1, kind: input, shape index: {}]
  %s2 = inlined_call_operand.hbm [shape: f32[128,128], index: 2, kind: input, shape index: {}]
  %s3 = inlined_call_operand.vmem [shape: f32[1,128], index: 3, kind: input, shape index: {}]
  %s4 = inlined_call_operand.hbm [shape: f32[128,128], index: 4, kind: input, shape index: {}]
  %s5 = inlined_call_operand.vmem [shape: f32[1,128], index: 5, kind: input, shape index: {}]
  %s6 = inlined_call_operand.hbm [shape: f32[128,256], index: 6, kind: input, shape index: {}]
  %s7 = inlined_call_operand.vmem [shape: f32[1,256], index: 7, kind: input, shape index: {}]
  %s8 = inlined_call_operand.hbm [shape: f32[128,256], index: 8, kind: input, shape index: {}]
  %s9 = inlined_call_operand.hbm [shape: f32[128,128], index: 9, kind: input, shape index: {}]
  %s10 = inlined_call_operand.vmem [shape: f32[1,128], index: 10, kind: input, shape index: {}]
  %s11 = inlined_call_operand.hbm [shape: f32[128,128], index: 11, kind: input, shape index: {}]
  %s12 = inlined_call_operand.vmem [shape: f32[1,128], index: 12, kind: input, shape index: {}]
  %s13 = inlined_call_operand.hbm [shape: f32[128,256], index: 13, kind: input, shape index: {}]
  %s14 = inlined_call_operand.vmem [shape: f32[1,256], index: 14, kind: input, shape index: {}]
  %s15 = inlined_call_operand.hbm [shape: f32[128,128], index: 15, kind: input, shape index: {}]
  %s16 = inlined_call_operand.vmem [shape: f32[1,128], index: 16, kind: input, shape index: {}]
  %s17 = inlined_call_operand.hbm [shape: f32[128,128], index: 17, kind: input, shape index: {}]
  %s18 = inlined_call_operand.vmem [shape: f32[1,128], index: 18, kind: input, shape index: {}]
  %s19 = inlined_call_operand.hbm [shape: f32[128,256], index: 19, kind: input, shape index: {}]
  %s20 = inlined_call_operand.vmem [shape: f32[1,256], index: 20, kind: input, shape index: {}]
  %s21 = inlined_call_operand.hbm [shape: f32[16,128], index: 21, kind: output, shape index: {}]
  %s22 = sld [smem:[#allocation0]]
  $region165: #{tpu_custom_call.1} parent=0
    _
  %s24 = ssub.s32 1, %s22
  %s25 = scalar_select 0, %s24, %s22
  $region1: #{tpu_custom_call.1} parent=0
    #allocation2 [shape = 'u8[8192]{0}', space=vmem, size = 0x2000, scoped, tag = 'input window, operand 0']
    #allocation3 [shape = 's32[2]{0}', space=sflag, size = 0x8, scoped, tag = 'scoped memory for tpu_custom_call.1']
    #allocation4 [shape = 's32[2]{0}', space=sflag, size = 0x8, scoped, tag = 'scoped memory for tpu_custom_call.1']
    #allocation5 [shape = 'u8[196608]{0}', space=vmem, size = 0x30000, scoped, tag = 'input window, operand 1, single buffered']
    #allocation6 [shape = 's32[1]{0}', space=sflag, size = 0x4, scoped, tag = 'scoped memory for tpu_custom_call.1']
    #allocation7 [shape = 'u8[65536]{0}', space=vmem, size = 0x10000, scoped, tag = 'input window, operand 2, single buffered']
    #allocation8 [shape = 'u8[65536]{0}', space=vmem, size = 0x10000, scoped, tag = 'input window, operand 4, single buffered']
    #allocation9 [shape = 's32[1]{0}', space=sflag, size = 0x4, scoped, tag = 'scoped memory for tpu_custom_call.1']
    #allocation10 [shape = 'u8[131072]{0}', space=vmem, size = 0x20000, scoped, tag = 'input window, operand 6, single buffered']
    #allocation11 [shape = 'u8[131072]{0}', space=vmem, size = 0x20000, scoped, tag = 'input window, operand 8, single buffered']
    #allocation12 [shape = 's32[1]{0}', space=sflag, size = 0x4, scoped, tag = 'scoped memory for tpu_custom_call.1']
    #allocation13 [shape = 'u8[65536]{0}', space=vmem, size = 0x10000, scoped, tag = 'input window, operand 9, single buffered']
    #allocation14 [shape = 'u8[65536]{0}', space=vmem, size = 0x10000, scoped, tag = 'input window, operand 11, single buffered']
    #allocation15 [shape = 's32[1]{0}', space=sflag, size = 0x4, scoped, tag = 'scoped memory for tpu_custom_call.1']
    #allocation16 [shape = 'u8[131072]{0}', space=vmem, size = 0x20000, scoped, tag = 'input window, operand 13, single buffered']
    #allocation17 [shape = 'u8[65536]{0}', space=vmem, size = 0x10000, scoped, tag = 'input window, operand 15, single buffered']
    #allocation18 [shape = 's32[1]{0}', space=sflag, size = 0x4, scoped, tag = 'scoped memory for tpu_custom_call.1']
    #allocation19 [shape = 'u8[65536]{0}', space=vmem, size = 0x10000, scoped, tag = 'input window, operand 17, single buffered']
    #allocation20 [shape = 'u8[131072]{0}', space=vmem, size = 0x20000, scoped, tag = 'input window, operand 19, single buffered']
    #allocation21 [shape = 's32[1]{0}', space=sflag, size = 0x4, scoped, tag = 'scoped memory for tpu_custom_call.1']
    #allocation22 [shape = 'u8[8192]{0}', space=vmem, size = 0x2000, scoped, tag = 'output window, operand 0']
    %26 = vsyncpa [#allocation3], 0
    %s27 = scalar_lea.sflag [#allocation3], 1
    %28 = vsyncpa %s27, 0
    %29 = vsyncpa [#allocation6], 0
    %30 = vsyncpa [#allocation9], 0
    %31 = vsyncpa [#allocation12], 0
    %32 = vsyncpa [#allocation15], 0
    %33 = vsyncpa [#allocation18], 0
    %34 = vsyncpa [#allocation21], 0
    %35 = vsyncpa [#allocation4], 0
    %s36 = scalar_lea.sflag [#allocation4], 1
    %37 = vsyncpa %s36, 0
    loop: start=0, step=1, limit=4
    $region2: #{tpu_custom_call.1} parent=1 // loop_pre_header
      _
    $region3: #{tpu_custom_call.1} parent=1 // loop_header
      %s39 = sphi 0, %s43
      %p40 = scmp.ge.s32.totalorder %s39, 4
      %s49 = sphi 0, %s51
      %s52 = sphi 0, %s49
      %s53 = sphi 0, %s52
      %s69 = sphi 0, %s53
      %s73 = sphi 0, %s73
      %s75 = sphi 0, %s73
      %s76 = sphi 0, %s75
      %s90 = sphi 0, %s76
      %s94 = sphi 0, %s94
      %s96 = sphi 0, %s94
      %s97 = sphi 0, %s96
      %s111 = sphi 0, %s97
      %s115 = sphi 0, %s115
      %s117 = sphi 0, %s115
      %s118 = sphi 0, %s117
      %s132 = sphi 0, %s118
      %s136 = sphi 0, %s136
      %s138 = sphi 0, %s136
      %s139 = sphi 0, %s138
      %s153 = sphi 0, %s139
      %s157 = sphi 0, %s157
      %s159 = sphi 0, %s157
      %s160 = sphi 0, %s159
      %s174 = sphi 0, %s160
      %s178 = sphi 0, %s178
      %s180 = sphi 0, %s178
      %s181 = sphi 0, %s180
      %s195 = sphi 0, %s181
      %s199 = sphi 0, %s199
      %s201 = sphi 0, %s199
      %s202 = sphi 0, %s201
      %s216 = sphi 0, %s202
      %s220 = sphi 0, %s220
      %s222 = sphi 0, %s220
      %s223 = sphi 0, %s222
      %s237 = sphi 0, %s223
      %s241 = sphi 0, %s241
      %s243 = sphi 0, %s241
      %s244 = sphi 0, %s243
      %s258 = sphi 0, %s244
      %s262 = sphi 0, %s262
      %s264 = sphi 0, %s262
      %s265 = sphi 0, %s264
      %s279 = sphi 0, %s265
      %s283 = sphi 0, %s283
      %s285 = sphi 0, %s283
      %s286 = sphi 0, %s285
      %s300 = sphi 0, %s286
      %s304 = sphi 0, %s304
      %s306 = sphi 0, %s304
      %s307 = sphi 0, %s306
      %s321 = sphi 0, %s307
      %s325 = sphi 0, %s325
      %s327 = sphi 0, %s325
      %s328 = sphi 0, %s327
      %s342 = sphi 0, %s328
      %s346 = sphi 0, %s346
      %s348 = sphi 0, %s346
      %s349 = sphi 0, %s348
      %s363 = sphi 0, %s349
      %s367 = sphi 0, %s367
      %s369 = sphi 0, %s367
      %s370 = sphi 0, %s369
      %s384 = sphi 0, %s370
      %s388 = sphi 0, %s388
      %s390 = sphi 0, %s388
      %s391 = sphi 0, %s390
      %s405 = sphi 0, %s391
      %s409 = sphi 0, %s409
      %s411 = sphi 0, %s409
      %s412 = sphi 0, %s411
      %s426 = sphi 0, %s412
      %s430 = sphi 0, %s430
      %s432 = sphi 0, %s430
      %s433 = sphi 0, %s432
      %s447 = sphi 0, %s433
      %s451 = sphi 0, %s451
      %s453 = sphi 0, %s451
      %s454 = sphi 0, %s453
      %s468 = sphi 0, %s454
      %s472 = sphi 0, %s472
      %s474 = sphi 0, %s472
      %s475 = sphi 0, %s474
      %s489 = sphi 0, %s475
      %s495 = sphi 0, %s497
      %s498 = sphi 0, %s495
      %s499 = sphi 0, %s498
      %s515 = sphi 0, %s499
    $region4: #{tpu_custom_call.1} parent=1 // loop_header_branch
      %42 = sbr.rel (%p40) target = $region8
    $region5: #{tpu_custom_call.1} parent=1 // loop_body
      %s44 = ssub.s32 %s39, 1
      %s45 = ssub.s32 %s39, 2
      %s46 = sadd.s32 %s39, 1
      %s47 = ssub.s32 %s39, %s46
      %p48 = scmp.eq.s32.totalorder %s47, 0
      %s50 = sadd.s32 %s49, 1
      %s51 = scalar_select %p48, %s49, %s50
      %p54 = pneg %p48
      %p55 = scmp.eq.s32.totalorder %s39, 1
      %p56 = por %p54, %p55
      %p57 = scmp.ne.s32.totalorder %s49, %s52
      %p58 = scmp.eq.s32.totalorder %s39, 0
      %p59 = por %p57, %p58
      %p60 = scmp.ne.s32.totalorder %s49, %s52
      %p61 = scmp.eq.s32.totalorder %s44, 1
      %p62 = por %p60, %p61
      %p63 = scmp.ne.s32.totalorder %s52, %s53
      %p64 = scmp.eq.s32.totalorder %s44, 0
      %p65 = por %p63, %p64
      %p66 = scmp.ne.s32.totalorder %s52, %s53
      %p67 = scmp.eq.s32.totalorder %s45, 1
      %p68 = por %p66, %p67
      %p70 = scmp.ne.s32.totalorder %s53, %s69
      %p71 = scmp.eq.s32.totalorder %s45, 0
      %p72 = por %p70, %p71
      %s74 = sadd.s32 %s73, 1
      %p77 = scmp.eq.s32.totalorder %s39, 1
      %p78 = scmp.ne.s32.totalorder %s73, %s75
      %p79 = scmp.eq.s32.totalorder %s39, 0
      %p80 = por %p78, %p79
      %p81 = scmp.ne.s32.totalorder %s73, %s75
      %p82 = scmp.eq.s32.totalorder %s44, 1
      %p83 = por %p81, %p82
      %p84 = scmp.ne.s32.totalorder %s75, %s76
      %p85 = scmp.eq.s32.totalorder %s44, 0
      %p86 = por %p84, %p85
      %p87 = scmp.ne.s32.totalorder %s75, %s76
      %p88 = scmp.eq.s32.totalorder %s45, 1
      %p89 = por %p87, %p88
      %p91 = scmp.ne.s32.totalorder %s76, %s90
      %p92 = scmp.eq.s32.totalorder %s45, 0
      %p93 = por %p91, %p92
      %s95 = sadd.s32 %s94, 1
      %p98 = scmp.eq.s32.totalorder %s39, 1
      %p99 = scmp.ne.s32.totalorder %s94, %s96
      %p100 = scmp.eq.s32.totalorder %s39, 0
      %p101 = por %p99, %p100
      %p102 = scmp.ne.s32.totalorder %s94, %s96
      %p103 = scmp.eq.s32.totalorder %s44, 1
      %p104 = por %p102, %p103
      %p105 = scmp.ne.s32.totalorder %s96, %s97
      %p106 = scmp.eq.s32.totalorder %s44, 0
      %p107 = por %p105, %p106
      %p108 = scmp.ne.s32.totalorder %s96, %s97
      %p109 = scmp.eq.s32.totalorder %s45, 1
      %p110 = por %p108, %p109
      %p112 = scmp.ne.s32.totalorder %s97, %s111
      %p113 = scmp.eq.s32.totalorder %s45, 0
      %p114 = por %p112, %p113
      %s116 = sadd.s32 %s115, 1
      %p119 = scmp.eq.s32.totalorder %s39, 1
      %p120 = scmp.ne.s32.totalorder %s115, %s117
      %p121 = scmp.eq.s32.totalorder %s39, 0
      %p122 = por %p120, %p121
      %p123 = scmp.ne.s32.totalorder %s115, %s117
      %p124 = scmp.eq.s32.totalorder %s44, 1
      %p125 = por %p123, %p124
      %p126 = scmp.ne.s32.totalorder %s117, %s118
      %p127 = scmp.eq.s32.totalorder %s44, 0
      %p128 = por %p126, %p127
      %p129 = scmp.ne.s32.totalorder %s117, %s118
      %p130 = scmp.eq.s32.totalorder %s45, 1
      %p131 = por %p129, %p130
      %p133 = scmp.ne.s32.totalorder %s118, %s132
      %p134 = scmp.eq.s32.totalorder %s45, 0
      %p135 = por %p133, %p134
      %s137 = sadd.s32 %s136, 1
      %p140 = scmp.eq.s32.totalorder %s39, 1
      %p141 = scmp.ne.s32.totalorder %s136, %s138
      %p142 = scmp.eq.s32.totalorder %s39, 0
      %p143 = por %p141, %p142
      %p144 = scmp.ne.s32.totalorder %s136, %s138
      %p145 = scmp.eq.s32.totalorder %s44, 1
      %p146 = por %p144, %p145
      %p147 = scmp.ne.s32.totalorder %s138, %s139
      %p148 = scmp.eq.s32.totalorder %s44, 0
      %p149 = por %p147, %p148
      %p150 = scmp.ne.s32.totalorder %s138, %s139
      %p151 = scmp.eq.s32.totalorder %s45, 1
      %p152 = por %p150, %p151
      %p154 = scmp.ne.s32.totalorder %s139, %s153
      %p155 = scmp.eq.s32.totalorder %s45, 0
      %p156 = por %p154, %p155
      %s158 = sadd.s32 %s157, 1
      %p161 = scmp.eq.s32.totalorder %s39, 1
      %p162 = scmp.ne.s32.totalorder %s157, %s159
      %p163 = scmp.eq.s32.totalorder %s39, 0
      %p164 = por %p162, %p163
      %p165 = scmp.ne.s32.totalorder %s157, %s159
      %p166 = scmp.eq.s32.totalorder %s44, 1
      %p167 = por %p165, %p166
      %p168 = scmp.ne.s32.totalorder %s159, %s160
      %p169 = scmp.eq.s32.totalorder %s44, 0
      %p170 = por %p168, %p169
      %p171 = scmp.ne.s32.totalorder %s159, %s160
      %p172 = scmp.eq.s32.totalorder %s45, 1
      %p173 = por %p171, %p172
      %p175 = scmp.ne.s32.totalorder %s160, %s174
      %p176 = scmp.eq.s32.totalorder %s45, 0
      %p177 = por %p175, %p176
      %s179 = sadd.s32 %s178, 1
      %p182 = scmp.eq.s32.totalorder %s39, 1
      %p183 = scmp.ne.s32.totalorder %s178, %s180
      %p184 = scmp.eq.s32.totalorder %s39, 0
      %p185 = por %p183, %p184
      %p186 = scmp.ne.s32.totalorder %s178, %s180
      %p187 = scmp.eq.s32.totalorder %s44, 1
      %p188 = por %p186, %p187
      %p189 = scmp.ne.s32.totalorder %s180, %s181
      %p190 = scmp.eq.s32.totalorder %s44, 0
      %p191 = por %p189, %p190
      %p192 = scmp.ne.s32.totalorder %s180, %s181
      %p193 = scmp.eq.s32.totalorder %s45, 1
      %p194 = por %p192, %p193
      %p196 = scmp.ne.s32.totalorder %s181, %s195
      %p197 = scmp.eq.s32.totalorder %s45, 0
      %p198 = por %p196, %p197
      %s200 = sadd.s32 %s199, 1
      %p203 = scmp.eq.s32.totalorder %s39, 1
      %p204 = scmp.ne.s32.totalorder %s199, %s201
      %p205 = scmp.eq.s32.totalorder %s39, 0
      %p206 = por %p204, %p205
      %p207 = scmp.ne.s32.totalorder %s199, %s201
      %p208 = scmp.eq.s32.totalorder %s44, 1
      %p209 = por %p207, %p208
      %p210 = scmp.ne.s32.totalorder %s201, %s202
      %p211 = scmp.eq.s32.totalorder %s44, 0
      %p212 = por %p210, %p211
      %p213 = scmp.ne.s32.totalorder %s201, %s202
      %p214 = scmp.eq.s32.totalorder %s45, 1
      %p215 = por %p213, %p214
      %p217 = scmp.ne.s32.totalorder %s202, %s216
      %p218 = scmp.eq.s32.totalorder %s45, 0
      %p219 = por %p217, %p218
      %s221 = sadd.s32 %s220, 1
      %p224 = scmp.eq.s32.totalorder %s39, 1
      %p225 = scmp.ne.s32.totalorder %s220, %s222
      %p226 = scmp.eq.s32.totalorder %s39, 0
      %p227 = por %p225, %p226
      %p228 = scmp.ne.s32.totalorder %s220, %s222
      %p229 = scmp.eq.s32.totalorder %s44, 1
      %p230 = por %p228, %p229
      %p231 = scmp.ne.s32.totalorder %s222, %s223
      %p232 = scmp.eq.s32.totalorder %s44, 0
      %p233 = por %p231, %p232
      %p234 = scmp.ne.s32.totalorder %s222, %s223
      %p235 = scmp.eq.s32.totalorder %s45, 1
      %p236 = por %p234, %p235
      %p238 = scmp.ne.s32.totalorder %s223, %s237
      %p239 = scmp.eq.s32.totalorder %s45, 0
      %p240 = por %p238, %p239
      %s242 = sadd.s32 %s241, 1
      %p245 = scmp.eq.s32.totalorder %s39, 1
      %p246 = scmp.ne.s32.totalorder %s241, %s243
      %p247 = scmp.eq.s32.totalorder %s39, 0
      %p248 = por %p246, %p247
      %p249 = scmp.ne.s32.totalorder %s241, %s243
      %p250 = scmp.eq.s32.totalorder %s44, 1
      %p251 = por %p249, %p250
      %p252 = scmp.ne.s32.totalorder %s243, %s244
      %p253 = scmp.eq.s32.totalorder %s44, 0
      %p254 = por %p252, %p253
      %p255 = scmp.ne.s32.totalorder %s243, %s244
      %p256 = scmp.eq.s32.totalorder %s45, 1
      %p257 = por %p255, %p256
      %p259 = scmp.ne.s32.totalorder %s244, %s258
      %p260 = scmp.eq.s32.totalorder %s45, 0
      %p261 = por %p259, %p260
      %s263 = sadd.s32 %s262, 1
      %p266 = scmp.eq.s32.totalorder %s39, 1
      %p267 = scmp.ne.s32.totalorder %s262, %s264
      %p268 = scmp.eq.s32.totalorder %s39, 0
      %p269 = por %p267, %p268
      %p270 = scmp.ne.s32.totalorder %s262, %s264
      %p271 = scmp.eq.s32.totalorder %s44, 1
      %p272 = por %p270, %p271
      %p273 = scmp.ne.s32.totalorder %s264, %s265
      %p274 = scmp.eq.s32.totalorder %s44, 0
      %p275 = por %p273, %p274
      %p276 = scmp.ne.s32.totalorder %s264, %s265
      %p277 = scmp.eq.s32.totalorder %s45, 1
      %p278 = por %p276, %p277
      %p280 = scmp.ne.s32.totalorder %s265, %s279
      %p281 = scmp.eq.s32.totalorder %s45, 0
      %p282 = por %p280, %p281
      %s284 = sadd.s32 %s283, 1
      %p287 = scmp.eq.s32.totalorder %s39, 1
      %p288 = scmp.ne.s32.totalorder %s283, %s285
      %p289 = scmp.eq.s32.totalorder %s39, 0
      %p290 = por %p288, %p289
      %p291 = scmp.ne.s32.totalorder %s283, %s285
      %p292 = scmp.eq.s32.totalorder %s44, 1
      %p293 = por %p291, %p292
      %p294 = scmp.ne.s32.totalorder %s285, %s286
      %p295 = scmp.eq.s32.totalorder %s44, 0
      %p296 = por %p294, %p295
      %p297 = scmp.ne.s32.totalorder %s285, %s286
      %p298 = scmp.eq.s32.totalorder %s45, 1
      %p299 = por %p297, %p298
      %p301 = scmp.ne.s32.totalorder %s286, %s300
      %p302 = scmp.eq.s32.totalorder %s45, 0
      %p303 = por %p301, %p302
      %s305 = sadd.s32 %s304, 1
      %p308 = scmp.eq.s32.totalorder %s39, 1
      %p309 = scmp.ne.s32.totalorder %s304, %s306
      %p310 = scmp.eq.s32.totalorder %s39, 0
      %p311 = por %p309, %p310
      %p312 = scmp.ne.s32.totalorder %s304, %s306
      %p313 = scmp.eq.s32.totalorder %s44, 1
      %p314 = por %p312, %p313
      %p315 = scmp.ne.s32.totalorder %s306, %s307
      %p316 = scmp.eq.s32.totalorder %s44, 0
      %p317 = por %p315, %p316
      %p318 = scmp.ne.s32.totalorder %s306, %s307
      %p319 = scmp.eq.s32.totalorder %s45, 1
      %p320 = por %p318, %p319
      %p322 = scmp.ne.s32.totalorder %s307, %s321
      %p323 = scmp.eq.s32.totalorder %s45, 0
      %p324 = por %p322, %p323
      %s326 = sadd.s32 %s325, 1
      %p329 = scmp.eq.s32.totalorder %s39, 1
      %p330 = scmp.ne.s32.totalorder %s325, %s327
      %p331 = scmp.eq.s32.totalorder %s39, 0
      %p332 = por %p330, %p331
      %p333 = scmp.ne.s32.totalorder %s325, %s327
      %p334 = scmp.eq.s32.totalorder %s44, 1
      %p335 = por %p333, %p334
      %p336 = scmp.ne.s32.totalorder %s327, %s328
      %p337 = scmp.eq.s32.totalorder %s44, 0
      %p338 = por %p336, %p337
      %p339 = scmp.ne.s32.totalorder %s327, %s328
      %p340 = scmp.eq.s32.totalorder %s45, 1
      %p341 = por %p339, %p340
      %p343 = scmp.ne.s32.totalorder %s328, %s342
      %p344 = scmp.eq.s32.totalorder %s45, 0
      %p345 = por %p343, %p344
      %s347 = sadd.s32 %s346, 1
      %p350 = scmp.eq.s32.totalorder %s39, 1
      %p351 = scmp.ne.s32.totalorder %s346, %s348
      %p352 = scmp.eq.s32.totalorder %s39, 0
      %p353 = por %p351, %p352
      %p354 = scmp.ne.s32.totalorder %s346, %s348
      %p355 = scmp.eq.s32.totalorder %s44, 1
      %p356 = por %p354, %p355
      %p357 = scmp.ne.s32.totalorder %s348, %s349
      %p358 = scmp.eq.s32.totalorder %s44, 0
      %p359 = por %p357, %p358
      %p360 = scmp.ne.s32.totalorder %s348, %s349
      %p361 = scmp.eq.s32.totalorder %s45, 1
      %p362 = por %p360, %p361
      %p364 = scmp.ne.s32.totalorder %s349, %s363
      %p365 = scmp.eq.s32.totalorder %s45, 0
      %p366 = por %p364, %p365
      %s368 = sadd.s32 %s367, 1
      %p371 = scmp.eq.s32.totalorder %s39, 1
      %p372 = scmp.ne.s32.totalorder %s367, %s369
      %p373 = scmp.eq.s32.totalorder %s39, 0
      %p374 = por %p372, %p373
      %p375 = scmp.ne.s32.totalorder %s367, %s369
      %p376 = scmp.eq.s32.totalorder %s44, 1
      %p377 = por %p375, %p376
      %p378 = scmp.ne.s32.totalorder %s369, %s370
      %p379 = scmp.eq.s32.totalorder %s44, 0
      %p380 = por %p378, %p379
      %p381 = scmp.ne.s32.totalorder %s369, %s370
      %p382 = scmp.eq.s32.totalorder %s45, 1
      %p383 = por %p381, %p382
      %p385 = scmp.ne.s32.totalorder %s370, %s384
      %p386 = scmp.eq.s32.totalorder %s45, 0
      %p387 = por %p385, %p386
      %s389 = sadd.s32 %s388, 1
      %p392 = scmp.eq.s32.totalorder %s39, 1
      %p393 = scmp.ne.s32.totalorder %s388, %s390
      %p394 = scmp.eq.s32.totalorder %s39, 0
      %p395 = por %p393, %p394
      %p396 = scmp.ne.s32.totalorder %s388, %s390
      %p397 = scmp.eq.s32.totalorder %s44, 1
      %p398 = por %p396, %p397
      %p399 = scmp.ne.s32.totalorder %s390, %s391
      %p400 = scmp.eq.s32.totalorder %s44, 0
      %p401 = por %p399, %p400
      %p402 = scmp.ne.s32.totalorder %s390, %s391
      %p403 = scmp.eq.s32.totalorder %s45, 1
      %p404 = por %p402, %p403
      %p406 = scmp.ne.s32.totalorder %s391, %s405
      %p407 = scmp.eq.s32.totalorder %s45, 0
      %p408 = por %p406, %p407
      %s410 = sadd.s32 %s409, 1
      %p413 = scmp.eq.s32.totalorder %s39, 1
      %p414 = scmp.ne.s32.totalorder %s409, %s411
      %p415 = scmp.eq.s32.totalorder %s39, 0
      %p416 = por %p414, %p415
      %p417 = scmp.ne.s32.totalorder %s409, %s411
      %p418 = scmp.eq.s32.totalorder %s44, 1
      %p419 = por %p417, %p418
      %p420 = scmp.ne.s32.totalorder %s411, %s412
      %p421 = scmp.eq.s32.totalorder %s44, 0
      %p422 = por %p420, %p421
      %p423 = scmp.ne.s32.totalorder %s411, %s412
      %p424 = scmp.eq.s32.totalorder %s45, 1
      %p425 = por %p423, %p424
      %p427 = scmp.ne.s32.totalorder %s412, %s426
      %p428 = scmp.eq.s32.totalorder %s45, 0
      %p429 = por %p427, %p428
      %s431 = sadd.s32 %s430, 1
      %p434 = scmp.eq.s32.totalorder %s39, 1
      %p435 = scmp.ne.s32.totalorder %s430, %s432
      %p436 = scmp.eq.s32.totalorder %s39, 0
      %p437 = por %p435, %p436
      %p438 = scmp.ne.s32.totalorder %s430, %s432
      %p439 = scmp.eq.s32.totalorder %s44, 1
      %p440 = por %p438, %p439
      %p441 = scmp.ne.s32.totalorder %s432, %s433
      %p442 = scmp.eq.s32.totalorder %s44, 0
      %p443 = por %p441, %p442
      %p444 = scmp.ne.s32.totalorder %s432, %s433
      %p445 = scmp.eq.s32.totalorder %s45, 1
      %p446 = por %p444, %p445
      %p448 = scmp.ne.s32.totalorder %s433, %s447
      %p449 = scmp.eq.s32.totalorder %s45, 0
      %p450 = por %p448, %p449
      %s452 = sadd.s32 %s451, 1
      %p455 = scmp.eq.s32.totalorder %s39, 1
      %p456 = scmp.ne.s32.totalorder %s451, %s453
      %p457 = scmp.eq.s32.totalorder %s39, 0
      %p458 = por %p456, %p457
      %p459 = scmp.ne.s32.totalorder %s451, %s453
      %p460 = scmp.eq.s32.totalorder %s44, 1
      %p461 = por %p459, %p460
      %p462 = scmp.ne.s32.totalorder %s453, %s454
      %p463 = scmp.eq.s32.totalorder %s44, 0
      %p464 = por %p462, %p463
      %p465 = scmp.ne.s32.totalorder %s453, %s454
      %p466 = scmp.eq.s32.totalorder %s45, 1
      %p467 = por %p465, %p466
      %p469 = scmp.ne.s32.totalorder %s454, %s468
      %p470 = scmp.eq.s32.totalorder %s45, 0
      %p471 = por %p469, %p470
      %s473 = sadd.s32 %s472, 1
      %p476 = scmp.eq.s32.totalorder %s39, 1
      %p477 = scmp.ne.s32.totalorder %s472, %s474
      %p478 = scmp.eq.s32.totalorder %s39, 0
      %p479 = por %p477, %p478
      %p480 = scmp.ne.s32.totalorder %s472, %s474
      %p481 = scmp.eq.s32.totalorder %s44, 1
      %p482 = por %p480, %p481
      %p483 = scmp.ne.s32.totalorder %s474, %s475
      %p484 = scmp.eq.s32.totalorder %s44, 0
      %p485 = por %p483, %p484
      %p486 = scmp.ne.s32.totalorder %s474, %s475
      %p487 = scmp.eq.s32.totalorder %s45, 1
      %p488 = por %p486, %p487
      %p490 = scmp.ne.s32.totalorder %s475, %s489
      %p491 = scmp.eq.s32.totalorder %s45, 0
      %p492 = por %p490, %p491
      %s493 = ssub.s32 %s39, %s46
      %p494 = scmp.eq.s32.totalorder %s493, 0
      %s496 = sadd.s32 %s495, 1
      %s497 = scalar_select %p494, %s495, %s496
      %p500 = pneg %p494
      %p501 = scmp.eq.s32.totalorder %s39, 1
      %p502 = por %p500, %p501
      %p503 = scmp.ne.s32.totalorder %s495, %s498
      %p504 = scmp.eq.s32.totalorder %s39, 0
      %p505 = por %p503, %p504
      %p506 = scmp.ne.s32.totalorder %s495, %s498
      %p507 = scmp.eq.s32.totalorder %s44, 1
      %p508 = por %p506, %p507
      %p509 = scmp.ne.s32.totalorder %s498, %s499
      %p510 = scmp.eq.s32.totalorder %s44, 0
      %p511 = por %p509, %p510
      %p512 = scmp.ne.s32.totalorder %s498, %s499
      %p513 = scmp.eq.s32.totalorder %s45, 1
      %p514 = por %p512, %p513
      %p516 = scmp.ne.s32.totalorder %s499, %s515
      %p517 = scmp.eq.s32.totalorder %s45, 0
      %p518 = por %p516, %p517
      %p519 = scmp.le.s32.totalorder 1, %s39
      %p520 = scmp.lt.s32.totalorder %s39, 3
      %p521 = pnand %p519, %p520
      %p522 = pneg %p521
      // Predicated region
      $region9: #{tpu_custom_call.1} parent=5 // pred_check
        _
      $region10: #{tpu_custom_call.1} parent=5 // pred_check_branch
        %524 = sbr.rel (%p521) target = $region12
      $region11: #{tpu_custom_call.1} parent=5 // pred_region
        %s525 = ssub.s32 %s39, 1
        // Predicated region
        $region13: #{tpu_custom_call.1} parent=11 // pred_check
          %p526 = pneg %p86
        $region14: #{tpu_custom_call.1} parent=11 // pred_check_branch
          %528 = sbr.rel (%p526) target = $region16
        $region15: #{tpu_custom_call.1} parent=11 // pred_region
          %s530 = ssub.s32 6144, 6144
          %531 = vsyncadd [#allocation6], %s530
          %s532 = sshll.u32 [#allocation5], 4
          %s533 = int_to_ptr.vmem [resolvable:$true] %s532
          %538 = dma.hbm_to_vmem [thread:$0]  %s1, 6144, %s533, [#allocation6], 384, 384, 24
        $region16: #{tpu_custom_call.1} parent=11 // pred_fallthru
          _
        // Predicated region
        $region17: #{tpu_custom_call.1} parent=11 // pred_check
          %p539 = pneg %p107
        $region18: #{tpu_custom_call.1} parent=11 // pred_check_branch
          %541 = sbr.rel (%p539) target = $region20
        $region19: #{tpu_custom_call.1} parent=11 // pred_region
          %s543 = ssub.s32 2048, 2048
          %544 = vsyncadd [#allocation6], %s543
          %s545 = sshll.u32 [#allocation7], 4
          %s546 = int_to_ptr.vmem [resolvable:$true] %s545
          %551 = dma.hbm_to_vmem [thread:$0]  %s2, 2048, %s546, [#allocation6], 128, 128, 8
        $region20: #{tpu_custom_call.1} parent=11 // pred_fallthru
          _
        // Predicated region
        $region21: #{tpu_custom_call.1} parent=11 // pred_check
          %p552 = pneg %p128
        $region22: #{tpu_custom_call.1} parent=11 // pred_check_branch
          %554 = sbr.rel (%p552) target = $region24
        $region23: #{tpu_custom_call.1} parent=11 // pred_region
          _
        $region24: #{tpu_custom_call.1} parent=11 // pred_fallthru
          _
        // Predicated region
        $region25: #{tpu_custom_call.1} parent=11 // pred_check
          %p555 = pneg %p149
        $region26: #{tpu_custom_call.1} parent=11 // pred_check_branch
          %557 = sbr.rel (%p555) target = $region28
        $region27: #{tpu_custom_call.1} parent=11 // pred_region
          %s559 = ssub.s32 2048, 2048
          %560 = vsyncadd [#allocation9], %s559
          %s561 = sshll.u32 [#allocation8], 4
          %s562 = int_to_ptr.vmem [resolvable:$true] %s561
          %567 = dma.hbm_to_vmem [thread:$0]  %s4, 2048, %s562, [#allocation9], 128, 128, 8
        $region28: #{tpu_custom_call.1} parent=11 // pred_fallthru
          _
        // Predicated region
        $region29: #{tpu_custom_call.1} parent=11 // pred_check
          %p568 = pneg %p170
        $region30: #{tpu_custom_call.1} parent=11 // pred_check_branch
          %570 = sbr.rel (%p568) target = $region32
        $region31: #{tpu_custom_call.1} parent=11 // pred_region
          _
        $region32: #{tpu_custom_call.1} parent=11 // pred_fallthru
          _
        // Predicated region
        $region33: #{tpu_custom_call.1} parent=11 // pred_check
          %p571 = pneg %p191
        $region34: #{tpu_custom_call.1} parent=11 // pred_check_branch
          %573 = sbr.rel (%p571) target = $region36
        $region35: #{tpu_custom_call.1} parent=11 // pred_region
          %s575 = ssub.s32 4096, 4096
          %576 = vsyncadd [#allocation9], %s575
          %s577 = sshll.u32 [#allocation10], 4
          %s578 = int_to_ptr.vmem [resolvable:$true] %s577
          %583 = dma.hbm_to_vmem [thread:$0]  %s6, 4096, %s578, [#allocation9], 256, 256, 16
        $region36: #{tpu_custom_call.1} parent=11 // pred_fallthru
          _
        // Predicated region
        $region37: #{tpu_custom_call.1} parent=11 // pred_check
          %p584 = pneg %p212
        $region38: #{tpu_custom_call.1} parent=11 // pred_check_branch
          %586 = sbr.rel (%p584) target = $region40
        $region39: #{tpu_custom_call.1} parent=11 // pred_region
          _
        $region40: #{tpu_custom_call.1} parent=11 // pred_fallthru
          _
        // Predicated region
        $region41: #{tpu_custom_call.1} parent=11 // pred_check
          %p587 = pneg %p233
        $region42: #{tpu_custom_call.1} parent=11 // pred_check_branch
          %589 = sbr.rel (%p587) target = $region44
        $region43: #{tpu_custom_call.1} parent=11 // pred_region
          %s591 = ssub.s32 4096, 4096
          %592 = vsyncadd [#allocation12], %s591
          %s593 = sshll.u32 [#allocation11], 4
          %s594 = int_to_ptr.vmem [resolvable:$true] %s593
          %599 = dma.hbm_to_vmem [thread:$0]  %s8, 4096, %s594, [#allocation12], 256, 256, 16
        $region44: #{tpu_custom_call.1} parent=11 // pred_fallthru
          _
        // Predicated region
        $region45: #{tpu_custom_call.1} parent=11 // pred_check
          %p600 = pneg %p254
        $region46: #{tpu_custom_call.1} parent=11 // pred_check_branch
          %602 = sbr.rel (%p600) target = $region48
        $region47: #{tpu_custom_call.1} parent=11 // pred_region
          %s604 = ssub.s32 2048, 2048
          %605 = vsyncadd [#allocation12], %s604
          %s606 = sshll.u32 [#allocation13], 4
          %s607 = int_to_ptr.vmem [resolvable:$true] %s606
          %612 = dma.hbm_to_vmem [thread:$0]  %s9, 2048, %s607, [#allocation12], 128, 128, 8
        $region48: #{tpu_custom_call.1} parent=11 // pred_fallthru
          _
        // Predicated region
        $region49: #{tpu_custom_call.1} parent=11 // pred_check
          %p613 = pneg %p275
        $region50: #{tpu_custom_call.1} parent=11 // pred_check_branch
          %615 = sbr.rel (%p613) target = $region52
        $region51: #{tpu_custom_call.1} parent=11 // pred_region
          _
        $region52: #{tpu_custom_call.1} parent=11 // pred_fallthru
          _
        // Predicated region
        $region53: #{tpu_custom_call.1} parent=11 // pred_check
          %p616 = pneg %p296
        $region54: #{tpu_custom_call.1} parent=11 // pred_check_branch
          %618 = sbr.rel (%p616) target = $region56
        $region55: #{tpu_custom_call.1} parent=11 // pred_region
          %s620 = ssub.s32 2048, 2048
          %621 = vsyncadd [#allocation15], %s620
          %s622 = sshll.u32 [#allocation14], 4
          %s623 = int_to_ptr.vmem [resolvable:$true] %s622
          %628 = dma.hbm_to_vmem [thread:$0]  %s11, 2048, %s623, [#allocation15], 128, 128, 8
        $region56: #{tpu_custom_call.1} parent=11 // pred_fallthru
          _
        // Predicated region
        $region57: #{tpu_custom_call.1} parent=11 // pred_check
          %p629 = pneg %p317
        $region58: #{tpu_custom_call.1} parent=11 // pred_check_branch
          %631 = sbr.rel (%p629) target = $region60
        $region59: #{tpu_custom_call.1} parent=11 // pred_region
          _
        $region60: #{tpu_custom_call.1} parent=11 // pred_fallthru
          _
        // Predicated region
        $region61: #{tpu_custom_call.1} parent=11 // pred_check
          %p632 = pneg %p338
        $region62: #{tpu_custom_call.1} parent=11 // pred_check_branch
          %634 = sbr.rel (%p632) target = $region64
        $region63: #{tpu_custom_call.1} parent=11 // pred_region
          %s636 = ssub.s32 4096, 4096
          %637 = vsyncadd [#allocation15], %s636
          %s638 = sshll.u32 [#allocation16], 4
          %s639 = int_to_ptr.vmem [resolvable:$true] %s638
          %644 = dma.hbm_to_vmem [thread:$0]  %s13, 4096, %s639, [#allocation15], 256, 256, 16
        $region64: #{tpu_custom_call.1} parent=11 // pred_fallthru
          _
        // Predicated region
        $region65: #{tpu_custom_call.1} parent=11 // pred_check
          %p645 = pneg %p359
        $region66: #{tpu_custom_call.1} parent=11 // pred_check_branch
          %647 = sbr.rel (%p645) target = $region68
        $region67: #{tpu_custom_call.1} parent=11 // pred_region
          _
        $region68: #{tpu_custom_call.1} parent=11 // pred_fallthru
          _
        // Predicated region
        $region69: #{tpu_custom_call.1} parent=11 // pred_check
          %p648 = pneg %p380
        $region70: #{tpu_custom_call.1} parent=11 // pred_check_branch
          %650 = sbr.rel (%p648) target = $region72
        $region71: #{tpu_custom_call.1} parent=11 // pred_region
          %s652 = ssub.s32 2048, 2048
          %653 = vsyncadd [#allocation18], %s652
          %s654 = sshll.u32 [#allocation17], 4
          %s655 = int_to_ptr.vmem [resolvable:$true] %s654
          %660 = dma.hbm_to_vmem [thread:$0]  %s15, 2048, %s655, [#allocation18], 128, 128, 8
        $region72: #{tpu_custom_call.1} parent=11 // pred_fallthru
          _
        // Predicated region
        $region73: #{tpu_custom_call.1} parent=11 // pred_check
          %p661 = pneg %p401
        $region74: #{tpu_custom_call.1} parent=11 // pred_check_branch
          %663 = sbr.rel (%p661) target = $region76
        $region75: #{tpu_custom_call.1} parent=11 // pred_region
          _
        $region76: #{tpu_custom_call.1} parent=11 // pred_fallthru
          _
        // Predicated region
        $region77: #{tpu_custom_call.1} parent=11 // pred_check
          %p664 = pneg %p422
        $region78: #{tpu_custom_call.1} parent=11 // pred_check_branch
          %666 = sbr.rel (%p664) target = $region80
        $region79: #{tpu_custom_call.1} parent=11 // pred_region
          %s668 = ssub.s32 2048, 2048
          %669 = vsyncadd [#allocation18], %s668
          %s670 = sshll.u32 [#allocation19], 4
          %s671 = int_to_ptr.vmem [resolvable:$true] %s670
          %676 = dma.hbm_to_vmem [thread:$0]  %s17, 2048, %s671, [#allocation18], 128, 128, 8
        $region80: #{tpu_custom_call.1} parent=11 // pred_fallthru
          _
        // Predicated region
        $region81: #{tpu_custom_call.1} parent=11 // pred_check
          %p677 = pneg %p443
        $region82: #{tpu_custom_call.1} parent=11 // pred_check_branch
          %679 = sbr.rel (%p677) target = $region84
        $region83: #{tpu_custom_call.1} parent=11 // pred_region
          _
        $region84: #{tpu_custom_call.1} parent=11 // pred_fallthru
          _
        // Predicated region
        $region85: #{tpu_custom_call.1} parent=11 // pred_check
          %p680 = pneg %p464
        $region86: #{tpu_custom_call.1} parent=11 // pred_check_branch
          %682 = sbr.rel (%p680) target = $region88
        $region87: #{tpu_custom_call.1} parent=11 // pred_region
          %s684 = ssub.s32 4096, 4096
          %685 = vsyncadd [#allocation21], %s684
          %s686 = sshll.u32 [#allocation20], 4
          %s687 = int_to_ptr.vmem [resolvable:$true] %s686
          %692 = dma.hbm_to_vmem [thread:$0]  %s19, 4096, %s687, [#allocation21], 256, 256, 16
        $region88: #{tpu_custom_call.1} parent=11 // pred_fallthru
          _
        // Predicated region
        $region89: #{tpu_custom_call.1} parent=11 // pred_check
          %p693 = pneg %p485
        $region90: #{tpu_custom_call.1} parent=11 // pred_check_branch
          %695 = sbr.rel (%p693) target = $region92
        $region91: #{tpu_custom_call.1} parent=11 // pred_region
          _
        $region92: #{tpu_custom_call.1} parent=11 // pred_fallthru
          _
      $region12: #{tpu_custom_call.1} parent=5 // pred_fallthru
        _
      %p696 = scmp.lt.s32.totalorder %s39, 2
      // Predicated region
      $region93: #{tpu_custom_call.1} parent=5 // pred_check
        %p697 = pneg %p696
      $region94: #{tpu_custom_call.1} parent=5 // pred_check_branch
        %699 = sbr.rel (%p697) target = $region96
      $region95: #{tpu_custom_call.1} parent=5 // pred_region
        // Predicated region
        $region97: #{tpu_custom_call.1} parent=95 // pred_check
          %p700 = pneg %p59
        $region98: #{tpu_custom_call.1} parent=95 // pred_check_branch
          %702 = sbr.rel (%p700) target = $region100
        $region99: #{tpu_custom_call.1} parent=95 // pred_region
          %s703 = sand.u32 %s49, 1
          %s704 = scalar_lea.sflag [#allocation3], %s703
          %s705 = sand.u32 %s49, 1
          %s706 = smul.addr %s705, 8
          %s707 = scalar_lea.vmem [#allocation2], %s706
          %s709 = ssub.s32 128, 128
          %710 = vsyncadd %s704, %s709
          %s711 = smul.addr %s39, 128
          %s712 = scalar_lea.hbm %s0, %s711
          %s714 = sshll.u32 %s707, 4
          %s715 = int_to_ptr.vmem [resolvable:$true] %s714
          %717 = dma.hbm_to_vmem [thread:$0]  %s712, 128, %s715, %s704
        $region100: #{tpu_custom_call.1} parent=95 // pred_fallthru
          _
      $region96: #{tpu_custom_call.1} parent=5 // pred_fallthru
        _
      %p718 = scmp.le.s32.totalorder 1, %s39
      %p719 = scmp.lt.s32.totalorder %s39, 3
      %p720 = pnand %p718, %p719
      %p721 = pneg %p720
      // Predicated region
      $region101: #{tpu_custom_call.1} parent=5 // pred_check
        _
      $region102: #{tpu_custom_call.1} parent=5 // pred_check_branch
        %723 = sbr.rel (%p720) target = $region104
      $region103: #{tpu_custom_call.1} parent=5 // pred_region
        %s724 = ssub.s32 %s39, 1
        %s725 = sand.u32 %s52, 1
        %s726 = scalar_lea.sflag [#allocation3], %s725
        %s727 = sand.u32 %s52, 1
        %s728 = smul.addr %s727, 8
        %s729 = scalar_lea.vmem [#allocation2], %s728
        // Predicated region
        $region105: #{tpu_custom_call.1} parent=103 // pred_check
          %p730 = pneg %p65
        $region106: #{tpu_custom_call.1} parent=103 // pred_check_branch
          %732 = sbr.rel (%p730) target = $region108
        $region107: #{tpu_custom_call.1} parent=103 // pred_region
          %733 = dma.done %s726, 128
        $region108: #{tpu_custom_call.1} parent=103 // pred_fallthru
          _
        // Predicated region
        $region109: #{tpu_custom_call.1} parent=103 // pred_check
          %p734 = pneg %p86
        $region110: #{tpu_custom_call.1} parent=103 // pred_check_branch
          %736 = sbr.rel (%p734) target = $region112
        $region111: #{tpu_custom_call.1} parent=103 // pred_region
          %737 = dma.done [#allocation6], 6144
        $region112: #{tpu_custom_call.1} parent=103 // pred_fallthru
          _
        // Predicated region
        $region113: #{tpu_custom_call.1} parent=103 // pred_check
          %p738 = pneg %p107
        $region114: #{tpu_custom_call.1} parent=103 // pred_check_branch
          %740 = sbr.rel (%p738) target = $region116
        $region115: #{tpu_custom_call.1} parent=103 // pred_region
          %741 = dma.done [#allocation6], 2048
        $region116: #{tpu_custom_call.1} parent=103 // pred_fallthru
          _
        // Predicated region
        $region117: #{tpu_custom_call.1} parent=103 // pred_check
          %p742 = pneg %p149
        $region118: #{tpu_custom_call.1} parent=103 // pred_check_branch
          %744 = sbr.rel (%p742) target = $region120
        $region119: #{tpu_custom_call.1} parent=103 // pred_region
          %745 = dma.done [#allocation9], 2048
        $region120: #{tpu_custom_call.1} parent=103 // pred_fallthru
          _
        // Predicated region
        $region121: #{tpu_custom_call.1} parent=103 // pred_check
          %p746 = pneg %p191
        $region122: #{tpu_custom_call.1} parent=103 // pred_check_branch
          %748 = sbr.rel (%p746) target = $region124
        $region123: #{tpu_custom_call.1} parent=103 // pred_region
          %749 = dma.done [#allocation9], 4096
        $region124: #{tpu_custom_call.1} parent=103 // pred_fallthru
          _
        // Predicated region
        $region125: #{tpu_custom_call.1} parent=103 // pred_check
          %p750 = pneg %p233
        $region126: #{tpu_custom_call.1} parent=103 // pred_check_branch
          %752 = sbr.rel (%p750) target = $region128
        $region127: #{tpu_custom_call.1} parent=103 // pred_region
          %753 = dma.done [#allocation12], 4096
        $region128: #{tpu_custom_call.1} parent=103 // pred_fallthru
          _
        // Predicated region
        $region129: #{tpu_custom_call.1} parent=103 // pred_check
          %p754 = pneg %p254
        $region130: #{tpu_custom_call.1} parent=103 // pred_check_branch
          %756 = sbr.rel (%p754) target = $region132
        $region131: #{tpu_custom_call.1} parent=103 // pred_region
          %757 = dma.done [#allocation12], 2048
        $region132: #{tpu_custom_call.1} parent=103 // pred_fallthru
          _
        // Predicated region
        $region133: #{tpu_custom_call.1} parent=103 // pred_check
          %p758 = pneg %p296
        $region134: #{tpu_custom_call.1} parent=103 // pred_check_branch
          %760 = sbr.rel (%p758) target = $region136
        $region135: #{tpu_custom_call.1} parent=103 // pred_region
          %761 = dma.done [#allocation15], 2048
        $region136: #{tpu_custom_call.1} parent=103 // pred_fallthru
          _
        // Predicated region
        $region137: #{tpu_custom_call.1} parent=103 // pred_check
          %p762 = pneg %p338
        $region138: #{tpu_custom_call.1} parent=103 // pred_check_branch
          %764 = sbr.rel (%p762) target = $region140
        $region139: #{tpu_custom_call.1} parent=103 // pred_region
          %765 = dma.done [#allocation15], 4096
        $region140: #{tpu_custom_call.1} parent=103 // pred_fallthru
          _
        // Predicated region
        $region141: #{tpu_custom_call.1} parent=103 // pred_check
          %p766 = pneg %p380
        $region142: #{tpu_custom_call.1} parent=103 // pred_check_branch
          %768 = sbr.rel (%p766) target = $region144
        $region143: #{tpu_custom_call.1} parent=103 // pred_region
          %769 = dma.done [#allocation18], 2048
        $region144: #{tpu_custom_call.1} parent=103 // pred_fallthru
          _
        // Predicated region
        $region145: #{tpu_custom_call.1} parent=103 // pred_check
          %p770 = pneg %p422
        $region146: #{tpu_custom_call.1} parent=103 // pred_check_branch
          %772 = sbr.rel (%p770) target = $region148
        $region147: #{tpu_custom_call.1} parent=103 // pred_region
          %773 = dma.done [#allocation18], 2048
        $region148: #{tpu_custom_call.1} parent=103 // pred_fallthru
          _
        // Predicated region
        $region149: #{tpu_custom_call.1} parent=103 // pred_check
          %p774 = pneg %p464
        $region150: #{tpu_custom_call.1} parent=103 // pred_check_branch
          %776 = sbr.rel (%p774) target = $region152
        $region151: #{tpu_custom_call.1} parent=103 // pred_region
          %777 = dma.done [#allocation21], 4096
        $region152: #{tpu_custom_call.1} parent=103 // pred_fallthru
          _
        %s778 = sand.u32 %s52, 1
        %s779 = scalar_lea.sflag [#allocation3], %s778
        %s780 = sand.u32 %s52, 1
        %s781 = smul.addr %s780, 8
        %s782 = scalar_lea.vmem [#allocation2], %s781
        %p783 = pneg %p65
        %p784 = pneg %p62
        %p785 = pneg %p86
        %p786 = pneg %p83
        %p787 = pneg %p107
        %p788 = pneg %p104
        %p789 = pneg %p128
        %p790 = pneg %p125
        %p791 = pneg %p149
        %p792 = pneg %p146
        %p793 = pneg %p170
        %p794 = pneg %p167
        %p795 = pneg %p191
        %p796 = pneg %p188
        %p797 = pneg %p212
        %p798 = pneg %p209
        %p799 = pneg %p233
        %p800 = pneg %p230
        %p801 = pneg %p254
        %p802 = pneg %p251
        %p803 = pneg %p275
        %p804 = pneg %p272
        %p805 = pneg %p296
        %p806 = pneg %p293
        %p807 = pneg %p317
        %p808 = pneg %p314
        %p809 = pneg %p338
        %p810 = pneg %p335
        %p811 = pneg %p359
        %p812 = pneg %p356
        %p813 = pneg %p380
        %p814 = pneg %p377
        %p815 = pneg %p401
        %p816 = pneg %p398
        %p817 = pneg %p422
        %p818 = pneg %p419
        %p819 = pneg %p443
        %p820 = pneg %p440
        %p821 = pneg %p464
        %p822 = pneg %p461
        %p823 = pneg %p485
        %p824 = pneg %p482
        %p825 = pneg %p511
        %p826 = pneg %p508
        %s827 = sand.u32 %s498, 1
        %s828 = scalar_lea.sflag [#allocation4], %s827
        %s829 = sand.u32 %s498, 1
        %s830 = smul.addr %s829, 8
        %s831 = scalar_lea.vmem [#allocation22], %s830
        %v832 = vld [vmem:[%s729] sm:$0xff]
        %v833 = vlaneseq
        %v834 = vand.u32 %v833, 127
        %vm835 = vcmp.ge.s32.totalorder %v834, 8
        %vm836 = vcmp.lt.s32.totalorder %v834, 16
        %vm837 = vmand %vm835, %vm836
        %v838 = vsel %vm837, 1.0, 0.0
        %840 = vset.pattern.permute.xlu0 0
        %841 = vperm.xlu0 %840, %v832
        %v842 = vpop.permute.xlu0 %841
        %v844 = vld [vmem:[#allocation5] sm:$0xff]
        %v845 = vld [vmem:[#allocation5 + $0x8] sm:$0xff]
        %v846 = vld [vmem:[#allocation5 + $0x10] sm:$0xff]
        %v847 = vld [vmem:[#allocation5 + $0x18] sm:$0xff]
        %v848 = vld [vmem:[#allocation5 + $0x20] sm:$0xff]
        %v849 = vld [vmem:[#allocation5 + $0x28] sm:$0xff]
        %v850 = vld [vmem:[#allocation5 + $0x30] sm:$0xff]
        %v851 = vld [vmem:[#allocation5 + $0x38] sm:$0xff]
        %v852 = vld [vmem:[#allocation5 + $0x40] sm:$0xff]
        %v853 = vld [vmem:[#allocation5 + $0x48] sm:$0xff]
        %v854 = vld [vmem:[#allocation5 + $0x50] sm:$0xff]
        %v855 = vld [vmem:[#allocation5 + $0x58] sm:$0xff]
        %v856 = vld [vmem:[#allocation5 + $0x60] sm:$0xff]
        %v857 = vld [vmem:[#allocation5 + $0x68] sm:$0xff]
        %v858 = vld [vmem:[#allocation5 + $0x70] sm:$0xff]
        %v859 = vld [vmem:[#allocation5 + $0x78] sm:$0xff]
        %v860 = vld [vmem:[#allocation5 + $0x80] sm:$0xff]
        %v861 = vld [vmem:[#allocation5 + $0x88] sm:$0xff]
        %v862 = vld [vmem:[#allocation5 + $0x90] sm:$0xff]
        %v863 = vld [vmem:[#allocation5 + $0x98] sm:$0xff]
        %v864 = vld [vmem:[#allocation5 + $0xa0] sm:$0xff]
        %v865 = vld [vmem:[#allocation5 + $0xa8] sm:$0xff]
        %v866 = vld [vmem:[#allocation5 + $0xb0] sm:$0xff]
        %v867 = vld [vmem:[#allocation5 + $0xb8] sm:$0xff]
        %v868 = vld [vmem:[#allocation5 + $0xc0] sm:$0xff]
        %v869 = vld [vmem:[#allocation5 + $0xc8] sm:$0xff]
        %v870 = vld [vmem:[#allocation5 + $0xd0] sm:$0xff]
        %v871 = vld [vmem:[#allocation5 + $0xd8] sm:$0xff]
        %v872 = vld [vmem:[#allocation5 + $0xe0] sm:$0xff]
        %v873 = vld [vmem:[#allocation5 + $0xe8] sm:$0xff]
        %v874 = vld [vmem:[#allocation5 + $0xf0] sm:$0xff]
        %v875 = vld [vmem:[#allocation5 + $0xf8] sm:$0xff]
        %v876 = vld [vmem:[#allocation5 + $0x100] sm:$0xff]
        %v877 = vld [vmem:[#allocation5 + $0x108] sm:$0xff]
        %v878 = vld [vmem:[#allocation5 + $0x110] sm:$0xff]
        %v879 = vld [vmem:[#allocation5 + $0x118] sm:$0xff]
        %v880 = vld [vmem:[#allocation5 + $0x120] sm:$0xff]
        %v881 = vld [vmem:[#allocation5 + $0x128] sm:$0xff]
        %v882 = vld [vmem:[#allocation5 + $0x130] sm:$0xff]
        %v883 = vld [vmem:[#allocation5 + $0x138] sm:$0xff]
        %v884 = vld [vmem:[#allocation5 + $0x140] sm:$0xff]
        %v885 = vld [vmem:[#allocation5 + $0x148] sm:$0xff]
        %v886 = vld [vmem:[#allocation5 + $0x150] sm:$0xff]
        %v887 = vld [vmem:[#allocation5 + $0x158] sm:$0xff]
        %v888 = vld [vmem:[#allocation5 + $0x160] sm:$0xff]
        %v889 = vld [vmem:[#allocation5 + $0x168] sm:$0xff]
        %v890 = vld [vmem:[#allocation5 + $0x170] sm:$0xff]
        %v891 = vld [vmem:[#allocation5 + $0x178] sm:$0xff]
        %892 = vmatprep.subr.mxu0 %v890
        %893 = vmatpush1.msra.mxu0 %v889
        %894 = vmatprep.subr.mxu0 %v887
        %895 = vmatpush1.msra.mxu0 %v886
        %896 = vmatprep.subr.mxu0 %v884
        %897 = vmatpush1.msra.mxu0 %v883
        %898 = vmatprep.subr.mxu0 %v881
        %899 = vmatpush1.msra.mxu0 %v880
        %900 = vmatprep.subr.mxu0 %v878
        %901 = vmatpush1.msra.mxu0 %v877
        %902 = vmatprep.subr.mxu0 %v875
        %903 = vmatpush1.msra.mxu0 %v874
        %904 = vmatprep.subr.mxu0 %v872
        %905 = vmatpush1.msra.mxu0 %v871
        %906 = vmatprep.subr.mxu0 %v869
        %907 = vmatpush1.msra.mxu0 %v868
        %908 = vmatprep.subr.mxu0 %v866
        %909 = vmatpush1.msra.mxu0 %v865
        %910 = vmatprep.subr.mxu0 %v863
        %911 = vmatpush1.msra.mxu0 %v862
        %912 = vmatprep.subr.mxu0 %v860
        %913 = vmatpush1.msra.mxu0 %v859
        %914 = vmatprep.subr.mxu0 %v857
        %915 = vmatpush1.msra.mxu0 %v856
        %916 = vmatprep.subr.mxu0 %v854
        %917 = vmatpush1.msra.mxu0 %v853
        %918 = vmatprep.subr.mxu0 %v851
        %919 = vmatpush1.msra.mxu0 %v850
        %920 = vmatprep.subr.mxu0 %v848
        %921 = vmatpush1.msra.mxu0 %v847
        %922 = vmatprep.subr.mxu0 %v845
        %923 = vmatpush1.msra.mxu0 %v844
        %924 = vmatprep.subr.mxu0 0.0
        %925 = vmatpush2.msra.mxu0 0.0
        %926 = vmatprep.subr.mxu0 0.0
        %927 = vmatpush2.msra.mxu0 0.0
        %928 = vmatprep.subr.mxu0 0.0
        %929 = vmatpush2.msra.mxu0 0.0
        %930 = vmatprep.subr.mxu0 0.0
        %931 = vmatpush2.msra.mxu0 0.0
        %932 = vmatprep.subr.mxu0 0.0
        %933 = vmatpush2.msra.mxu0 0.0
        %934 = vmatprep.subr.mxu0 0.0
        %935 = vmatpush2.msra.mxu0 0.0
        %936 = vmatprep.subr.mxu0 0.0
        %937 = vmatpush2.msra.mxu0 0.0
        %938 = vmatprep.subr.mxu0 0.0
        %939 = vmatpush2.msra.mxu0 0.0
        %940 = vmatprep.subr.mxu0 0.0
        %941 = vmatpush2.msra.mxu0 0.0
        %942 = vmatprep.subr.mxu0 0.0
        %943 = vmatpush2.msra.mxu0 0.0
        %944 = vmatprep.subr.mxu0 0.0
        %945 = vmatpush2.msra.mxu0 0.0
        %946 = vmatprep.subr.mxu0 0.0
        %947 = vmatpush2.msra.mxu0 0.0
        %948 = vmatprep.subr.mxu0 0.0
        %949 = vmatpush2.msra.mxu0 0.0
        %950 = vmatprep.subr.mxu0 0.0
        %951 = vmatpush2.msra.mxu0 0.0
        %952 = vmatprep.subr.mxu0 0.0
        %953 = vmatpush2.msra.mxu0 0.0
        %954 = vmatprep.subr.mxu0 0.0
        %955 = vmatpush2.msra.mxu0 0.0
        %956 = vmatprep.mubr.f32.mxu0 0.0
        %957 = vmatmul.mubr.f32.gmra.mxu0 %v832
        %v958 = vpop.f32.mrf.mxu0
        %v959 = vadd.f32 0.0, %v958
        %v960 = vpop.f32.mrf.mxu0
        %v961 = vadd.f32 0.0, %v960
        %962 = vdwg.mxu0
        %963 = vmatprep.subr.mxu0 0.0
        %964 = vmatpush1.msra.mxu0 %v891
        %965 = vmatprep.subr.mxu0 0.0
        %966 = vmatpush1.msra.mxu0 %v888
        %967 = vmatprep.subr.mxu0 0.0
        %968 = vmatpush1.msra.mxu0 %v885
        %969 = vmatprep.subr.mxu0 0.0
        %970 = vmatpush1.msra.mxu0 %v882
        %971 = vmatprep.subr.mxu0 0.0
        %972 = vmatpush1.msra.mxu0 %v879
        %973 = vmatprep.subr.mxu0 0.0
        %974 = vmatpush1.msra.mxu0 %v876
        %975 = vmatprep.subr.mxu0 0.0
        %976 = vmatpush1.msra.mxu0 %v873
        %977 = vmatprep.subr.mxu0 0.0
        %978 = vmatpush1.msra.mxu0 %v870
        %979 = vmatprep.subr.mxu0 0.0
        %980 = vmatpush1.msra.mxu0 %v867
        %981 = vmatprep.subr.mxu0 0.0
        %982 = vmatpush1.msra.mxu0 %v864
        %983 = vmatprep.subr.mxu0 0.0
        %984 = vmatpush1.msra.mxu0 %v861
        %985 = vmatprep.subr.mxu0 0.0
        %986 = vmatpush1.msra.mxu0 %v858
        %987 = vmatprep.subr.mxu0 0.0
        %988 = vmatpush1.msra.mxu0 %v855
        %989 = vmatprep.subr.mxu0 0.0
        %990 = vmatpush1.msra.mxu0 %v852
        %991 = vmatprep.subr.mxu0 0.0
        %992 = vmatpush1.msra.mxu0 %v849
        %993 = vmatprep.subr.mxu0 0.0
        %994 = vmatpush1.msra.mxu0 %v846
        %995 = vmatprep.subr.mxu0 0.0
        %996 = vmatpush2.msra.mxu0 0.0
        %997 = vmatprep.subr.mxu0 0.0
        %998 = vmatpush2.msra.mxu0 0.0
        %999 = vmatprep.subr.mxu0 0.0
        %1000 = vmatpush2.msra.mxu0 0.0
        %1001 = vmatprep.subr.mxu0 0.0
        %1002 = vmatpush2.msra.mxu0 0.0
        %1003 = vmatprep.subr.mxu0 0.0
        %1004 = vmatpush2.msra.mxu0 0.0
        %1005 = vmatprep.subr.mxu0 0.0
        %1006 = vmatpush2.msra.mxu0 0.0
        %1007 = vmatprep.subr.mxu0 0.0
        %1008 = vmatpush2.msra.mxu0 0.0
        %1009 = vmatprep.subr.mxu0 0.0
        %1010 = vmatpush2.msra.mxu0 0.0
        %1011 = vmatprep.subr.mxu0 0.0
        %1012 = vmatpush2.msra.mxu0 0.0
        %1013 = vmatprep.subr.mxu0 0.0
        %1014 = vmatpush2.msra.mxu0 0.0
        %1015 = vmatprep.subr.mxu0 0.0
        %1016 = vmatpush2.msra.mxu0 0.0
        %1017 = vmatprep.subr.mxu0 0.0
        %1018 = vmatpush2.msra.mxu0 0.0
        %1019 = vmatprep.subr.mxu0 0.0
        %1020 = vmatpush2.msra.mxu0 0.0
        %1021 = vmatprep.subr.mxu0 0.0
        %1022 = vmatpush2.msra.mxu0 0.0
        %1023 = vmatprep.subr.mxu0 0.0
        %1024 = vmatpush2.msra.mxu0 0.0
        %1025 = vmatprep.subr.mxu0 0.0
        %1026 = vmatpush2.msra.mxu0 0.0
        %1027 = vmatprep.mubr.f32.mxu0 0.0
        %1028 = vmatmul.mubr.f32.gmra.mxu0 %v832
        %v1029 = vpop.f32.mrf.mxu0
        %v1030 = vadd.f32 0.0, %v1029
        %v1031 = vpop.f32.mrf.mxu0
        %1032 = vdwg.mxu0
        %v1033 = vmax.f32 %v959, %v961
        %v1034 = vmax.f32 %v1033, %v1030
        %v1035 = vld [vmem:[#allocation7] sm:$0xff]
        %v1036 = vld [vmem:[#allocation7 + $0x8] sm:$0xff]
        %v1037 = vld [vmem:[#allocation7 + $0x10] sm:$0xff]
        %v1038 = vld [vmem:[#allocation7 + $0x18] sm:$0xff]
        %v1039 = vld [vmem:[#allocation7 + $0x20] sm:$0xff]
        %v1040 = vld [vmem:[#allocation7 + $0x28] sm:$0xff]
        %v1041 = vld [vmem:[#allocation7 + $0x30] sm:$0xff]
        %v1042 = vld [vmem:[#allocation7 + $0x38] sm:$0xff]
        %v1043 = vld [vmem:[#allocation7 + $0x40] sm:$0xff]
        %v1044 = vld [vmem:[#allocation7 + $0x48] sm:$0xff]
        %v1045 = vld [vmem:[#allocation7 + $0x50] sm:$0xff]
        %v1046 = vld [vmem:[#allocation7 + $0x58] sm:$0xff]
        %v1047 = vld [vmem:[#allocation7 + $0x60] sm:$0xff]
        %v1048 = vld [vmem:[#allocation7 + $0x68] sm:$0xff]
        %v1049 = vld [vmem:[#allocation7 + $0x70] sm:$0xff]
        %v1050 = vld [vmem:[#allocation7 + $0x78] sm:$0xff]
        %v1051 = vld [vmem:[%s3] sm:$0x1]
        %v1053 = vlaneseq
        %v1054 = vshrl.u32 %v1053, 7
        %v1055 = vsub.s32 0, %v1054
        %v1056 = vrot.slane %v1051, %v1055
        %1058 = vmatprep.subr.mxu0 0.0
        %1059 = vmatpush1.msra.mxu0 %v1050
        %1060 = vmatprep.subr.mxu0 0.0
        %1061 = vmatpush1.msra.mxu0 %v1049
        %1062 = vmatprep.subr.mxu0 0.0
        %1063 = vmatpush1.msra.mxu0 %v1048
        %1064 = vmatprep.subr.mxu0 0.0
        %1065 = vmatpush1.msra.mxu0 %v1047
        %1066 = vmatprep.subr.mxu0 0.0
        %1067 = vmatpush1.msra.mxu0 %v1046
        %1068 = vmatprep.subr.mxu0 0.0
        %1069 = vmatpush1.msra.mxu0 %v1045
        %1070 = vmatprep.subr.mxu0 0.0
        %1071 = vmatpush1.msra.mxu0 %v1044
        %1072 = vmatprep.subr.mxu0 0.0
        %1073 = vmatpush1.msra.mxu0 %v1043
        %1074 = vmatprep.subr.mxu0 0.0
        %1075 = vmatpush1.msra.mxu0 %v1042
        %1076 = vmatprep.subr.mxu0 0.0
        %1077 = vmatpush1.msra.mxu0 %v1041
        %1078 = vmatprep.subr.mxu0 0.0
        %1079 = vmatpush1.msra.mxu0 %v1040
        %1080 = vmatprep.subr.mxu0 0.0
        %1081 = vmatpush1.msra.mxu0 %v1039
        %1082 = vmatprep.subr.mxu0 0.0
        %1083 = vmatpush1.msra.mxu0 %v1038
        %1084 = vmatprep.subr.mxu0 0.0
        %1085 = vmatpush1.msra.mxu0 %v1037
        %1086 = vmatprep.subr.mxu0 0.0
        %1087 = vmatpush1.msra.mxu0 %v1036
        %1088 = vmatprep.subr.mxu0 0.0
        %1089 = vmatpush1.msra.mxu0 %v1035
        %1090 = vmatprep.subr.mxu0 0.0
        %1091 = vmatpush2.msra.mxu0 0.0
        %1092 = vmatprep.subr.mxu0 0.0
        %1093 = vmatpush2.msra.mxu0 0.0
        %1094 = vmatprep.subr.mxu0 0.0
        %1095 = vmatpush2.msra.mxu0 0.0
        %1096 = vmatprep.subr.mxu0 0.0
        %1097 = vmatpush2.msra.mxu0 0.0
        %1098 = vmatprep.subr.mxu0 0.0
        %1099 = vmatpush2.msra.mxu0 0.0
        %1100 = vmatprep.subr.mxu0 0.0
        %1101 = vmatpush2.msra.mxu0 0.0
        %1102 = vmatprep.subr.mxu0 0.0
        %1103 = vmatpush2.msra.mxu0 0.0
        %1104 = vmatprep.subr.mxu0 0.0
        %1105 = vmatpush2.msra.mxu0 0.0
        %1106 = vmatprep.subr.mxu0 0.0
        %1107 = vmatpush2.msra.mxu0 0.0
        %1108 = vmatprep.subr.mxu0 0.0
        %1109 = vmatpush2.msra.mxu0 0.0
        %1110 = vmatprep.subr.mxu0 0.0
        %1111 = vmatpush2.msra.mxu0 0.0
        %1112 = vmatprep.subr.mxu0 0.0
        %1113 = vmatpush2.msra.mxu0 0.0
        %1114 = vmatprep.subr.mxu0 0.0
        %1115 = vmatpush2.msra.mxu0 0.0
        %1116 = vmatprep.subr.mxu0 0.0
        %1117 = vmatpush2.msra.mxu0 0.0
        %1118 = vmatprep.subr.mxu0 0.0
        %1119 = vmatpush2.msra.mxu0 0.0
        %1120 = vmatprep.subr.mxu0 0.0
        %1121 = vmatpush2.msra.mxu0 0.0
        %1122 = vmatprep.mubr.f32.mxu0 0.0
        %1123 = vmatmul.mubr.f32.gmra.mxu0 %v1034
        %v1124 = vpop.f32.mrf.mxu0
        %v1125 = vadd.f32 %v1056, %v1124
        %v1126 = vpop.f32.mrf.mxu0
        %1127 = vdwg.mxu0
        %v1128 = vmax.f32 %v1125, 0.0
        %v1129 = vld [vmem:[#allocation8] sm:$0xff]
        %v1130 = vld [vmem:[#allocation8 + $0x8] sm:$0xff]
        %v1131 = vld [vmem:[#allocation8 + $0x10] sm:$0xff]
        %v1132 = vld [vmem:[#allocation8 + $0x18] sm:$0xff]
        %v1133 = vld [vmem:[#allocation8 + $0x20] sm:$0xff]
        %v1134 = vld [vmem:[#allocation8 + $0x28] sm:$0xff]
        %v1135 = vld [vmem:[#allocation8 + $0x30] sm:$0xff]
        %v1136 = vld [vmem:[#allocation8 + $0x38] sm:$0xff]
        %v1137 = vld [vmem:[#allocation8 + $0x40] sm:$0xff]
        %v1138 = vld [vmem:[#allocation8 + $0x48] sm:$0xff]
        %v1139 = vld [vmem:[#allocation8 + $0x50] sm:$0xff]
        %v1140 = vld [vmem:[#allocation8 + $0x58] sm:$0xff]
        %v1141 = vld [vmem:[#allocation8 + $0x60] sm:$0xff]
        %v1142 = vld [vmem:[#allocation8 + $0x68] sm:$0xff]
        %v1143 = vld [vmem:[#allocation8 + $0x70] sm:$0xff]
        %v1144 = vld [vmem:[#allocation8 + $0x78] sm:$0xff]
        %v1145 = vld [vmem:[%s5] sm:$0x1]
        %v1147 = vlaneseq
        %v1148 = vshrl.u32 %v1147, 7
        %v1149 = vsub.s32 0, %v1148
        %v1150 = vrot.slane %v1145, %v1149
        %1152 = vmatprep.subr.mxu0 0.0
        %1153 = vmatpush1.msra.mxu0 %v1144
        %1154 = vmatprep.subr.mxu0 0.0
        %1155 = vmatpush1.msra.mxu0 %v1143
        %1156 = vmatprep.subr.mxu0 0.0
        %1157 = vmatpush1.msra.mxu0 %v1142
        %1158 = vmatprep.subr.mxu0 0.0
        %1159 = vmatpush1.msra.mxu0 %v1141
        %1160 = vmatprep.subr.mxu0 0.0
        %1161 = vmatpush1.msra.mxu0 %v1140
        %1162 = vmatprep.subr.mxu0 0.0
        %1163 = vmatpush1.msra.mxu0 %v1139
        %1164 = vmatprep.subr.mxu0 0.0
        %1165 = vmatpush1.msra.mxu0 %v1138
        %1166 = vmatprep.subr.mxu0 0.0
        %1167 = vmatpush1.msra.mxu0 %v1137
        %1168 = vmatprep.subr.mxu0 0.0
        %1169 = vmatpush1.msra.mxu0 %v1136
        %1170 = vmatprep.subr.mxu0 0.0
        %1171 = vmatpush1.msra.mxu0 %v1135
        %1172 = vmatprep.subr.mxu0 0.0
        %1173 = vmatpush1.msra.mxu0 %v1134
        %1174 = vmatprep.subr.mxu0 0.0
        %1175 = vmatpush1.msra.mxu0 %v1133
        %1176 = vmatprep.subr.mxu0 0.0
        %1177 = vmatpush1.msra.mxu0 %v1132
        %1178 = vmatprep.subr.mxu0 0.0
        %1179 = vmatpush1.msra.mxu0 %v1131
        %1180 = vmatprep.subr.mxu0 0.0
        %1181 = vmatpush1.msra.mxu0 %v1130
        %1182 = vmatprep.subr.mxu0 0.0
        %1183 = vmatpush1.msra.mxu0 %v1129
        %1184 = vmatprep.subr.mxu0 0.0
        %1185 = vmatpush2.msra.mxu0 0.0
        %1186 = vmatprep.subr.mxu0 0.0
        %1187 = vmatpush2.msra.mxu0 0.0
        %1188 = vmatprep.subr.mxu0 0.0
        %1189 = vmatpush2.msra.mxu0 0.0
        %1190 = vmatprep.subr.mxu0 0.0
        %1191 = vmatpush2.msra.mxu0 0.0
        %1192 = vmatprep.subr.mxu0 0.0
        %1193 = vmatpush2.msra.mxu0 0.0
        %1194 = vmatprep.subr.mxu0 0.0
        %1195 = vmatpush2.msra.mxu0 0.0
        %1196 = vmatprep.subr.mxu0 0.0
        %1197 = vmatpush2.msra.mxu0 0.0
        %1198 = vmatprep.subr.mxu0 0.0
        %1199 = vmatpush2.msra.mxu0 0.0
        %1200 = vmatprep.subr.mxu0 0.0
        %1201 = vmatpush2.msra.mxu0 0.0
        %1202 = vmatprep.subr.mxu0 0.0
        %1203 = vmatpush2.msra.mxu0 0.0
        %1204 = vmatprep.subr.mxu0 0.0
        %1205 = vmatpush2.msra.mxu0 0.0
        %1206 = vmatprep.subr.mxu0 0.0
        %1207 = vmatpush2.msra.mxu0 0.0
        %1208 = vmatprep.subr.mxu0 0.0
        %1209 = vmatpush2.msra.mxu0 0.0
        %1210 = vmatprep.subr.mxu0 0.0
        %1211 = vmatpush2.msra.mxu0 0.0
        %1212 = vmatprep.subr.mxu0 0.0
        %1213 = vmatpush2.msra.mxu0 0.0
        %1214 = vmatprep.subr.mxu0 0.0
        %1215 = vmatpush2.msra.mxu0 0.0
        %1216 = vmatprep.mubr.f32.mxu0 0.0
        %1217 = vmatmul.mubr.f32.gmra.mxu0 %v1128
        %v1218 = vpop.f32.mrf.mxu0
        %v1219 = vadd.f32 %v1150, %v1218
        %v1220 = vpop.f32.mrf.mxu0
        %1221 = vdwg.mxu0
        %v1222 = vmax.f32 %v1219, 0.0
        %v1223 = vld [vmem:[#allocation10] sm:$0xff]
        %v1224 = vld [vmem:[#allocation10 + $0x8] sm:$0xff]
        %v1225 = vld [vmem:[#allocation10 + $0x10] sm:$0xff]
        %v1226 = vld [vmem:[#allocation10 + $0x18] sm:$0xff]
        %v1227 = vld [vmem:[#allocation10 + $0x20] sm:$0xff]
        %v1228 = vld [vmem:[#allocation10 + $0x28] sm:$0xff]
        %v1229 = vld [vmem:[#allocation10 + $0x30] sm:$0xff]
        %v1230 = vld [vmem:[#allocation10 + $0x38] sm:$0xff]
        %v1231 = vld [vmem:[#allocation10 + $0x40] sm:$0xff]
        %v1232 = vld [vmem:[#allocation10 + $0x48] sm:$0xff]
        %v1233 = vld [vmem:[#allocation10 + $0x50] sm:$0xff]
        %v1234 = vld [vmem:[#allocation10 + $0x58] sm:$0xff]
        %v1235 = vld [vmem:[#allocation10 + $0x60] sm:$0xff]
        %v1236 = vld [vmem:[#allocation10 + $0x68] sm:$0xff]
        %v1237 = vld [vmem:[#allocation10 + $0x70] sm:$0xff]
        %v1238 = vld [vmem:[#allocation10 + $0x78] sm:$0xff]
        %v1239 = vld [vmem:[#allocation10 + $0x80] sm:$0xff]
        %v1240 = vld [vmem:[#allocation10 + $0x88] sm:$0xff]
        %v1241 = vld [vmem:[#allocation10 + $0x90] sm:$0xff]
        %v1242 = vld [vmem:[#allocation10 + $0x98] sm:$0xff]
        %v1243 = vld [vmem:[#allocation10 + $0xa0] sm:$0xff]
        %v1244 = vld [vmem:[#allocation10 + $0xa8] sm:$0xff]
        %v1245 = vld [vmem:[#allocation10 + $0xb0] sm:$0xff]
        %v1246 = vld [vmem:[#allocation10 + $0xb8] sm:$0xff]
        %v1247 = vld [vmem:[#allocation10 + $0xc0] sm:$0xff]
        %v1248 = vld [vmem:[#allocation10 + $0xc8] sm:$0xff]
        %v1249 = vld [vmem:[#allocation10 + $0xd0] sm:$0xff]
        %v1250 = vld [vmem:[#allocation10 + $0xd8] sm:$0xff]
        %v1251 = vld [vmem:[#allocation10 + $0xe0] sm:$0xff]
        %v1252 = vld [vmem:[#allocation10 + $0xe8] sm:$0xff]
        %v1253 = vld [vmem:[#allocation10 + $0xf0] sm:$0xff]
        %v1254 = vld [vmem:[#allocation10 + $0xf8] sm:$0xff]
        %v1255 = vld [vmem:[%s7] sm:$0x3]
        %v1257 = vlaneseq
        %v1258 = vshrl.u32 %v1257, 7
        %v1259 = vsub.s32 0, %v1258
        %v1260 = vrot.slane %v1255, %v1259
        %v1261 = vlaneseq
        %v1262 = vshrl.u32 %v1261, 7
        %v1263 = vsub.s32 1, %v1262
        %v1264 = vrot.slane %v1255, %v1263
        %1267 = vmatprep.subr.mxu0 %v1254
        %1268 = vmatpush1.msra.mxu0 %v1253
        %1269 = vmatprep.subr.mxu0 %v1252
        %1270 = vmatpush1.msra.mxu0 %v1251
        %1271 = vmatprep.subr.mxu0 %v1250
        %1272 = vmatpush1.msra.mxu0 %v1249
        %1273 = vmatprep.subr.mxu0 %v1248
        %1274 = vmatpush1.msra.mxu0 %v1247
        %1275 = vmatprep.subr.mxu0 %v1246
        %1276 = vmatpush1.msra.mxu0 %v1245
        %1277 = vmatprep.subr.mxu0 %v1244
        %1278 = vmatpush1.msra.mxu0 %v1243
        %1279 = vmatprep.subr.mxu0 %v1242
        %1280 = vmatpush1.msra.mxu0 %v1241
        %1281 = vmatprep.subr.mxu0 %v1240
        %1282 = vmatpush1.msra.mxu0 %v1239
        %1283 = vmatprep.subr.mxu0 %v1238
        %1284 = vmatpush1.msra.mxu0 %v1237
        %1285 = vmatprep.subr.mxu0 %v1236
        %1286 = vmatpush1.msra.mxu0 %v1235
        %1287 = vmatprep.subr.mxu0 %v1234
        %1288 = vmatpush1.msra.mxu0 %v1233
        %1289 = vmatprep.subr.mxu0 %v1232
        %1290 = vmatpush1.msra.mxu0 %v1231
        %1291 = vmatprep.subr.mxu0 %v1230
        %1292 = vmatpush1.msra.mxu0 %v1229
        %1293 = vmatprep.subr.mxu0 %v1228
        %1294 = vmatpush1.msra.mxu0 %v1227
        %1295 = vmatprep.subr.mxu0 %v1226
        %1296 = vmatpush1.msra.mxu0 %v1225
        %1297 = vmatprep.subr.mxu0 %v1224
        %1298 = vmatpush1.msra.mxu0 %v1223
        %1299 = vmatprep.subr.mxu0 0.0
        %1300 = vmatpush2.msra.mxu0 0.0
        %1301 = vmatprep.subr.mxu0 0.0
        %1302 = vmatpush2.msra.mxu0 0.0
        %1303 = vmatprep.subr.mxu0 0.0
        %1304 = vmatpush2.msra.mxu0 0.0
        %1305 = vmatprep.subr.mxu0 0.0
        %1306 = vmatpush2.msra.mxu0 0.0
        %1307 = vmatprep.subr.mxu0 0.0
        %1308 = vmatpush2.msra.mxu0 0.0
        %1309 = vmatprep.subr.mxu0 0.0
        %1310 = vmatpush2.msra.mxu0 0.0
        %1311 = vmatprep.subr.mxu0 0.0
        %1312 = vmatpush2.msra.mxu0 0.0
        %1313 = vmatprep.subr.mxu0 0.0
        %1314 = vmatpush2.msra.mxu0 0.0
        %1315 = vmatprep.subr.mxu0 0.0
        %1316 = vmatpush2.msra.mxu0 0.0
        %1317 = vmatprep.subr.mxu0 0.0
        %1318 = vmatpush2.msra.mxu0 0.0
        %1319 = vmatprep.subr.mxu0 0.0
        %1320 = vmatpush2.msra.mxu0 0.0
        %1321 = vmatprep.subr.mxu0 0.0
        %1322 = vmatpush2.msra.mxu0 0.0
        %1323 = vmatprep.subr.mxu0 0.0
        %1324 = vmatpush2.msra.mxu0 0.0
        %1325 = vmatprep.subr.mxu0 0.0
        %1326 = vmatpush2.msra.mxu0 0.0
        %1327 = vmatprep.subr.mxu0 0.0
        %1328 = vmatpush2.msra.mxu0 0.0
        %1329 = vmatprep.subr.mxu0 0.0
        %1330 = vmatpush2.msra.mxu0 0.0
        %1331 = vmatprep.mubr.f32.mxu0 0.0
        %1332 = vmatmul.mubr.f32.gmra.mxu0 %v1222
        %v1333 = vpop.f32.mrf.mxu0
        %v1334 = vadd.f32 %v1260, %v1333
        %v1335 = vpop.f32.mrf.mxu0
        %v1336 = vadd.f32 %v1264, %v1335
        %1337 = vdwg.mxu0
        %v1338 = vsub.f32 %v832, %v1334
        %v1339 = vmul.f32 %v1338, %v838
        %v1340 = vadd.f32 %v842, %v1336
        %v1341 = vld [vmem:[#allocation11] sm:$0xff]
        %v1342 = vld [vmem:[#allocation11 + $0x8] sm:$0xff]
        %v1343 = vld [vmem:[#allocation11 + $0x10] sm:$0xff]
        %v1344 = vld [vmem:[#allocation11 + $0x18] sm:$0xff]
        %v1345 = vld [vmem:[#allocation11 + $0x20] sm:$0xff]
        %v1346 = vld [vmem:[#allocation11 + $0x28] sm:$0xff]
        %v1347 = vld [vmem:[#allocation11 + $0x30] sm:$0xff]
        %v1348 = vld [vmem:[#allocation11 + $0x38] sm:$0xff]
        %v1349 = vld [vmem:[#allocation11 + $0x40] sm:$0xff]
        %v1350 = vld [vmem:[#allocation11 + $0x48] sm:$0xff]
        %v1351 = vld [vmem:[#allocation11 + $0x50] sm:$0xff]
        %v1352 = vld [vmem:[#allocation11 + $0x58] sm:$0xff]
        %v1353 = vld [vmem:[#allocation11 + $0x60] sm:$0xff]
        %v1354 = vld [vmem:[#allocation11 + $0x68] sm:$0xff]
        %v1355 = vld [vmem:[#allocation11 + $0x70] sm:$0xff]
        %v1356 = vld [vmem:[#allocation11 + $0x78] sm:$0xff]
        %v1357 = vld [vmem:[#allocation11 + $0x80] sm:$0xff]
        %v1358 = vld [vmem:[#allocation11 + $0x88] sm:$0xff]
        %v1359 = vld [vmem:[#allocation11 + $0x90] sm:$0xff]
        %v1360 = vld [vmem:[#allocation11 + $0x98] sm:$0xff]
        %v1361 = vld [vmem:[#allocation11 + $0xa0] sm:$0xff]
        %v1362 = vld [vmem:[#allocation11 + $0xa8] sm:$0xff]
        %v1363 = vld [vmem:[#allocation11 + $0xb0] sm:$0xff]
        %v1364 = vld [vmem:[#allocation11 + $0xb8] sm:$0xff]
        %v1365 = vld [vmem:[#allocation11 + $0xc0] sm:$0xff]
        %v1366 = vld [vmem:[#allocation11 + $0xc8] sm:$0xff]
        %v1367 = vld [vmem:[#allocation11 + $0xd0] sm:$0xff]
        %v1368 = vld [vmem:[#allocation11 + $0xd8] sm:$0xff]
        %v1369 = vld [vmem:[#allocation11 + $0xe0] sm:$0xff]
        %v1370 = vld [vmem:[#allocation11 + $0xe8] sm:$0xff]
        %v1371 = vld [vmem:[#allocation11 + $0xf0] sm:$0xff]
        %v1372 = vld [vmem:[#allocation11 + $0xf8] sm:$0xff]
        %1373 = vmatprep.subr.mxu0 %v1372
        %1374 = vmatpush1.msra.mxu0 %v1371
        %1375 = vmatprep.subr.mxu0 %v1370
        %1376 = vmatpush1.msra.mxu0 %v1369
        %1377 = vmatprep.subr.mxu0 %v1368
        %1378 = vmatpush1.msra.mxu0 %v1367
        %1379 = vmatprep.subr.mxu0 %v1366
        %1380 = vmatpush1.msra.mxu0 %v1365
        %1381 = vmatprep.subr.mxu0 %v1364
        %1382 = vmatpush1.msra.mxu0 %v1363
        %1383 = vmatprep.subr.mxu0 %v1362
        %1384 = vmatpush1.msra.mxu0 %v1361
        %1385 = vmatprep.subr.mxu0 %v1360
        %1386 = vmatpush1.msra.mxu0 %v1359
        %1387 = vmatprep.subr.mxu0 %v1358
        %1388 = vmatpush1.msra.mxu0 %v1357
        %1389 = vmatprep.subr.mxu0 %v1356
        %1390 = vmatpush1.msra.mxu0 %v1355
        %1391 = vmatprep.subr.mxu0 %v1354
        %1392 = vmatpush1.msra.mxu0 %v1353
        %1393 = vmatprep.subr.mxu0 %v1352
        %1394 = vmatpush1.msra.mxu0 %v1351
        %1395 = vmatprep.subr.mxu0 %v1350
        %1396 = vmatpush1.msra.mxu0 %v1349
        %1397 = vmatprep.subr.mxu0 %v1348
        %1398 = vmatpush1.msra.mxu0 %v1347
        %1399 = vmatprep.subr.mxu0 %v1346
        %1400 = vmatpush1.msra.mxu0 %v1345
        %1401 = vmatprep.subr.mxu0 %v1344
        %1402 = vmatpush1.msra.mxu0 %v1343
        %1403 = vmatprep.subr.mxu0 %v1342
        %1404 = vmatpush1.msra.mxu0 %v1341
        %1405 = vmatprep.subr.mxu0 0.0
        %1406 = vmatpush2.msra.mxu0 0.0
        %1407 = vmatprep.subr.mxu0 0.0
        %1408 = vmatpush2.msra.mxu0 0.0
        %1409 = vmatprep.subr.mxu0 0.0
        %1410 = vmatpush2.msra.mxu0 0.0
        %1411 = vmatprep.subr.mxu0 0.0
        %1412 = vmatpush2.msra.mxu0 0.0
        %1413 = vmatprep.subr.mxu0 0.0
        %1414 = vmatpush2.msra.mxu0 0.0
        %1415 = vmatprep.subr.mxu0 0.0
        %1416 = vmatpush2.msra.mxu0 0.0
        %1417 = vmatprep.subr.mxu0 0.0
        %1418 = vmatpush2.msra.mxu0 0.0
        %1419 = vmatprep.subr.mxu0 0.0
        %1420 = vmatpush2.msra.mxu0 0.0
        %1421 = vmatprep.subr.mxu0 0.0
        %1422 = vmatpush2.msra.mxu0 0.0
        %1423 = vmatprep.subr.mxu0 0.0
        %1424 = vmatpush2.msra.mxu0 0.0
        %1425 = vmatprep.subr.mxu0 0.0
        %1426 = vmatpush2.msra.mxu0 0.0
        %1427 = vmatprep.subr.mxu0 0.0
        %1428 = vmatpush2.msra.mxu0 0.0
        %1429 = vmatprep.subr.mxu0 0.0
        %1430 = vmatpush2.msra.mxu0 0.0
        %1431 = vmatprep.subr.mxu0 0.0
        %1432 = vmatpush2.msra.mxu0 0.0
        %1433 = vmatprep.subr.mxu0 0.0
        %1434 = vmatpush2.msra.mxu0 0.0
        %1435 = vmatprep.subr.mxu0 0.0
        %1436 = vmatpush2.msra.mxu0 0.0
        %1437 = vmatprep.mubr.f32.mxu0 0.0
        %1438 = vmatmul.mubr.f32.gmra.mxu0 %v1339
        %v1439 = vpop.f32.mrf.mxu0
        %v1440 = vadd.f32 0.0, %v1439
        %v1441 = vpop.f32.mrf.mxu0
        %v1442 = vadd.f32 0.0, %v1441
        %1443 = vdwg.mxu0
        %v1444 = vmax.f32 %v1440, %v1442
        %v1445 = vld [vmem:[#allocation13] sm:$0xff]
        %v1446 = vld [vmem:[#allocation13 + $0x8] sm:$0xff]
        %v1447 = vld [vmem:[#allocation13 + $0x10] sm:$0xff]
        %v1448 = vld [vmem:[#allocation13 + $0x18] sm:$0xff]
        %v1449 = vld [vmem:[#allocation13 + $0x20] sm:$0xff]
        %v1450 = vld [vmem:[#allocation13 + $0x28] sm:$0xff]
        %v1451 = vld [vmem:[#allocation13 + $0x30] sm:$0xff]
        %v1452 = vld [vmem:[#allocation13 + $0x38] sm:$0xff]
        %v1453 = vld [vmem:[#allocation13 + $0x40] sm:$0xff]
        %v1454 = vld [vmem:[#allocation13 + $0x48] sm:$0xff]
        %v1455 = vld [vmem:[#allocation13 + $0x50] sm:$0xff]
        %v1456 = vld [vmem:[#allocation13 + $0x58] sm:$0xff]
        %v1457 = vld [vmem:[#allocation13 + $0x60] sm:$0xff]
        %v1458 = vld [vmem:[#allocation13 + $0x68] sm:$0xff]
        %v1459 = vld [vmem:[#allocation13 + $0x70] sm:$0xff]
        %v1460 = vld [vmem:[#allocation13 + $0x78] sm:$0xff]
        %v1461 = vld [vmem:[%s10] sm:$0x1]
        %v1463 = vlaneseq
        %v1464 = vshrl.u32 %v1463, 7
        %v1465 = vsub.s32 0, %v1464
        %v1466 = vrot.slane %v1461, %v1465
        %1468 = vmatprep.subr.mxu0 0.0
        %1469 = vmatpush1.msra.mxu0 %v1460
        %1470 = vmatprep.subr.mxu0 0.0
        %1471 = vmatpush1.msra.mxu0 %v1459
        %1472 = vmatprep.subr.mxu0 0.0
        %1473 = vmatpush1.msra.mxu0 %v1458
        %1474 = vmatprep.subr.mxu0 0.0
        %1475 = vmatpush1.msra.mxu0 %v1457
        %1476 = vmatprep.subr.mxu0 0.0
        %1477 = vmatpush1.msra.mxu0 %v1456
        %1478 = vmatprep.subr.mxu0 0.0
        %1479 = vmatpush1.msra.mxu0 %v1455
        %1480 = vmatprep.subr.mxu0 0.0
        %1481 = vmatpush1.msra.mxu0 %v1454
        %1482 = vmatprep.subr.mxu0 0.0
        %1483 = vmatpush1.msra.mxu0 %v1453
        %1484 = vmatprep.subr.mxu0 0.0
        %1485 = vmatpush1.msra.mxu0 %v1452
        %1486 = vmatprep.subr.mxu0 0.0
        %1487 = vmatpush1.msra.mxu0 %v1451
        %1488 = vmatprep.subr.mxu0 0.0
        %1489 = vmatpush1.msra.mxu0 %v1450
        %1490 = vmatprep.subr.mxu0 0.0
        %1491 = vmatpush1.msra.mxu0 %v1449
        %1492 = vmatprep.subr.mxu0 0.0
        %1493 = vmatpush1.msra.mxu0 %v1448
        %1494 = vmatprep.subr.mxu0 0.0
        %1495 = vmatpush1.msra.mxu0 %v1447
        %1496 = vmatprep.subr.mxu0 0.0
        %1497 = vmatpush1.msra.mxu0 %v1446
        %1498 = vmatprep.subr.mxu0 0.0
        %1499 = vmatpush1.msra.mxu0 %v1445
        %1500 = vmatprep.subr.mxu0 0.0
        %1501 = vmatpush2.msra.mxu0 0.0
        %1502 = vmatprep.subr.mxu0 0.0
        %1503 = vmatpush2.msra.mxu0 0.0
        %1504 = vmatprep.subr.mxu0 0.0
        %1505 = vmatpush2.msra.mxu0 0.0
        %1506 = vmatprep.subr.mxu0 0.0
        %1507 = vmatpush2.msra.mxu0 0.0
        %1508 = vmatprep.subr.mxu0 0.0
        %1509 = vmatpush2.msra.mxu0 0.0
        %1510 = vmatprep.subr.mxu0 0.0
        %1511 = vmatpush2.msra.mxu0 0.0
        %1512 = vmatprep.subr.mxu0 0.0
        %1513 = vmatpush2.msra.mxu0 0.0
        %1514 = vmatprep.subr.mxu0 0.0
        %1515 = vmatpush2.msra.mxu0 0.0
        %1516 = vmatprep.subr.mxu0 0.0
        %1517 = vmatpush2.msra.mxu0 0.0
        %1518 = vmatprep.subr.mxu0 0.0
        %1519 = vmatpush2.msra.mxu0 0.0
        %1520 = vmatprep.subr.mxu0 0.0
        %1521 = vmatpush2.msra.mxu0 0.0
        %1522 = vmatprep.subr.mxu0 0.0
        %1523 = vmatpush2.msra.mxu0 0.0
        %1524 = vmatprep.subr.mxu0 0.0
        %1525 = vmatpush2.msra.mxu0 0.0
        %1526 = vmatprep.subr.mxu0 0.0
        %1527 = vmatpush2.msra.mxu0 0.0
        %1528 = vmatprep.subr.mxu0 0.0
        %1529 = vmatpush2.msra.mxu0 0.0
        %1530 = vmatprep.subr.mxu0 0.0
        %1531 = vmatpush2.msra.mxu0 0.0
        %1532 = vmatprep.mubr.f32.mxu0 0.0
        %1533 = vmatmul.mubr.f32.gmra.mxu0 %v1444
        %v1534 = vpop.f32.mrf.mxu0
        %v1535 = vadd.f32 %v1466, %v1534
        %v1536 = vpop.f32.mrf.mxu0
        %1537 = vdwg.mxu0
        %v1538 = vmax.f32 %v1535, 0.0
        %v1539 = vld [vmem:[#allocation14] sm:$0xff]
        %v1540 = vld [vmem:[#allocation14 + $0x8] sm:$0xff]
        %v1541 = vld [vmem:[#allocation14 + $0x10] sm:$0xff]
        %v1542 = vld [vmem:[#allocation14 + $0x18] sm:$0xff]
        %v1543 = vld [vmem:[#allocation14 + $0x20] sm:$0xff]
        %v1544 = vld [vmem:[#allocation14 + $0x28] sm:$0xff]
        %v1545 = vld [vmem:[#allocation14 + $0x30] sm:$0xff]
        %v1546 = vld [vmem:[#allocation14 + $0x38] sm:$0xff]
        %v1547 = vld [vmem:[#allocation14 + $0x40] sm:$0xff]
        %v1548 = vld [vmem:[#allocation14 + $0x48] sm:$0xff]
        %v1549 = vld [vmem:[#allocation14 + $0x50] sm:$0xff]
        %v1550 = vld [vmem:[#allocation14 + $0x58] sm:$0xff]
        %v1551 = vld [vmem:[#allocation14 + $0x60] sm:$0xff]
        %v1552 = vld [vmem:[#allocation14 + $0x68] sm:$0xff]
        %v1553 = vld [vmem:[#allocation14 + $0x70] sm:$0xff]
        %v1554 = vld [vmem:[#allocation14 + $0x78] sm:$0xff]
        %v1555 = vld [vmem:[%s12] sm:$0x1]
        %v1557 = vlaneseq
        %v1558 = vshrl.u32 %v1557, 7
        %v1559 = vsub.s32 0, %v1558
        %v1560 = vrot.slane %v1555, %v1559
        %1562 = vmatprep.subr.mxu0 0.0
        %1563 = vmatpush1.msra.mxu0 %v1554
        %1564 = vmatprep.subr.mxu0 0.0
        %1565 = vmatpush1.msra.mxu0 %v1553
        %1566 = vmatprep.subr.mxu0 0.0
        %1567 = vmatpush1.msra.mxu0 %v1552
        %1568 = vmatprep.subr.mxu0 0.0
        %1569 = vmatpush1.msra.mxu0 %v1551
        %1570 = vmatprep.subr.mxu0 0.0
        %1571 = vmatpush1.msra.mxu0 %v1550
        %1572 = vmatprep.subr.mxu0 0.0
        %1573 = vmatpush1.msra.mxu0 %v1549
        %1574 = vmatprep.subr.mxu0 0.0
        %1575 = vmatpush1.msra.mxu0 %v1548
        %1576 = vmatprep.subr.mxu0 0.0
        %1577 = vmatpush1.msra.mxu0 %v1547
        %1578 = vmatprep.subr.mxu0 0.0
        %1579 = vmatpush1.msra.mxu0 %v1546
        %1580 = vmatprep.subr.mxu0 0.0
        %1581 = vmatpush1.msra.mxu0 %v1545
        %1582 = vmatprep.subr.mxu0 0.0
        %1583 = vmatpush1.msra.mxu0 %v1544
        %1584 = vmatprep.subr.mxu0 0.0
        %1585 = vmatpush1.msra.mxu0 %v1543
        %1586 = vmatprep.subr.mxu0 0.0
        %1587 = vmatpush1.msra.mxu0 %v1542
        %1588 = vmatprep.subr.mxu0 0.0
        %1589 = vmatpush1.msra.mxu0 %v1541
        %1590 = vmatprep.subr.mxu0 0.0
        %1591 = vmatpush1.msra.mxu0 %v1540
        %1592 = vmatprep.subr.mxu0 0.0
        %1593 = vmatpush1.msra.mxu0 %v1539
        %1594 = vmatprep.subr.mxu0 0.0
        %1595 = vmatpush2.msra.mxu0 0.0
        %1596 = vmatprep.subr.mxu0 0.0
        %1597 = vmatpush2.msra.mxu0 0.0
        %1598 = vmatprep.subr.mxu0 0.0
        %1599 = vmatpush2.msra.mxu0 0.0
        %1600 = vmatprep.subr.mxu0 0.0
        %1601 = vmatpush2.msra.mxu0 0.0
        %1602 = vmatprep.subr.mxu0 0.0
        %1603 = vmatpush2.msra.mxu0 0.0
        %1604 = vmatprep.subr.mxu0 0.0
        %1605 = vmatpush2.msra.mxu0 0.0
        %1606 = vmatprep.subr.mxu0 0.0
        %1607 = vmatpush2.msra.mxu0 0.0
        %1608 = vmatprep.subr.mxu0 0.0
        %1609 = vmatpush2.msra.mxu0 0.0
        %1610 = vmatprep.subr.mxu0 0.0
        %1611 = vmatpush2.msra.mxu0 0.0
        %1612 = vmatprep.subr.mxu0 0.0
        %1613 = vmatpush2.msra.mxu0 0.0
        %1614 = vmatprep.subr.mxu0 0.0
        %1615 = vmatpush2.msra.mxu0 0.0
        %1616 = vmatprep.subr.mxu0 0.0
        %1617 = vmatpush2.msra.mxu0 0.0
        %1618 = vmatprep.subr.mxu0 0.0
        %1619 = vmatpush2.msra.mxu0 0.0
        %1620 = vmatprep.subr.mxu0 0.0
        %1621 = vmatpush2.msra.mxu0 0.0
        %1622 = vmatprep.subr.mxu0 0.0
        %1623 = vmatpush2.msra.mxu0 0.0
        %1624 = vmatprep.subr.mxu0 0.0
        %1625 = vmatpush2.msra.mxu0 0.0
        %1626 = vmatprep.mubr.f32.mxu0 0.0
        %1627 = vmatmul.mubr.f32.gmra.mxu0 %v1538
        %v1628 = vpop.f32.mrf.mxu0
        %v1629 = vadd.f32 %v1560, %v1628
        %v1630 = vpop.f32.mrf.mxu0
        %1631 = vdwg.mxu0
        %v1632 = vmax.f32 %v1629, 0.0
        %v1633 = vld [vmem:[#allocation16] sm:$0xff]
        %v1634 = vld [vmem:[#allocation16 + $0x8] sm:$0xff]
        %v1635 = vld [vmem:[#allocation16 + $0x10] sm:$0xff]
        %v1636 = vld [vmem:[#allocation16 + $0x18] sm:$0xff]
        %v1637 = vld [vmem:[#allocation16 + $0x20] sm:$0xff]
        %v1638 = vld [vmem:[#allocation16 + $0x28] sm:$0xff]
        %v1639 = vld [vmem:[#allocation16 + $0x30] sm:$0xff]
        %v1640 = vld [vmem:[#allocation16 + $0x38] sm:$0xff]
        %v1641 = vld [vmem:[#allocation16 + $0x40] sm:$0xff]
        %v1642 = vld [vmem:[#allocation16 + $0x48] sm:$0xff]
        %v1643 = vld [vmem:[#allocation16 + $0x50] sm:$0xff]
        %v1644 = vld [vmem:[#allocation16 + $0x58] sm:$0xff]
        %v1645 = vld [vmem:[#allocation16 + $0x60] sm:$0xff]
        %v1646 = vld [vmem:[#allocation16 + $0x68] sm:$0xff]
        %v1647 = vld [vmem:[#allocation16 + $0x70] sm:$0xff]
        %v1648 = vld [vmem:[#allocation16 + $0x78] sm:$0xff]
        %v1649 = vld [vmem:[#allocation16 + $0x80] sm:$0xff]
        %v1650 = vld [vmem:[#allocation16 + $0x88] sm:$0xff]
        %v1651 = vld [vmem:[#allocation16 + $0x90] sm:$0xff]
        %v1652 = vld [vmem:[#allocation16 + $0x98] sm:$0xff]
        %v1653 = vld [vmem:[#allocation16 + $0xa0] sm:$0xff]
        %v1654 = vld [vmem:[#allocation16 + $0xa8] sm:$0xff]
        %v1655 = vld [vmem:[#allocation16 + $0xb0] sm:$0xff]
        %v1656 = vld [vmem:[#allocation16 + $0xb8] sm:$0xff]
        %v1657 = vld [vmem:[#allocation16 + $0xc0] sm:$0xff]
        %v1658 = vld [vmem:[#allocation16 + $0xc8] sm:$0xff]
        %v1659 = vld [vmem:[#allocation16 + $0xd0] sm:$0xff]
        %v1660 = vld [vmem:[#allocation16 + $0xd8] sm:$0xff]
        %v1661 = vld [vmem:[#allocation16 + $0xe0] sm:$0xff]
        %v1662 = vld [vmem:[#allocation16 + $0xe8] sm:$0xff]
        %v1663 = vld [vmem:[#allocation16 + $0xf0] sm:$0xff]
        %v1664 = vld [vmem:[#allocation16 + $0xf8] sm:$0xff]
        %v1665 = vld [vmem:[%s14] sm:$0x3]
        %v1667 = vlaneseq
        %v1668 = vshrl.u32 %v1667, 7
        %v1669 = vsub.s32 0, %v1668
        %v1670 = vrot.slane %v1665, %v1669
        %v1671 = vlaneseq
        %v1672 = vshrl.u32 %v1671, 7
        %v1673 = vsub.s32 1, %v1672
        %v1674 = vrot.slane %v1665, %v1673
        %1677 = vmatprep.subr.mxu0 %v1664
        %1678 = vmatpush1.msra.mxu0 %v1663
        %1679 = vmatprep.subr.mxu0 %v1662
        %1680 = vmatpush1.msra.mxu0 %v1661
        %1681 = vmatprep.subr.mxu0 %v1660
        %1682 = vmatpush1.msra.mxu0 %v1659
        %1683 = vmatprep.subr.mxu0 %v1658
        %1684 = vmatpush1.msra.mxu0 %v1657
        %1685 = vmatprep.subr.mxu0 %v1656
        %1686 = vmatpush1.msra.mxu0 %v1655
        %1687 = vmatprep.subr.mxu0 %v1654
        %1688 = vmatpush1.msra.mxu0 %v1653
        %1689 = vmatprep.subr.mxu0 %v1652
        %1690 = vmatpush1.msra.mxu0 %v1651
        %1691 = vmatprep.subr.mxu0 %v1650
        %1692 = vmatpush1.msra.mxu0 %v1649
        %1693 = vmatprep.subr.mxu0 %v1648
        %1694 = vmatpush1.msra.mxu0 %v1647
        %1695 = vmatprep.subr.mxu0 %v1646
        %1696 = vmatpush1.msra.mxu0 %v1645
        %1697 = vmatprep.subr.mxu0 %v1644
        %1698 = vmatpush1.msra.mxu0 %v1643
        %1699 = vmatprep.subr.mxu0 %v1642
        %1700 = vmatpush1.msra.mxu0 %v1641
        %1701 = vmatprep.subr.mxu0 %v1640
        %1702 = vmatpush1.msra.mxu0 %v1639
        %1703 = vmatprep.subr.mxu0 %v1638
        %1704 = vmatpush1.msra.mxu0 %v1637
        %1705 = vmatprep.subr.mxu0 %v1636
        %1706 = vmatpush1.msra.mxu0 %v1635
        %1707 = vmatprep.subr.mxu0 %v1634
        %1708 = vmatpush1.msra.mxu0 %v1633
        %1709 = vmatprep.subr.mxu0 0.0
        %1710 = vmatpush2.msra.mxu0 0.0
        %1711 = vmatprep.subr.mxu0 0.0
        %1712 = vmatpush2.msra.mxu0 0.0
        %1713 = vmatprep.subr.mxu0 0.0
        %1714 = vmatpush2.msra.mxu0 0.0
        %1715 = vmatprep.subr.mxu0 0.0
        %1716 = vmatpush2.msra.mxu0 0.0
        %1717 = vmatprep.subr.mxu0 0.0
        %1718 = vmatpush2.msra.mxu0 0.0
        %1719 = vmatprep.subr.mxu0 0.0
        %1720 = vmatpush2.msra.mxu0 0.0
        %1721 = vmatprep.subr.mxu0 0.0
        %1722 = vmatpush2.msra.mxu0 0.0
        %1723 = vmatprep.subr.mxu0 0.0
        %1724 = vmatpush2.msra.mxu0 0.0
        %1725 = vmatprep.subr.mxu0 0.0
        %1726 = vmatpush2.msra.mxu0 0.0
        %1727 = vmatprep.subr.mxu0 0.0
        %1728 = vmatpush2.msra.mxu0 0.0
        %1729 = vmatprep.subr.mxu0 0.0
        %1730 = vmatpush2.msra.mxu0 0.0
        %1731 = vmatprep.subr.mxu0 0.0
        %1732 = vmatpush2.msra.mxu0 0.0
        %1733 = vmatprep.subr.mxu0 0.0
        %1734 = vmatpush2.msra.mxu0 0.0
        %1735 = vmatprep.subr.mxu0 0.0
        %1736 = vmatpush2.msra.mxu0 0.0
        %1737 = vmatprep.subr.mxu0 0.0
        %1738 = vmatpush2.msra.mxu0 0.0
        %1739 = vmatprep.subr.mxu0 0.0
        %1740 = vmatpush2.msra.mxu0 0.0
        %1741 = vmatprep.mubr.f32.mxu0 0.0
        %1742 = vmatmul.mubr.f32.gmra.mxu0 %v1632
        %v1743 = vpop.f32.mrf.mxu0
        %v1744 = vadd.f32 %v1670, %v1743
        %v1745 = vpop.f32.mrf.mxu0
        %v1746 = vadd.f32 %v1674, %v1745
        %1747 = vdwg.mxu0
        %v1748 = vsub.f32 %v1339, %v1744
        %v1749 = vmul.f32 %v1748, %v838
        %v1750 = vadd.f32 %v1340, %v1746
        %v1751 = vld [vmem:[#allocation17] sm:$0xff]
        %v1752 = vld [vmem:[#allocation17 + $0x8] sm:$0xff]
        %v1753 = vld [vmem:[#allocation17 + $0x10] sm:$0xff]
        %v1754 = vld [vmem:[#allocation17 + $0x18] sm:$0xff]
        %v1755 = vld [vmem:[#allocation17 + $0x20] sm:$0xff]
        %v1756 = vld [vmem:[#allocation17 + $0x28] sm:$0xff]
        %v1757 = vld [vmem:[#allocation17 + $0x30] sm:$0xff]
        %v1758 = vld [vmem:[#allocation17 + $0x38] sm:$0xff]
        %v1759 = vld [vmem:[#allocation17 + $0x40] sm:$0xff]
        %v1760 = vld [vmem:[#allocation17 + $0x48] sm:$0xff]
        %v1761 = vld [vmem:[#allocation17 + $0x50] sm:$0xff]
        %v1762 = vld [vmem:[#allocation17 + $0x58] sm:$0xff]
        %v1763 = vld [vmem:[#allocation17 + $0x60] sm:$0xff]
        %v1764 = vld [vmem:[#allocation17 + $0x68] sm:$0xff]
        %v1765 = vld [vmem:[#allocation17 + $0x70] sm:$0xff]
        %v1766 = vld [vmem:[#allocation17 + $0x78] sm:$0xff]
        %v1767 = vld [vmem:[%s16] sm:$0x1]
        %v1769 = vlaneseq
        %v1770 = vshrl.u32 %v1769, 7
        %v1771 = vsub.s32 0, %v1770
        %v1772 = vrot.slane %v1767, %v1771
        %1774 = vmatprep.subr.mxu0 0.0
        %1775 = vmatpush1.msra.mxu0 %v1766
        %1776 = vmatprep.subr.mxu0 0.0
        %1777 = vmatpush1.msra.mxu0 %v1765
        %1778 = vmatprep.subr.mxu0 0.0
        %1779 = vmatpush1.msra.mxu0 %v1764
        %1780 = vmatprep.subr.mxu0 0.0
        %1781 = vmatpush1.msra.mxu0 %v1763
        %1782 = vmatprep.subr.mxu0 0.0
        %1783 = vmatpush1.msra.mxu0 %v1762
        %1784 = vmatprep.subr.mxu0 0.0
        %1785 = vmatpush1.msra.mxu0 %v1761
        %1786 = vmatprep.subr.mxu0 0.0
        %1787 = vmatpush1.msra.mxu0 %v1760
        %1788 = vmatprep.subr.mxu0 0.0
        %1789 = vmatpush1.msra.mxu0 %v1759
        %1790 = vmatprep.subr.mxu0 0.0
        %1791 = vmatpush1.msra.mxu0 %v1758
        %1792 = vmatprep.subr.mxu0 0.0
        %1793 = vmatpush1.msra.mxu0 %v1757
        %1794 = vmatprep.subr.mxu0 0.0
        %1795 = vmatpush1.msra.mxu0 %v1756
        %1796 = vmatprep.subr.mxu0 0.0
        %1797 = vmatpush1.msra.mxu0 %v1755
        %1798 = vmatprep.subr.mxu0 0.0
        %1799 = vmatpush1.msra.mxu0 %v1754
        %1800 = vmatprep.subr.mxu0 0.0
        %1801 = vmatpush1.msra.mxu0 %v1753
        %1802 = vmatprep.subr.mxu0 0.0
        %1803 = vmatpush1.msra.mxu0 %v1752
        %1804 = vmatprep.subr.mxu0 0.0
        %1805 = vmatpush1.msra.mxu0 %v1751
        %1806 = vmatprep.subr.mxu0 0.0
        %1807 = vmatpush2.msra.mxu0 0.0
        %1808 = vmatprep.subr.mxu0 0.0
        %1809 = vmatpush2.msra.mxu0 0.0
        %1810 = vmatprep.subr.mxu0 0.0
        %1811 = vmatpush2.msra.mxu0 0.0
        %1812 = vmatprep.subr.mxu0 0.0
        %1813 = vmatpush2.msra.mxu0 0.0
        %1814 = vmatprep.subr.mxu0 0.0
        %1815 = vmatpush2.msra.mxu0 0.0
        %1816 = vmatprep.subr.mxu0 0.0
        %1817 = vmatpush2.msra.mxu0 0.0
        %1818 = vmatprep.subr.mxu0 0.0
        %1819 = vmatpush2.msra.mxu0 0.0
        %1820 = vmatprep.subr.mxu0 0.0
        %1821 = vmatpush2.msra.mxu0 0.0
        %1822 = vmatprep.subr.mxu0 0.0
        %1823 = vmatpush2.msra.mxu0 0.0
        %1824 = vmatprep.subr.mxu0 0.0
        %1825 = vmatpush2.msra.mxu0 0.0
        %1826 = vmatprep.subr.mxu0 0.0
        %1827 = vmatpush2.msra.mxu0 0.0
        %1828 = vmatprep.subr.mxu0 0.0
        %1829 = vmatpush2.msra.mxu0 0.0
        %1830 = vmatprep.subr.mxu0 0.0
        %1831 = vmatpush2.msra.mxu0 0.0
        %1832 = vmatprep.subr.mxu0 0.0
        %1833 = vmatpush2.msra.mxu0 0.0
        %1834 = vmatprep.subr.mxu0 0.0
        %1835 = vmatpush2.msra.mxu0 0.0
        %1836 = vmatprep.subr.mxu0 0.0
        %1837 = vmatpush2.msra.mxu0 0.0
        %1838 = vmatprep.mubr.f32.mxu0 0.0
        %1839 = vmatmul.mubr.f32.gmra.mxu0 %v1749
        %v1840 = vpop.f32.mrf.mxu0
        %v1841 = vadd.f32 %v1772, %v1840
        %v1842 = vpop.f32.mrf.mxu0
        %1843 = vdwg.mxu0
        %v1844 = vmax.f32 %v1841, 0.0
        %v1845 = vld [vmem:[#allocation19] sm:$0xff]
        %v1846 = vld [vmem:[#allocation19 + $0x8] sm:$0xff]
        %v1847 = vld [vmem:[#allocation19 + $0x10] sm:$0xff]
        %v1848 = vld [vmem:[#allocation19 + $0x18] sm:$0xff]
        %v1849 = vld [vmem:[#allocation19 + $0x20] sm:$0xff]
        %v1850 = vld [vmem:[#allocation19 + $0x28] sm:$0xff]
        %v1851 = vld [vmem:[#allocation19 + $0x30] sm:$0xff]
        %v1852 = vld [vmem:[#allocation19 + $0x38] sm:$0xff]
        %v1853 = vld [vmem:[#allocation19 + $0x40] sm:$0xff]
        %v1854 = vld [vmem:[#allocation19 + $0x48] sm:$0xff]
        %v1855 = vld [vmem:[#allocation19 + $0x50] sm:$0xff]
        %v1856 = vld [vmem:[#allocation19 + $0x58] sm:$0xff]
        %v1857 = vld [vmem:[#allocation19 + $0x60] sm:$0xff]
        %v1858 = vld [vmem:[#allocation19 + $0x68] sm:$0xff]
        %v1859 = vld [vmem:[#allocation19 + $0x70] sm:$0xff]
        %v1860 = vld [vmem:[#allocation19 + $0x78] sm:$0xff]
        %v1861 = vld [vmem:[%s18] sm:$0x1]
        %v1863 = vlaneseq
        %v1864 = vshrl.u32 %v1863, 7
        %v1865 = vsub.s32 0, %v1864
        %v1866 = vrot.slane %v1861, %v1865
        %1868 = vmatprep.subr.mxu0 0.0
        %1869 = vmatpush1.msra.mxu0 %v1860
        %1870 = vmatprep.subr.mxu0 0.0
        %1871 = vmatpush1.msra.mxu0 %v1859
        %1872 = vmatprep.subr.mxu0 0.0
        %1873 = vmatpush1.msra.mxu0 %v1858
        %1874 = vmatprep.subr.mxu0 0.0
        %1875 = vmatpush1.msra.mxu0 %v1857
        %1876 = vmatprep.subr.mxu0 0.0
        %1877 = vmatpush1.msra.mxu0 %v1856
        %1878 = vmatprep.subr.mxu0 0.0
        %1879 = vmatpush1.msra.mxu0 %v1855
        %1880 = vmatprep.subr.mxu0 0.0
        %1881 = vmatpush1.msra.mxu0 %v1854
        %1882 = vmatprep.subr.mxu0 0.0
        %1883 = vmatpush1.msra.mxu0 %v1853
        %1884 = vmatprep.subr.mxu0 0.0
        %1885 = vmatpush1.msra.mxu0 %v1852
        %1886 = vmatprep.subr.mxu0 0.0
        %1887 = vmatpush1.msra.mxu0 %v1851
        %1888 = vmatprep.subr.mxu0 0.0
        %1889 = vmatpush1.msra.mxu0 %v1850
        %1890 = vmatprep.subr.mxu0 0.0
        %1891 = vmatpush1.msra.mxu0 %v1849
        %1892 = vmatprep.subr.mxu0 0.0
        %1893 = vmatpush1.msra.mxu0 %v1848
        %1894 = vmatprep.subr.mxu0 0.0
        %1895 = vmatpush1.msra.mxu0 %v1847
        %1896 = vmatprep.subr.mxu0 0.0
        %1897 = vmatpush1.msra.mxu0 %v1846
        %1898 = vmatprep.subr.mxu0 0.0
        %1899 = vmatpush1.msra.mxu0 %v1845
        %1900 = vmatprep.subr.mxu0 0.0
        %1901 = vmatpush2.msra.mxu0 0.0
        %1902 = vmatprep.subr.mxu0 0.0
        %1903 = vmatpush2.msra.mxu0 0.0
        %1904 = vmatprep.subr.mxu0 0.0
        %1905 = vmatpush2.msra.mxu0 0.0
        %1906 = vmatprep.subr.mxu0 0.0
        %1907 = vmatpush2.msra.mxu0 0.0
        %1908 = vmatprep.subr.mxu0 0.0
        %1909 = vmatpush2.msra.mxu0 0.0
        %1910 = vmatprep.subr.mxu0 0.0
        %1911 = vmatpush2.msra.mxu0 0.0
        %1912 = vmatprep.subr.mxu0 0.0
        %1913 = vmatpush2.msra.mxu0 0.0
        %1914 = vmatprep.subr.mxu0 0.0
        %1915 = vmatpush2.msra.mxu0 0.0
        %1916 = vmatprep.subr.mxu0 0.0
        %1917 = vmatpush2.msra.mxu0 0.0
        %1918 = vmatprep.subr.mxu0 0.0
        %1919 = vmatpush2.msra.mxu0 0.0
        %1920 = vmatprep.subr.mxu0 0.0
        %1921 = vmatpush2.msra.mxu0 0.0
        %1922 = vmatprep.subr.mxu0 0.0
        %1923 = vmatpush2.msra.mxu0 0.0
        %1924 = vmatprep.subr.mxu0 0.0
        %1925 = vmatpush2.msra.mxu0 0.0
        %1926 = vmatprep.subr.mxu0 0.0
        %1927 = vmatpush2.msra.mxu0 0.0
        %1928 = vmatprep.subr.mxu0 0.0
        %1929 = vmatpush2.msra.mxu0 0.0
        %1930 = vmatprep.subr.mxu0 0.0
        %1931 = vmatpush2.msra.mxu0 0.0
        %1932 = vmatprep.mubr.f32.mxu0 0.0
        %1933 = vmatmul.mubr.f32.gmra.mxu0 %v1844
        %v1934 = vpop.f32.mrf.mxu0
        %v1935 = vadd.f32 %v1866, %v1934
        %v1936 = vpop.f32.mrf.mxu0
        %1937 = vdwg.mxu0
        %v1938 = vmax.f32 %v1935, 0.0
        %v1939 = vld [vmem:[#allocation20] sm:$0xff]
        %v1940 = vld [vmem:[#allocation20 + $0x8] sm:$0xff]
        %v1941 = vld [vmem:[#allocation20 + $0x10] sm:$0xff]
        %v1942 = vld [vmem:[#allocation20 + $0x18] sm:$0xff]
        %v1943 = vld [vmem:[#allocation20 + $0x20] sm:$0xff]
        %v1944 = vld [vmem:[#allocation20 + $0x28] sm:$0xff]
        %v1945 = vld [vmem:[#allocation20 + $0x30] sm:$0xff]
        %v1946 = vld [vmem:[#allocation20 + $0x38] sm:$0xff]
        %v1947 = vld [vmem:[#allocation20 + $0x40] sm:$0xff]
        %v1948 = vld [vmem:[#allocation20 + $0x48] sm:$0xff]
        %v1949 = vld [vmem:[#allocation20 + $0x50] sm:$0xff]
        %v1950 = vld [vmem:[#allocation20 + $0x58] sm:$0xff]
        %v1951 = vld [vmem:[#allocation20 + $0x60] sm:$0xff]
        %v1952 = vld [vmem:[#allocation20 + $0x68] sm:$0xff]
        %v1953 = vld [vmem:[#allocation20 + $0x70] sm:$0xff]
        %v1954 = vld [vmem:[#allocation20 + $0x78] sm:$0xff]
        %v1955 = vld [vmem:[#allocation20 + $0x80] sm:$0xff]
        %v1956 = vld [vmem:[#allocation20 + $0x88] sm:$0xff]
        %v1957 = vld [vmem:[#allocation20 + $0x90] sm:$0xff]
        %v1958 = vld [vmem:[#allocation20 + $0x98] sm:$0xff]
        %v1959 = vld [vmem:[#allocation20 + $0xa0] sm:$0xff]
        %v1960 = vld [vmem:[#allocation20 + $0xa8] sm:$0xff]
        %v1961 = vld [vmem:[#allocation20 + $0xb0] sm:$0xff]
        %v1962 = vld [vmem:[#allocation20 + $0xb8] sm:$0xff]
        %v1963 = vld [vmem:[#allocation20 + $0xc0] sm:$0xff]
        %v1964 = vld [vmem:[#allocation20 + $0xc8] sm:$0xff]
        %v1965 = vld [vmem:[#allocation20 + $0xd0] sm:$0xff]
        %v1966 = vld [vmem:[#allocation20 + $0xd8] sm:$0xff]
        %v1967 = vld [vmem:[#allocation20 + $0xe0] sm:$0xff]
        %v1968 = vld [vmem:[#allocation20 + $0xe8] sm:$0xff]
        %v1969 = vld [vmem:[#allocation20 + $0xf0] sm:$0xff]
        %v1970 = vld [vmem:[#allocation20 + $0xf8] sm:$0xff]
        %v1971 = vld [vmem:[%s20] sm:$0x3]
        %v1973 = vlaneseq
        %v1974 = vshrl.u32 %v1973, 7
        %v1975 = vsub.s32 1, %v1974
        %v1976 = vrot.slane %v1971, %v1975
        %1978 = vmatprep.subr.mxu0 %v1970
        %1979 = vmatpush1.msra.mxu0 %v1969
        %1980 = vmatprep.subr.mxu0 %v1968
        %1981 = vmatpush1.msra.mxu0 %v1967
        %1982 = vmatprep.subr.mxu0 %v1966
        %1983 = vmatpush1.msra.mxu0 %v1965
        %1984 = vmatprep.subr.mxu0 %v1964
        %1985 = vmatpush1.msra.mxu0 %v1963
        %1986 = vmatprep.subr.mxu0 %v1962
        %1987 = vmatpush1.msra.mxu0 %v1961
        %1988 = vmatprep.subr.mxu0 %v1960
        %1989 = vmatpush1.msra.mxu0 %v1959
        %1990 = vmatprep.subr.mxu0 %v1958
        %1991 = vmatpush1.msra.mxu0 %v1957
        %1992 = vmatprep.subr.mxu0 %v1956
        %1993 = vmatpush1.msra.mxu0 %v1955
        %1994 = vmatprep.subr.mxu0 %v1954
        %1995 = vmatpush1.msra.mxu0 %v1953
        %1996 = vmatprep.subr.mxu0 %v1952
        %1997 = vmatpush1.msra.mxu0 %v1951
        %1998 = vmatprep.subr.mxu0 %v1950
        %1999 = vmatpush1.msra.mxu0 %v1949
        %2000 = vmatprep.subr.mxu0 %v1948
        %2001 = vmatpush1.msra.mxu0 %v1947
        %2002 = vmatprep.subr.mxu0 %v1946
        %2003 = vmatpush1.msra.mxu0 %v1945
        %2004 = vmatprep.subr.mxu0 %v1944
        %2005 = vmatpush1.msra.mxu0 %v1943
        %2006 = vmatprep.subr.mxu0 %v1942
        %2007 = vmatpush1.msra.mxu0 %v1941
        %2008 = vmatprep.subr.mxu0 %v1940
        %2009 = vmatpush1.msra.mxu0 %v1939
        %2010 = vmatprep.subr.mxu0 0.0
        %2011 = vmatpush2.msra.mxu0 0.0
        %2012 = vmatprep.subr.mxu0 0.0
        %2013 = vmatpush2.msra.mxu0 0.0
        %2014 = vmatprep.subr.mxu0 0.0
        %2015 = vmatpush2.msra.mxu0 0.0
        %2016 = vmatprep.subr.mxu0 0.0
        %2017 = vmatpush2.msra.mxu0 0.0
        %2018 = vmatprep.subr.mxu0 0.0
        %2019 = vmatpush2.msra.mxu0 0.0
        %2020 = vmatprep.subr.mxu0 0.0
        %2021 = vmatpush2.msra.mxu0 0.0
        %2022 = vmatprep.subr.mxu0 0.0
        %2023 = vmatpush2.msra.mxu0 0.0
        %2024 = vmatprep.subr.mxu0 0.0
        %2025 = vmatpush2.msra.mxu0 0.0
        %2026 = vmatprep.subr.mxu0 0.0
        %2027 = vmatpush2.msra.mxu0 0.0
        %2028 = vmatprep.subr.mxu0 0.0
        %2029 = vmatpush2.msra.mxu0 0.0
        %2030 = vmatprep.subr.mxu0 0.0
        %2031 = vmatpush2.msra.mxu0 0.0
        %2032 = vmatprep.subr.mxu0 0.0
        %2033 = vmatpush2.msra.mxu0 0.0
        %2034 = vmatprep.subr.mxu0 0.0
        %2035 = vmatpush2.msra.mxu0 0.0
        %2036 = vmatprep.subr.mxu0 0.0
        %2037 = vmatpush2.msra.mxu0 0.0
        %2038 = vmatprep.subr.mxu0 0.0
        %2039 = vmatpush2.msra.mxu0 0.0
        %2040 = vmatprep.subr.mxu0 0.0
        %2041 = vmatpush2.msra.mxu0 0.0
        %2042 = vmatprep.mubr.f32.mxu0 0.0
        %2043 = vmatmul.mubr.f32.gmra.mxu0 %v1938
        %v2044 = vpop.f32.mrf.mxu0
        %v2045 = vpop.f32.mrf.mxu0
        %v2046 = vadd.f32 %v1976, %v2045
        %2047 = vdwg.mxu0
        %v2048 = vadd.f32 %v1750, %v2046
        %2049 = vst [vmem:[%s831] sm:$0xff] %v2048
        %s2050 = sand.u32 %s498, 1
        %s2051 = scalar_lea.sflag [#allocation4], %s2050
        %s2052 = sand.u32 %s498, 1
        %s2053 = smul.addr %s2052, 8
        %s2054 = scalar_lea.vmem [#allocation22], %s2053
        // Predicated region
        $region153: #{tpu_custom_call.1} parent=103 // pred_check
          %p2055 = pneg %p508
        $region154: #{tpu_custom_call.1} parent=103 // pred_check_branch
          %2057 = sbr.rel (%p2055) target = $region156
        $region155: #{tpu_custom_call.1} parent=103 // pred_region
          %s2059 = ssub.s32 128, 128
          %2060 = vsyncadd %s2051, %s2059
          %s2061 = smul.addr %s44, 128
          %s2062 = scalar_lea.hbm %s21, %s2061
          %s2064 = sshll.u32 %s2054, 4
          %s2065 = int_to_ptr.vmem [resolvable:$true] %s2064
          %2067 = dma.vmem_to_hbm [thread:$0]  %s2065, 128, %s2062, %s2051
        $region156: #{tpu_custom_call.1} parent=103 // pred_fallthru
          _
      $region104: #{tpu_custom_call.1} parent=5 // pred_fallthru
        _
      %p2068 = scmp.le.s32.totalorder 2, %s39
      // Predicated region
      $region157: #{tpu_custom_call.1} parent=5 // pred_check
        %p2069 = pneg %p2068
      $region158: #{tpu_custom_call.1} parent=5 // pred_check_branch
        %2071 = sbr.rel (%p2069) target = $region160
      $region159: #{tpu_custom_call.1} parent=5 // pred_region
        %s2072 = ssub.s32 %s39, 2
        // Predicated region
        $region161: #{tpu_custom_call.1} parent=159 // pred_check
          %p2073 = pneg %p514
        $region162: #{tpu_custom_call.1} parent=159 // pred_check_branch
          %2075 = sbr.rel (%p2073) target = $region164
        $region163: #{tpu_custom_call.1} parent=159 // pred_region
          %s2076 = sand.u32 %s499, 1
          %s2077 = scalar_lea.sflag [#allocation4], %s2076
          %s2078 = sand.u32 %s499, 1
          %s2079 = smul.addr %s2078, 8
          %s2080 = scalar_lea.vmem [#allocation22], %s2079
          %2081 = dma.done %s2077, 128
        $region164: #{tpu_custom_call.1} parent=159 // pred_fallthru
          _
      $region160: #{tpu_custom_call.1} parent=5 // pred_fallthru
        _
    $region6: #{tpu_custom_call.1} parent=1 // loop_footer
      %s43 = sadd.s32 1, %s39
    $region7: #{tpu_custom_call.1} parent=1 // loop_footer_branch
      %38 = sbr.rel target = $region3
    $region8: #{tpu_custom_call.1} parent=1 // loop_exit
      _
    %2082 = vsyncpa [#allocation3], 1
    %s2083 = scalar_lea.sflag [#allocation3], 1
    %2084 = vsyncpa %s2083, 1
    %2085 = vsyncpa [#allocation6], 1
    %2086 = vsyncpa [#allocation9], 1
    %2087 = vsyncpa [#allocation12], 1
    %2088 = vsyncpa [#allocation15], 1
    %2089 = vsyncpa [#allocation18], 1
    %2090 = vsyncpa [#allocation21], 1
    %2091 = vsyncpa [#allocation4], 1
    %s2092 = scalar_lea.sflag [#allocation4], 1
    %2093 = vsyncpa %s2092, 1

</llo_original>
